<compile_context>
chip_gen: v7x
topology: tpu7x:2x2x1
jax: 0.10.0
libtpu: 0.0.40
codegen_flags: <defaults>
</compile_context>

<pallas_src>
import math

import jax
import jax.numpy as jnp
from jax.experimental import pallas as pl
from jax.experimental.pallas import tpu as pltpu


# ---------------- small deterministic test hyper-parameters -----------------
VOCAB = 32          # vocab_size
D_MODEL = 32        # d_model (embedding dim)
NHEAD = 4           # attention heads (head_dim = 8)
NUM_LAYERS = 2
DIM_FF = 64         # dim_feedforward
MAX_LEN = 8         # module internally uses max_len + 1 (CLS slot)
SEQ = 8             # token sequence length (<= MAX_LEN)
MLP_HIDDEN = 32     # decoder hidden width
OUT_DIM = 4         # decoder output dim
BATCH = 2

HEAD_DIM = D_MODEL // NHEAD
S1 = SEQ + 1        # sequence length after CLS prepend
LN_EPS = 1e-5       # PyTorch LayerNorm / TransformerEncoderLayer default


# ------------------------------ Pallas kernel -------------------------------
def _normalize(x):
    """LayerNorm without the affine part (gamma/beta folded into the weights)."""
    mu = jnp.mean(x, axis=-1, keepdims=True)
    xc = x - mu
    var = jnp.mean(xc * xc, axis=-1, keepdims=True)
    return xc * jax.lax.rsqrt(var + LN_EPS)


def _cls_encoder_kernel(ids_ref, emb_ref, pe_ref,
                        wqkv_ref, bqkv_ref, wo_ref, bo_ref,
                        wf1_ref, bf1_ref, wf2_ref, bf2_ref,
                        wd1_ref, bd1_ref, wd2_ref, bd2_ref,
                        out_ref):
    E = D_MODEL
    f32 = jnp.float32

    # ---- embedding lookup as a one-hot matmul (no gather on TPU) ----
    # ids row 0 indexes the CLS row the wrapper appended to the table, so the
    # CLS prepend needs no in-kernel concatenation.  sqrt(d_model) is already
    # folded into the token rows at pack time.
    ids = ids_ref[0]                                                # (S1, 1) int32
    col = jax.lax.broadcasted_iota(jnp.int32, (S1, VOCAB + 1), 1)   # (S1, V+1)
    onehot = (ids == col).astype(f32)
    x = jnp.dot(onehot, emb_ref[...], preferred_element_type=f32) + pe_ref[...]
    # nn.Dropout -> identity in eval/inference mode.

    scale = 1.0 / math.sqrt(HEAD_DIM)

    # ---- pre-LN transformer encoder layers (statically unrolled) ----
    for l in range(NUM_LAYERS):
        # -- self-attention sub-block (LN affine folded into wqkv / bqkv) --
        h = _normalize(x)                                           # (S1, E)
        # fused QKV projection: one MXU push + one fused bias add.
        qkv = jnp.dot(h, wqkv_ref[l], preferred_element_type=f32) + bqkv_ref[l]
        wo_l = wo_ref[l]                                            # (E, E) = out_proj.weight.T
        attn = bo_ref[l]                                            # (1, E), broadcasts
        for hh in range(NHEAD):
            lo = hh * HEAD_DIM
            hi = lo + HEAD_DIM
            q_h = qkv[:, lo:hi]
            k_h = qkv[:, E + lo:E + hi]
            v_h = qkv[:, 2 * E + lo:2 * E + hi]
            # q @ k^T without an explicit transpose (contract on last dims).
            s = jax.lax.dot_general(q_h, k_h, (((1,), (1,)), ((), ())),
                                    preferred_element_type=f32) * scale
            s = s - jnp.max(s, axis=-1, keepdims=True)
            p = jnp.exp(s)
            p = p * pl.reciprocal(jnp.sum(p, axis=-1, keepdims=True), approx=True)
            ctx = jnp.dot(p, v_h, preferred_element_type=f32)       # (S1, Dh)
            # output projection applied per head slice (avoids lane concat).
            attn = attn + jnp.dot(ctx, wo_l[lo:hi, :], preferred_element_type=f32)
        x = x + attn

        # -- feed-forward sub-block (LN affine folded into wf1 / bf1) --
        h = _normalize(x)
        ff = jnp.dot(h, wf1_ref[l], preferred_element_type=f32) + bf1_ref[l]
        ff = jnp.maximum(ff, 0.0)
        ff = jnp.dot(ff, wf2_ref[l], preferred_element_type=f32) + bf2_ref[l]
        x = x + ff

    # ---- CLS token -> SimpleMLP decoder ----
    cls = x[0:1, :]                                                 # (1, E)
    hdec = jnp.dot(cls, wd1_ref[...], preferred_element_type=f32) + bd1_ref[...]
    hdec = jnp.maximum(hdec, 0.0)
    logits = jnp.dot(hdec, wd2_ref[...], preferred_element_type=f32) + bd2_ref[...]
    out_ref[0] = logits.astype(out_ref.dtype)


# ------------------------------- wrapper -------------------------------------
def _full_spec(a):
    n = a.ndim
    return pl.BlockSpec(a.shape, lambda b, _n=n: (0,) * _n)


@jax.jit
def cls_transformer_forward(ids, kparams):
    """ids: (B, S) int32 token ids.  Returns (B, OUT_DIM) float32 logits."""
    (emb_aug, pe, wqkv, bqkv, wo, bo,
     wf1, bf1, wf2, bf2, wd1, bd1, wd2, bd2) = kparams
    B, S = ids.shape

    # prepend the CLS index (== VOCAB, the extra row of the augmented table)
    cls_ids = jnp.full((B, 1), VOCAB, dtype=jnp.int32)
    ids_aug = jnp.concatenate([cls_ids, ids.astype(jnp.int32)], axis=1)
    ids_aug = ids_aug.reshape(B, S + 1, 1)

    weights = (emb_aug, pe, wqkv, bqkv, wo, bo,
               wf1, bf1, wf2, bf2, wd1, bd1, wd2, bd2)

    out = pl.pallas_call(
        _cls_encoder_kernel,
        out_shape=jax.ShapeDtypeStruct((B, 1, OUT_DIM), jnp.float32),
        grid_spec=pltpu.PrefetchScalarGridSpec(
            num_scalar_prefetch=0,
            grid=(B,),
            in_specs=[pl.BlockSpec((1, S + 1, 1), lambda b: (b, 0, 0))]
                     + [_full_spec(w) for w in weights],
            out_specs=pl.BlockSpec((1, 1, OUT_DIM), lambda b: (b, 0, 0)),
        ),
        compiler_params=pltpu.CompilerParams(
            dimension_semantics=("parallel",)),
    )(ids_aug, *weights)

    return out.reshape(B, OUT_DIM)


# ------------------------- parameter init / packing --------------------------
def init_torch_style_params(key):
    """Parameters laid out exactly like the PyTorch module's state dict."""
    keys = iter(jax.random.split(key, 64))
    E, FF = D_MODEL, DIM_FF

    def nrm(shape, scale):
        return scale * jax.random.normal(next(keys), shape, jnp.float32)

    p = {"emb": nrm((VOCAB, E), 1.0), "cls": nrm((1, 1, E), 1.0)}

    # sinusoidal positional-encoding buffer with max_len + 1 rows (CLS slot)
    pos = jnp.arange(MAX_LEN + 1, dtype=jnp.float32)[:, None]
    div = jnp.exp(jnp.arange(0, E, 2, dtype=jnp.float32) * (-math.log(10000.0) / E))
    pe = jnp.zeros((MAX_LEN + 1, E), jnp.float32)
    pe = pe.at[:, 0::2].set(jnp.sin(pos * div))
    pe = pe.at[:, 1::2].set(jnp.cos(pos * div))
    p["pe"] = pe

    layers = []
    for _ in range(NUM_LAYERS):
        layers.append({
            "in_proj_w": nrm((3 * E, E), 1.0 / math.sqrt(E)),
            "in_proj_b": nrm((3 * E,), 0.02),
            "out_proj_w": nrm((E, E), 1.0 / math.sqrt(E)),
            "out_proj_b": nrm((E,), 0.02),
            "ln1_w": 1.0 + nrm((E,), 0.1), "ln1_b": nrm((E,), 0.05),
            "ln2_w": 1.0 + nrm((E,), 0.1), "ln2_b": nrm((E,), 0.05),
            "lin1_w": nrm((FF, E), 1.0 / math.sqrt(E)),
            "lin1_b": nrm((FF,), 0.02),
            "lin2_w": nrm((E, FF), 1.0 / math.sqrt(FF)),
            "lin2_b": nrm((E,), 0.02),
        })
    p["layers"] = layers
    p["dec1_w"] = nrm((MLP_HIDDEN, E), 1.0 / math.sqrt(E))
    p["dec1_b"] = nrm((MLP_HIDDEN,), 0.02)
    p["dec2_w"] = nrm((OUT_DIM, MLP_HIDDEN), 1.0 / math.sqrt(MLP_HIDDEN))
    p["dec2_b"] = nrm((OUT_DIM,), 0.02)
    return p


def pack_params(tp):
    """Pre-transpose / fuse PyTorch-layout params into the kernel layout.

    All folds below are exact algebra done once at pack time (not per call):
      * sqrt(d_model) into the token embedding rows (CLS row stays unscaled,
        matching the PyTorch module which never scales the learned CLS token),
      * CLS token appended as an extra embedding row,
      * LayerNorm affine into the following projection:
        (z*g + b) @ W + c == z @ (g[:,None]*W) + (b @ W + c).
    """
    E = D_MODEL
    sqrtE = math.sqrt(E)

    emb_aug = jnp.concatenate([tp["emb"] * sqrtE, tp["cls"][0]], axis=0)  # (V+1, E)

    def per_layer(fn):
        return jnp.stack([fn(l) for l in tp["layers"]], axis=0)

    def qkv_w(l):
        return l["ln1_w"][:, None] * l["in_proj_w"].T                     # (E, 3E)

    def qkv_b(l):
        return (l["ln1_b"] @ l["in_proj_w"].T + l["in_proj_b"])[None, :]  # (1, 3E)

    def ff1_w(l):
        return l["ln2_w"][:, None] * l["lin1_w"].T                        # (E, FF)

    def ff1_b(l):
        return (l["ln2_b"] @ l["lin1_w"].T + l["lin1_b"])[None, :]        # (1, FF)

    return (
        emb_aug,                                        # (V+1, E)
        tp["pe"][:S1],                                  # (S1, E)
        per_layer(qkv_w),                               # (L, E, 3E)  fused QKV + LN1 affine
        per_layer(qkv_b),                               # (L, 1, 3E)
        per_layer(lambda l: l["out_proj_w"].T),         # (L, E, E)
        per_layer(lambda l: l["out_proj_b"][None, :]),  # (L, 1, E)
        per_layer(ff1_w),                               # (L, E, FF)  FF1 + LN2 affine
        per_layer(ff1_b),                               # (L, 1, FF)
        per_layer(lambda l: l["lin2_w"].T),             # (L, FF, E)
        per_layer(lambda l: l["lin2_b"][None, :]),      # (L, 1, E)
        tp["dec1_w"].T, tp["dec1_b"][None, :],          # (E, HM), (1, HM)
        tp["dec2_w"].T, tp["dec2_b"][None, :],          # (HM, OD), (1, OD)
    )


# ----------------------------- pure-JAX reference ----------------------------
def _ln_ref(x, g, b):
    mu = x.mean(-1, keepdims=True)
    var = ((x - mu) ** 2).mean(-1, keepdims=True)
    return (x - mu) / jnp.sqrt(var + LN_EPS) * g + b


def _mha_ref(x, l):
    B, S_, E = x.shape
    qkv = x @ l["in_proj_w"].T + l["in_proj_b"]
    q, k, v = jnp.split(qkv, 3, axis=-1)

    def heads(t):
        return t.reshape(B, S_, NHEAD, HEAD_DIM).transpose(0, 2, 1, 3)

    q, k, v = heads(q), heads(k), heads(v)
    s = jnp.einsum("bhqd,bhkd->bhqk", q, k) / math.sqrt(HEAD_DIM)
    p = jax.nn.softmax(s, axis=-1)
    ctx = jnp.einsum("bhqk,bhkd->bhqd", p, v)
    ctx = ctx.transpose(0, 2, 1, 3).reshape(B, S_, E)
    return ctx @ l["out_proj_w"].T + l["out_proj_b"]


def reference_forward(ids, tp):
    E = D_MODEL
    B = ids.shape[0]
    x = tp["emb"][ids] * math.sqrt(E)
    cls = jnp.broadcast_to(tp["cls"], (B, 1, E))
    x = jnp.concatenate([cls, x], axis=1)
    x = x + tp["pe"][None, :x.shape[1], :]
    for l in tp["layers"]:
        x = x + _mha_ref(_ln_ref(x, l["ln1_w"], l["ln1_b"]), l)
        h = _ln_ref(x, l["ln2_w"], l["ln2_b"])
        ff = jax.nn.relu(h @ l["lin1_w"].T + l["lin1_b"]) @ l["lin2_w"].T + l["lin2_b"]
        x = x + ff
    cls_out = x[:, 0, :]
    hdec = jax.nn.relu(cls_out @ tp["dec1_w"].T + tp["dec1_b"])
    return hdec @ tp["dec2_w"].T + tp["dec2_b"]


# ----------------------------------- main ------------------------------------
if __name__ == "__main__":
    key = jax.random.PRNGKey(0)
    k_ids, k_par = jax.random.split(key)
    ids = jax.random.randint(k_ids, (BATCH, SEQ), 0, VOCAB, dtype=jnp.int32)

    tparams = init_torch_style_params(k_par)
    kparams = pack_params(tparams)

    y = cls_transformer_forward(ids, kparams)
    y = jax.block_until_ready(y)

    y_ref = reference_forward(ids, tparams)
    assert y.shape == (BATCH, OUT_DIM), y.shape
    assert jnp.allclose(y, y_ref, atol=1e-2, rtol=1e-2), (y, y_ref)

    print("KERNEL_OK")
</pallas_src>

<mosaic_0001>
module attributes {stable_mosaic.version = 11 : i64} {
  func.func @_cls_encoder_kernel(%arg0: i32, %arg1: memref<1x9x1xi32, #tpu.memory_space<vmem>>, %arg2: memref<33x32xf32, #tpu.memory_space<vmem>>, %arg3: memref<9x32xf32, #tpu.memory_space<vmem>>, %arg4: memref<2x32x96xf32, #tpu.memory_space<vmem>>, %arg5: memref<2x1x96xf32, #tpu.memory_space<vmem>>, %arg6: memref<2x32x32xf32, #tpu.memory_space<vmem>>, %arg7: memref<2x1x32xf32, #tpu.memory_space<vmem>>, %arg8: memref<2x32x64xf32, #tpu.memory_space<vmem>>, %arg9: memref<2x1x64xf32, #tpu.memory_space<vmem>>, %arg10: memref<2x64x32xf32, #tpu.memory_space<vmem>>, %arg11: memref<2x1x32xf32, #tpu.memory_space<vmem>>, %arg12: memref<32x32xf32, #tpu.memory_space<vmem>>, %arg13: memref<1x32xf32, #tpu.memory_space<vmem>>, %arg14: memref<32x4xf32, #tpu.memory_space<vmem>>, %arg15: memref<1x4xf32, #tpu.memory_space<vmem>>, %arg16: memref<1x1x4xf32, #tpu.memory_space<vmem>>) attributes {dimension_semantics = [#tpu.dimension_semantics<parallel>], iteration_bounds = array<i64: 2>, scalar_prefetch = 0 : i64, scratch_operands = 0 : i64, tpu.core_type = #tpu.core_type<tc>, window_params = [{transform_indices = @transform_0, window_bounds = array<i64: 1, 9, 1>}, {pipeline_mode = #tpu.pipeline_mode<synchronous>, transform_indices = @transform_1, window_bounds = array<i64: 33, 32>}, {pipeline_mode = #tpu.pipeline_mode<synchronous>, transform_indices = @transform_2, window_bounds = array<i64: 9, 32>}, {pipeline_mode = #tpu.pipeline_mode<synchronous>, transform_indices = @transform_3, window_bounds = array<i64: 2, 32, 96>}, {pipeline_mode = #tpu.pipeline_mode<synchronous>, transform_indices = @transform_4, window_bounds = array<i64: 2, 1, 96>}, {pipeline_mode = #tpu.pipeline_mode<synchronous>, transform_indices = @transform_5, window_bounds = array<i64: 2, 32, 32>}, {pipeline_mode = #tpu.pipeline_mode<synchronous>, transform_indices = @transform_6, window_bounds = array<i64: 2, 1, 32>}, {pipeline_mode = #tpu.pipeline_mode<synchronous>, transform_indices = @transform_7, window_bounds = array<i64: 2, 32, 64>}, {pipeline_mode = #tpu.pipeline_mode<synchronous>, transform_indices = @transform_8, window_bounds = array<i64: 2, 1, 64>}, {pipeline_mode = #tpu.pipeline_mode<synchronous>, transform_indices = @transform_9, window_bounds = array<i64: 2, 64, 32>}, {pipeline_mode = #tpu.pipeline_mode<synchronous>, transform_indices = @transform_10, window_bounds = array<i64: 2, 1, 32>}, {pipeline_mode = #tpu.pipeline_mode<synchronous>, transform_indices = @transform_11, window_bounds = array<i64: 32, 32>}, {pipeline_mode = #tpu.pipeline_mode<synchronous>, transform_indices = @transform_12, window_bounds = array<i64: 1, 32>}, {pipeline_mode = #tpu.pipeline_mode<synchronous>, transform_indices = @transform_13, window_bounds = array<i64: 32, 4>}, {pipeline_mode = #tpu.pipeline_mode<synchronous>, transform_indices = @transform_14, window_bounds = array<i64: 1, 4>}, {transform_indices = @transform_15, window_bounds = array<i64: 1, 1, 4>}]} {
    %c0 = arith.constant 0 : index
    %c0_0 = arith.constant 0 : index
    %c0_1 = arith.constant 0 : index
    %0 = vector.load %arg1[%c0, %c0_0, %c0_1] : memref<1x9x1xi32, #tpu.memory_space<vmem>>, vector<1x9x1xi32>
    %1 = vector.shape_cast %0 : vector<1x9x1xi32> to vector<9x1xi32>
    %2 = tpu.iota {dimensions = array<i32: 1>} : vector<9x33xi32>
    %3 = vector.broadcast %1 : vector<9x1xi32> to vector<9x33xi32>
    %4 = arith.cmpi eq, %3, %2 : vector<9x33xi32>
    %5 = arith.extui %4 : vector<9x33xi1> to vector<9x33xi32>
    %6 = arith.sitofp %5 : vector<9x33xi32> to vector<9x33xf32>
    %c0_2 = arith.constant 0 : index
    %c0_3 = arith.constant 0 : index
    %7 = vector.load %arg2[%c0_2, %c0_3] : memref<33x32xf32, #tpu.memory_space<vmem>>, vector<33x32xf32>
    %cst = arith.constant dense<0.000000e+00> : vector<9x32xf32>
    %8 = tpu.matmul %6, %7, %cst {dimension_numbers = #tpu.dot_dimension_numbers<[1], [0], [0], [1], [0, 0, 1, 1], [], []>} : vector<9x33xf32>, vector<33x32xf32>, vector<9x32xf32> -> vector<9x32xf32>
    %c0_4 = arith.constant 0 : index
    %c0_5 = arith.constant 0 : index
    %9 = vector.load %arg3[%c0_4, %c0_5] : memref<9x32xf32, #tpu.memory_space<vmem>>, vector<9x32xf32>
    %10 = arith.addf %8, %9 : vector<9x32xf32>
    %cst_6 = arith.constant dense<0.000000e+00> : vector<9xf32>
    %11 = vector.multi_reduction <add>, %10, %cst_6 [1] : vector<9x32xf32> to vector<9xf32>
    %12 = vector.shape_cast %11 : vector<9xf32> to vector<9x1xf32>
    %cst_7 = arith.constant 3.200000e+01 : f32
    %13 = vector.broadcast %cst_7 : f32 to vector<9x1xf32>
    %14 = arith.divf %12, %13 : vector<9x1xf32>
    %15 = vector.broadcast %14 : vector<9x1xf32> to vector<9x32xf32>
    %16 = arith.subf %10, %15 : vector<9x32xf32>
    %17 = arith.mulf %16, %16 : vector<9x32xf32>
    %cst_8 = arith.constant dense<0.000000e+00> : vector<9xf32>
    %18 = vector.multi_reduction <add>, %17, %cst_8 [1] : vector<9x32xf32> to vector<9xf32>
    %19 = vector.shape_cast %18 : vector<9xf32> to vector<9x1xf32>
    %cst_9 = arith.constant 3.200000e+01 : f32
    %20 = vector.broadcast %cst_9 : f32 to vector<9x1xf32>
    %21 = arith.divf %19, %20 : vector<9x1xf32>
    %cst_10 = arith.constant 9.99999974E-6 : f32
    %22 = vector.broadcast %cst_10 : f32 to vector<9x1xf32>
    %23 = arith.addf %21, %22 : vector<9x1xf32>
    %24 = math.rsqrt %23 : vector<9x1xf32>
    %25 = vector.broadcast %24 : vector<9x1xf32> to vector<9x32xf32>
    %26 = arith.mulf %16, %25 : vector<9x32xf32>
    %c0_11 = arith.constant 0 : index
    %c0_12 = arith.constant 0 : index
    %c0_13 = arith.constant 0 : index
    %27 = vector.load %arg4[%c0_11, %c0_12, %c0_13] : memref<2x32x96xf32, #tpu.memory_space<vmem>>, vector<1x32x96xf32>
    %28 = vector.shape_cast %27 : vector<1x32x96xf32> to vector<32x96xf32>
    %cst_14 = arith.constant dense<0.000000e+00> : vector<9x96xf32>
    %29 = tpu.matmul %26, %28, %cst_14 {dimension_numbers = #tpu.dot_dimension_numbers<[1], [0], [0], [1], [0, 0, 1, 1], [], []>} : vector<9x32xf32>, vector<32x96xf32>, vector<9x96xf32> -> vector<9x96xf32>
    %c0_15 = arith.constant 0 : index
    %c0_16 = arith.constant 0 : index
    %c0_17 = arith.constant 0 : index
    %30 = vector.load %arg5[%c0_15, %c0_16, %c0_17] : memref<2x1x96xf32, #tpu.memory_space<vmem>>, vector<1x1x96xf32>
    %31 = vector.shape_cast %30 : vector<1x1x96xf32> to vector<1x96xf32>
    %32 = vector.broadcast %31 : vector<1x96xf32> to vector<9x96xf32>
    %33 = arith.addf %29, %32 : vector<9x96xf32>
    %c0_18 = arith.constant 0 : index
    %c0_19 = arith.constant 0 : index
    %c0_20 = arith.constant 0 : index
    %34 = vector.load %arg6[%c0_18, %c0_19, %c0_20] : memref<2x32x32xf32, #tpu.memory_space<vmem>>, vector<1x32x32xf32>
    %35 = vector.shape_cast %34 : vector<1x32x32xf32> to vector<32x32xf32>
    %c0_21 = arith.constant 0 : index
    %c0_22 = arith.constant 0 : index
    %c0_23 = arith.constant 0 : index
    %36 = vector.load %arg7[%c0_21, %c0_22, %c0_23] : memref<2x1x32xf32, #tpu.memory_space<vmem>>, vector<1x1x32xf32>
    %37 = vector.shape_cast %36 : vector<1x1x32xf32> to vector<1x32xf32>
    %38 = vector.extract_strided_slice %33 {offsets = [0, 0], sizes = [9, 8], strides = [1, 1]} : vector<9x96xf32> to vector<9x8xf32>
    %39 = vector.extract_strided_slice %33 {offsets = [0, 32], sizes = [9, 8], strides = [1, 1]} : vector<9x96xf32> to vector<9x8xf32>
    %40 = vector.extract_strided_slice %33 {offsets = [0, 64], sizes = [9, 8], strides = [1, 1]} : vector<9x96xf32> to vector<9x8xf32>
    %cst_24 = arith.constant dense<0.000000e+00> : vector<9x9xf32>
    %41 = tpu.matmul %38, %39, %cst_24 {dimension_numbers = #tpu.dot_dimension_numbers<[1], [1], [0], [0], [0, 0, 1, 0], [], []>} : vector<9x8xf32>, vector<9x8xf32>, vector<9x9xf32> -> vector<9x9xf32>
    %cst_25 = arith.constant 0.353553385 : f32
    %42 = vector.broadcast %cst_25 : f32 to vector<9x9xf32>
    %43 = arith.mulf %41, %42 : vector<9x9xf32>
    %cst_26 = arith.constant dense<0xFF800000> : vector<9xf32>
    %44 = vector.multi_reduction <maximumf>, %43, %cst_26 [1] : vector<9x9xf32> to vector<9xf32>
    %45 = vector.shape_cast %44 : vector<9xf32> to vector<9x1xf32>
    %46 = vector.broadcast %45 : vector<9x1xf32> to vector<9x9xf32>
    %47 = arith.subf %43, %46 : vector<9x9xf32>
    %48 = math.exp %47 : vector<9x9xf32>
    %cst_27 = arith.constant dense<0.000000e+00> : vector<9xf32>
    %49 = vector.multi_reduction <add>, %48, %cst_27 [1] : vector<9x9xf32> to vector<9xf32>
    %50 = vector.shape_cast %49 : vector<9xf32> to vector<9x1xf32>
    %51 = tpu.reciprocal %50 {approx = true} : vector<9x1xf32> -> vector<9x1xf32>
    %52 = vector.broadcast %51 : vector<9x1xf32> to vector<9x9xf32>
    %53 = arith.mulf %48, %52 : vector<9x9xf32>
    %cst_28 = arith.constant dense<0.000000e+00> : vector<9x8xf32>
    %54 = tpu.matmul %53, %40, %cst_28 {dimension_numbers = #tpu.dot_dimension_numbers<[1], [0], [0], [1], [0, 0, 1, 1], [], []>} : vector<9x9xf32>, vector<9x8xf32>, vector<9x8xf32> -> vector<9x8xf32>
    %55 = vector.extract_strided_slice %35 {offsets = [0, 0], sizes = [8, 32], strides = [1, 1]} : vector<32x32xf32> to vector<8x32xf32>
    %cst_29 = arith.constant dense<0.000000e+00> : vector<9x32xf32>
    %56 = tpu.matmul %54, %55, %cst_29 {dimension_numbers = #tpu.dot_dimension_numbers<[1], [0], [0], [1], [0, 0, 1, 1], [], []>} : vector<9x8xf32>, vector<8x32xf32>, vector<9x32xf32> -> vector<9x32xf32>
    %57 = vector.broadcast %37 : vector<1x32xf32> to vector<9x32xf32>
    %58 = arith.addf %57, %56 : vector<9x32xf32>
    %59 = vector.extract_strided_slice %33 {offsets = [0, 8], sizes = [9, 8], strides = [1, 1]} : vector<9x96xf32> to vector<9x8xf32>
    %60 = vector.extract_strided_slice %33 {offsets = [0, 40], sizes = [9, 8], strides = [1, 1]} : vector<9x96xf32> to vector<9x8xf32>
    %61 = vector.extract_strided_slice %33 {offsets = [0, 72], sizes = [9, 8], strides = [1, 1]} : vector<9x96xf32> to vector<9x8xf32>
    %cst_30 = arith.constant dense<0.000000e+00> : vector<9x9xf32>
    %62 = tpu.matmul %59, %60, %cst_30 {dimension_numbers = #tpu.dot_dimension_numbers<[1], [1], [0], [0], [0, 0, 1, 0], [], []>} : vector<9x8xf32>, vector<9x8xf32>, vector<9x9xf32> -> vector<9x9xf32>
    %cst_31 = arith.constant 0.353553385 : f32
    %63 = vector.broadcast %cst_31 : f32 to vector<9x9xf32>
    %64 = arith.mulf %62, %63 : vector<9x9xf32>
    %cst_32 = arith.constant dense<0xFF800000> : vector<9xf32>
    %65 = vector.multi_reduction <maximumf>, %64, %cst_32 [1] : vector<9x9xf32> to vector<9xf32>
    %66 = vector.shape_cast %65 : vector<9xf32> to vector<9x1xf32>
    %67 = vector.broadcast %66 : vector<9x1xf32> to vector<9x9xf32>
    %68 = arith.subf %64, %67 : vector<9x9xf32>
    %69 = math.exp %68 : vector<9x9xf32>
    %cst_33 = arith.constant dense<0.000000e+00> : vector<9xf32>
    %70 = vector.multi_reduction <add>, %69, %cst_33 [1] : vector<9x9xf32> to vector<9xf32>
    %71 = vector.shape_cast %70 : vector<9xf32> to vector<9x1xf32>
    %72 = tpu.reciprocal %71 {approx = true} : vector<9x1xf32> -> vector<9x1xf32>
    %73 = vector.broadcast %72 : vector<9x1xf32> to vector<9x9xf32>
    %74 = arith.mulf %69, %73 : vector<9x9xf32>
    %cst_34 = arith.constant dense<0.000000e+00> : vector<9x8xf32>
    %75 = tpu.matmul %74, %61, %cst_34 {dimension_numbers = #tpu.dot_dimension_numbers<[1], [0], [0], [1], [0, 0, 1, 1], [], []>} : vector<9x9xf32>, vector<9x8xf32>, vector<9x8xf32> -> vector<9x8xf32>
    %76 = vector.extract_strided_slice %35 {offsets = [8, 0], sizes = [8, 32], strides = [1, 1]} : vector<32x32xf32> to vector<8x32xf32>
    %cst_35 = arith.constant dense<0.000000e+00> : vector<9x32xf32>
    %77 = tpu.matmul %75, %76, %cst_35 {dimension_numbers = #tpu.dot_dimension_numbers<[1], [0], [0], [1], [0, 0, 1, 1], [], []>} : vector<9x8xf32>, vector<8x32xf32>, vector<9x32xf32> -> vector<9x32xf32>
    %78 = arith.addf %58, %77 : vector<9x32xf32>
    %79 = vector.extract_strided_slice %33 {offsets = [0, 16], sizes = [9, 8], strides = [1, 1]} : vector<9x96xf32> to vector<9x8xf32>
    %80 = vector.extract_strided_slice %33 {offsets = [0, 48], sizes = [9, 8], strides = [1, 1]} : vector<9x96xf32> to vector<9x8xf32>
    %81 = vector.extract_strided_slice %33 {offsets = [0, 80], sizes = [9, 8], strides = [1, 1]} : vector<9x96xf32> to vector<9x8xf32>
    %cst_36 = arith.constant dense<0.000000e+00> : vector<9x9xf32>
    %82 = tpu.matmul %79, %80, %cst_36 {dimension_numbers = #tpu.dot_dimension_numbers<[1], [1], [0], [0], [0, 0, 1, 0], [], []>} : vector<9x8xf32>, vector<9x8xf32>, vector<9x9xf32> -> vector<9x9xf32>
    %cst_37 = arith.constant 0.353553385 : f32
    %83 = vector.broadcast %cst_37 : f32 to vector<9x9xf32>
    %84 = arith.mulf %82, %83 : vector<9x9xf32>
    %cst_38 = arith.constant dense<0xFF800000> : vector<9xf32>
    %85 = vector.multi_reduction <maximumf>, %84, %cst_38 [1] : vector<9x9xf32> to vector<9xf32>
    %86 = vector.shape_cast %85 : vector<9xf32> to vector<9x1xf32>
    %87 = vector.broadcast %86 : vector<9x1xf32> to vector<9x9xf32>
    %88 = arith.subf %84, %87 : vector<9x9xf32>
    %89 = math.exp %88 : vector<9x9xf32>
    %cst_39 = arith.constant dense<0.000000e+00> : vector<9xf32>
    %90 = vector.multi_reduction <add>, %89, %cst_39 [1] : vector<9x9xf32> to vector<9xf32>
    %91 = vector.shape_cast %90 : vector<9xf32> to vector<9x1xf32>
    %92 = tpu.reciprocal %91 {approx = true} : vector<9x1xf32> -> vector<9x1xf32>
    %93 = vector.broadcast %92 : vector<9x1xf32> to vector<9x9xf32>
    %94 = arith.mulf %89, %93 : vector<9x9xf32>
    %cst_40 = arith.constant dense<0.000000e+00> : vector<9x8xf32>
    %95 = tpu.matmul %94, %81, %cst_40 {dimension_numbers = #tpu.dot_dimension_numbers<[1], [0], [0], [1], [0, 0, 1, 1], [], []>} : vector<9x9xf32>, vector<9x8xf32>, vector<9x8xf32> -> vector<9x8xf32>
    %96 = vector.extract_strided_slice %35 {offsets = [16, 0], sizes = [8, 32], strides = [1, 1]} : vector<32x32xf32> to vector<8x32xf32>
    %cst_41 = arith.constant dense<0.000000e+00> : vector<9x32xf32>
    %97 = tpu.matmul %95, %96, %cst_41 {dimension_numbers = #tpu.dot_dimension_numbers<[1], [0], [0], [1], [0, 0, 1, 1], [], []>} : vector<9x8xf32>, vector<8x32xf32>, vector<9x32xf32> -> vector<9x32xf32>
    %98 = arith.addf %78, %97 : vector<9x32xf32>
    %99 = vector.extract_strided_slice %33 {offsets = [0, 24], sizes = [9, 8], strides = [1, 1]} : vector<9x96xf32> to vector<9x8xf32>
    %100 = vector.extract_strided_slice %33 {offsets = [0, 56], sizes = [9, 8], strides = [1, 1]} : vector<9x96xf32> to vector<9x8xf32>
    %101 = vector.extract_strided_slice %33 {offsets = [0, 88], sizes = [9, 8], strides = [1, 1]} : vector<9x96xf32> to vector<9x8xf32>
    %cst_42 = arith.constant dense<0.000000e+00> : vector<9x9xf32>
    %102 = tpu.matmul %99, %100, %cst_42 {dimension_numbers = #tpu.dot_dimension_numbers<[1], [1], [0], [0], [0, 0, 1, 0], [], []>} : vector<9x8xf32>, vector<9x8xf32>, vector<9x9xf32> -> vector<9x9xf32>
    %cst_43 = arith.constant 0.353553385 : f32
    %103 = vector.broadcast %cst_43 : f32 to vector<9x9xf32>
    %104 = arith.mulf %102, %103 : vector<9x9xf32>
    %cst_44 = arith.constant dense<0xFF800000> : vector<9xf32>
    %105 = vector.multi_reduction <maximumf>, %104, %cst_44 [1] : vector<9x9xf32> to vector<9xf32>
    %106 = vector.shape_cast %105 : vector<9xf32> to vector<9x1xf32>
    %107 = vector.broadcast %106 : vector<9x1xf32> to vector<9x9xf32>
    %108 = arith.subf %104, %107 : vector<9x9xf32>
    %109 = math.exp %108 : vector<9x9xf32>
    %cst_45 = arith.constant dense<0.000000e+00> : vector<9xf32>
    %110 = vector.multi_reduction <add>, %109, %cst_45 [1] : vector<9x9xf32> to vector<9xf32>
    %111 = vector.shape_cast %110 : vector<9xf32> to vector<9x1xf32>
    %112 = tpu.reciprocal %111 {approx = true} : vector<9x1xf32> -> vector<9x1xf32>
    %113 = vector.broadcast %112 : vector<9x1xf32> to vector<9x9xf32>
    %114 = arith.mulf %109, %113 : vector<9x9xf32>
    %cst_46 = arith.constant dense<0.000000e+00> : vector<9x8xf32>
    %115 = tpu.matmul %114, %101, %cst_46 {dimension_numbers = #tpu.dot_dimension_numbers<[1], [0], [0], [1], [0, 0, 1, 1], [], []>} : vector<9x9xf32>, vector<9x8xf32>, vector<9x8xf32> -> vector<9x8xf32>
    %116 = vector.extract_strided_slice %35 {offsets = [24, 0], sizes = [8, 32], strides = [1, 1]} : vector<32x32xf32> to vector<8x32xf32>
    %cst_47 = arith.constant dense<0.000000e+00> : vector<9x32xf32>
    %117 = tpu.matmul %115, %116, %cst_47 {dimension_numbers = #tpu.dot_dimension_numbers<[1], [0], [0], [1], [0, 0, 1, 1], [], []>} : vector<9x8xf32>, vector<8x32xf32>, vector<9x32xf32> -> vector<9x32xf32>
    %118 = arith.addf %98, %117 : vector<9x32xf32>
    %119 = arith.addf %10, %118 : vector<9x32xf32>
    %cst_48 = arith.constant dense<0.000000e+00> : vector<9xf32>
    %120 = vector.multi_reduction <add>, %119, %cst_48 [1] : vector<9x32xf32> to vector<9xf32>
    %121 = vector.shape_cast %120 : vector<9xf32> to vector<9x1xf32>
    %cst_49 = arith.constant 3.200000e+01 : f32
    %122 = vector.broadcast %cst_49 : f32 to vector<9x1xf32>
    %123 = arith.divf %121, %122 : vector<9x1xf32>
    %124 = vector.broadcast %123 : vector<9x1xf32> to vector<9x32xf32>
    %125 = arith.subf %119, %124 : vector<9x32xf32>
    %126 = arith.mulf %125, %125 : vector<9x32xf32>
    %cst_50 = arith.constant dense<0.000000e+00> : vector<9xf32>
    %127 = vector.multi_reduction <add>, %126, %cst_50 [1] : vector<9x32xf32> to vector<9xf32>
    %128 = vector.shape_cast %127 : vector<9xf32> to vector<9x1xf32>
    %cst_51 = arith.constant 3.200000e+01 : f32
    %129 = vector.broadcast %cst_51 : f32 to vector<9x1xf32>
    %130 = arith.divf %128, %129 : vector<9x1xf32>
    %cst_52 = arith.constant 9.99999974E-6 : f32
    %131 = vector.broadcast %cst_52 : f32 to vector<9x1xf32>
    %132 = arith.addf %130, %131 : vector<9x1xf32>
    %133 = math.rsqrt %132 : vector<9x1xf32>
    %134 = vector.broadcast %133 : vector<9x1xf32> to vector<9x32xf32>
    %135 = arith.mulf %125, %134 : vector<9x32xf32>
    %c0_53 = arith.constant 0 : index
    %c0_54 = arith.constant 0 : index
    %c0_55 = arith.constant 0 : index
    %136 = vector.load %arg8[%c0_53, %c0_54, %c0_55] : memref<2x32x64xf32, #tpu.memory_space<vmem>>, vector<1x32x64xf32>
    %137 = vector.shape_cast %136 : vector<1x32x64xf32> to vector<32x64xf32>
    %cst_56 = arith.constant dense<0.000000e+00> : vector<9x64xf32>
    %138 = tpu.matmul %135, %137, %cst_56 {dimension_numbers = #tpu.dot_dimension_numbers<[1], [0], [0], [1], [0, 0, 1, 1], [], []>} : vector<9x32xf32>, vector<32x64xf32>, vector<9x64xf32> -> vector<9x64xf32>
    %c0_57 = arith.constant 0 : index
    %c0_58 = arith.constant 0 : index
    %c0_59 = arith.constant 0 : index
    %139 = vector.load %arg9[%c0_57, %c0_58, %c0_59] : memref<2x1x64xf32, #tpu.memory_space<vmem>>, vector<1x1x64xf32>
    %140 = vector.shape_cast %139 : vector<1x1x64xf32> to vector<1x64xf32>
    %141 = vector.broadcast %140 : vector<1x64xf32> to vector<9x64xf32>
    %142 = arith.addf %138, %141 : vector<9x64xf32>
    %cst_60 = arith.constant 0.000000e+00 : f32
    %143 = vector.broadcast %cst_60 : f32 to vector<9x64xf32>
    %144 = arith.maximumf %142, %143 : vector<9x64xf32>
    %c0_61 = arith.constant 0 : index
    %c0_62 = arith.constant 0 : index
    %c0_63 = arith.constant 0 : index
    %145 = vector.load %arg10[%c0_61, %c0_62, %c0_63] : memref<2x64x32xf32, #tpu.memory_space<vmem>>, vector<1x64x32xf32>
    %146 = vector.shape_cast %145 : vector<1x64x32xf32> to vector<64x32xf32>
    %cst_64 = arith.constant dense<0.000000e+00> : vector<9x32xf32>
    %147 = tpu.matmul %144, %146, %cst_64 {dimension_numbers = #tpu.dot_dimension_numbers<[1], [0], [0], [1], [0, 0, 1, 1], [], []>} : vector<9x64xf32>, vector<64x32xf32>, vector<9x32xf32> -> vector<9x32xf32>
    %c0_65 = arith.constant 0 : index
    %c0_66 = arith.constant 0 : index
    %c0_67 = arith.constant 0 : index
    %148 = vector.load %arg11[%c0_65, %c0_66, %c0_67] : memref<2x1x32xf32, #tpu.memory_space<vmem>>, vector<1x1x32xf32>
    %149 = vector.shape_cast %148 : vector<1x1x32xf32> to vector<1x32xf32>
    %150 = vector.broadcast %149 : vector<1x32xf32> to vector<9x32xf32>
    %151 = arith.addf %147, %150 : vector<9x32xf32>
    %152 = arith.addf %119, %151 : vector<9x32xf32>
    %cst_68 = arith.constant dense<0.000000e+00> : vector<9xf32>
    %153 = vector.multi_reduction <add>, %152, %cst_68 [1] : vector<9x32xf32> to vector<9xf32>
    %154 = vector.shape_cast %153 : vector<9xf32> to vector<9x1xf32>
    %cst_69 = arith.constant 3.200000e+01 : f32
    %155 = vector.broadcast %cst_69 : f32 to vector<9x1xf32>
    %156 = arith.divf %154, %155 : vector<9x1xf32>
    %157 = vector.broadcast %156 : vector<9x1xf32> to vector<9x32xf32>
    %158 = arith.subf %152, %157 : vector<9x32xf32>
    %159 = arith.mulf %158, %158 : vector<9x32xf32>
    %cst_70 = arith.constant dense<0.000000e+00> : vector<9xf32>
    %160 = vector.multi_reduction <add>, %159, %cst_70 [1] : vector<9x32xf32> to vector<9xf32>
    %161 = vector.shape_cast %160 : vector<9xf32> to vector<9x1xf32>
    %cst_71 = arith.constant 3.200000e+01 : f32
    %162 = vector.broadcast %cst_71 : f32 to vector<9x1xf32>
    %163 = arith.divf %161, %162 : vector<9x1xf32>
    %cst_72 = arith.constant 9.99999974E-6 : f32
    %164 = vector.broadcast %cst_72 : f32 to vector<9x1xf32>
    %165 = arith.addf %163, %164 : vector<9x1xf32>
    %166 = math.rsqrt %165 : vector<9x1xf32>
    %167 = vector.broadcast %166 : vector<9x1xf32> to vector<9x32xf32>
    %168 = arith.mulf %158, %167 : vector<9x32xf32>
    %c1 = arith.constant 1 : index
    %c0_73 = arith.constant 0 : index
    %c0_74 = arith.constant 0 : index
    %169 = vector.load %arg4[%c1, %c0_73, %c0_74] : memref<2x32x96xf32, #tpu.memory_space<vmem>>, vector<1x32x96xf32>
    %170 = vector.shape_cast %169 : vector<1x32x96xf32> to vector<32x96xf32>
    %cst_75 = arith.constant dense<0.000000e+00> : vector<9x96xf32>
    %171 = tpu.matmul %168, %170, %cst_75 {dimension_numbers = #tpu.dot_dimension_numbers<[1], [0], [0], [1], [0, 0, 1, 1], [], []>} : vector<9x32xf32>, vector<32x96xf32>, vector<9x96xf32> -> vector<9x96xf32>
    %c1_76 = arith.constant 1 : index
    %c0_77 = arith.constant 0 : index
    %c0_78 = arith.constant 0 : index
    %172 = vector.load %arg5[%c1_76, %c0_77, %c0_78] : memref<2x1x96xf32, #tpu.memory_space<vmem>>, vector<1x1x96xf32>
    %173 = vector.shape_cast %172 : vector<1x1x96xf32> to vector<1x96xf32>
    %174 = vector.broadcast %173 : vector<1x96xf32> to vector<9x96xf32>
    %175 = arith.addf %171, %174 : vector<9x96xf32>
    %c1_79 = arith.constant 1 : index
    %c0_80 = arith.constant 0 : index
    %c0_81 = arith.constant 0 : index
    %176 = vector.load %arg6[%c1_79, %c0_80, %c0_81] : memref<2x32x32xf32, #tpu.memory_space<vmem>>, vector<1x32x32xf32>
    %177 = vector.shape_cast %176 : vector<1x32x32xf32> to vector<32x32xf32>
    %c1_82 = arith.constant 1 : index
    %c0_83 = arith.constant 0 : index
    %c0_84 = arith.constant 0 : index
    %178 = vector.load %arg7[%c1_82, %c0_83, %c0_84] : memref<2x1x32xf32, #tpu.memory_space<vmem>>, vector<1x1x32xf32>
    %179 = vector.shape_cast %178 : vector<1x1x32xf32> to vector<1x32xf32>
    %180 = vector.extract_strided_slice %175 {offsets = [0, 0], sizes = [9, 8], strides = [1, 1]} : vector<9x96xf32> to vector<9x8xf32>
    %181 = vector.extract_strided_slice %175 {offsets = [0, 32], sizes = [9, 8], strides = [1, 1]} : vector<9x96xf32> to vector<9x8xf32>
    %182 = vector.extract_strided_slice %175 {offsets = [0, 64], sizes = [9, 8], strides = [1, 1]} : vector<9x96xf32> to vector<9x8xf32>
    %cst_85 = arith.constant dense<0.000000e+00> : vector<9x9xf32>
    %183 = tpu.matmul %180, %181, %cst_85 {dimension_numbers = #tpu.dot_dimension_numbers<[1], [1], [0], [0], [0, 0, 1, 0], [], []>} : vector<9x8xf32>, vector<9x8xf32>, vector<9x9xf32> -> vector<9x9xf32>
    %cst_86 = arith.constant 0.353553385 : f32
    %184 = vector.broadcast %cst_86 : f32 to vector<9x9xf32>
    %185 = arith.mulf %183, %184 : vector<9x9xf32>
    %cst_87 = arith.constant dense<0xFF800000> : vector<9xf32>
    %186 = vector.multi_reduction <maximumf>, %185, %cst_87 [1] : vector<9x9xf32> to vector<9xf32>
    %187 = vector.shape_cast %186 : vector<9xf32> to vector<9x1xf32>
    %188 = vector.broadcast %187 : vector<9x1xf32> to vector<9x9xf32>
    %189 = arith.subf %185, %188 : vector<9x9xf32>
    %190 = math.exp %189 : vector<9x9xf32>
    %cst_88 = arith.constant dense<0.000000e+00> : vector<9xf32>
    %191 = vector.multi_reduction <add>, %190, %cst_88 [1] : vector<9x9xf32> to vector<9xf32>
    %192 = vector.shape_cast %191 : vector<9xf32> to vector<9x1xf32>
    %193 = tpu.reciprocal %192 {approx = true} : vector<9x1xf32> -> vector<9x1xf32>
    %194 = vector.broadcast %193 : vector<9x1xf32> to vector<9x9xf32>
    %195 = arith.mulf %190, %194 : vector<9x9xf32>
    %cst_89 = arith.constant dense<0.000000e+00> : vector<9x8xf32>
    %196 = tpu.matmul %195, %182, %cst_89 {dimension_numbers = #tpu.dot_dimension_numbers<[1], [0], [0], [1], [0, 0, 1, 1], [], []>} : vector<9x9xf32>, vector<9x8xf32>, vector<9x8xf32> -> vector<9x8xf32>
    %197 = vector.extract_strided_slice %177 {offsets = [0, 0], sizes = [8, 32], strides = [1, 1]} : vector<32x32xf32> to vector<8x32xf32>
    %cst_90 = arith.constant dense<0.000000e+00> : vector<9x32xf32>
    %198 = tpu.matmul %196, %197, %cst_90 {dimension_numbers = #tpu.dot_dimension_numbers<[1], [0], [0], [1], [0, 0, 1, 1], [], []>} : vector<9x8xf32>, vector<8x32xf32>, vector<9x32xf32> -> vector<9x32xf32>
    %199 = vector.broadcast %179 : vector<1x32xf32> to vector<9x32xf32>
    %200 = arith.addf %199, %198 : vector<9x32xf32>
    %201 = vector.extract_strided_slice %175 {offsets = [0, 8], sizes = [9, 8], strides = [1, 1]} : vector<9x96xf32> to vector<9x8xf32>
    %202 = vector.extract_strided_slice %175 {offsets = [0, 40], sizes = [9, 8], strides = [1, 1]} : vector<9x96xf32> to vector<9x8xf32>
    %203 = vector.extract_strided_slice %175 {offsets = [0, 72], sizes = [9, 8], strides = [1, 1]} : vector<9x96xf32> to vector<9x8xf32>
    %cst_91 = arith.constant dense<0.000000e+00> : vector<9x9xf32>
    %204 = tpu.matmul %201, %202, %cst_91 {dimension_numbers = #tpu.dot_dimension_numbers<[1], [1], [0], [0], [0, 0, 1, 0], [], []>} : vector<9x8xf32>, vector<9x8xf32>, vector<9x9xf32> -> vector<9x9xf32>
    %cst_92 = arith.constant 0.353553385 : f32
    %205 = vector.broadcast %cst_92 : f32 to vector<9x9xf32>
    %206 = arith.mulf %204, %205 : vector<9x9xf32>
    %cst_93 = arith.constant dense<0xFF800000> : vector<9xf32>
    %207 = vector.multi_reduction <maximumf>, %206, %cst_93 [1] : vector<9x9xf32> to vector<9xf32>
    %208 = vector.shape_cast %207 : vector<9xf32> to vector<9x1xf32>
    %209 = vector.broadcast %208 : vector<9x1xf32> to vector<9x9xf32>
    %210 = arith.subf %206, %209 : vector<9x9xf32>
    %211 = math.exp %210 : vector<9x9xf32>
    %cst_94 = arith.constant dense<0.000000e+00> : vector<9xf32>
    %212 = vector.multi_reduction <add>, %211, %cst_94 [1] : vector<9x9xf32> to vector<9xf32>
    %213 = vector.shape_cast %212 : vector<9xf32> to vector<9x1xf32>
    %214 = tpu.reciprocal %213 {approx = true} : vector<9x1xf32> -> vector<9x1xf32>
    %215 = vector.broadcast %214 : vector<9x1xf32> to vector<9x9xf32>
    %216 = arith.mulf %211, %215 : vector<9x9xf32>
    %cst_95 = arith.constant dense<0.000000e+00> : vector<9x8xf32>
    %217 = tpu.matmul %216, %203, %cst_95 {dimension_numbers = #tpu.dot_dimension_numbers<[1], [0], [0], [1], [0, 0, 1, 1], [], []>} : vector<9x9xf32>, vector<9x8xf32>, vector<9x8xf32> -> vector<9x8xf32>
    %218 = vector.extract_strided_slice %177 {offsets = [8, 0], sizes = [8, 32], strides = [1, 1]} : vector<32x32xf32> to vector<8x32xf32>
    %cst_96 = arith.constant dense<0.000000e+00> : vector<9x32xf32>
    %219 = tpu.matmul %217, %218, %cst_96 {dimension_numbers = #tpu.dot_dimension_numbers<[1], [0], [0], [1], [0, 0, 1, 1], [], []>} : vector<9x8xf32>, vector<8x32xf32>, vector<9x32xf32> -> vector<9x32xf32>
    %220 = arith.addf %200, %219 : vector<9x32xf32>
    %221 = vector.extract_strided_slice %175 {offsets = [0, 16], sizes = [9, 8], strides = [1, 1]} : vector<9x96xf32> to vector<9x8xf32>
    %222 = vector.extract_strided_slice %175 {offsets = [0, 48], sizes = [9, 8], strides = [1, 1]} : vector<9x96xf32> to vector<9x8xf32>
    %223 = vector.extract_strided_slice %175 {offsets = [0, 80], sizes = [9, 8], strides = [1, 1]} : vector<9x96xf32> to vector<9x8xf32>
    %cst_97 = arith.constant dense<0.000000e+00> : vector<9x9xf32>
    %224 = tpu.matmul %221, %222, %cst_97 {dimension_numbers = #tpu.dot_dimension_numbers<[1], [1], [0], [0], [0, 0, 1, 0], [], []>} : vector<9x8xf32>, vector<9x8xf32>, vector<9x9xf32> -> vector<9x9xf32>
    %cst_98 = arith.constant 0.353553385 : f32
    %225 = vector.broadcast %cst_98 : f32 to vector<9x9xf32>
    %226 = arith.mulf %224, %225 : vector<9x9xf32>
    %cst_99 = arith.constant dense<0xFF800000> : vector<9xf32>
    %227 = vector.multi_reduction <maximumf>, %226, %cst_99 [1] : vector<9x9xf32> to vector<9xf32>
    %228 = vector.shape_cast %227 : vector<9xf32> to vector<9x1xf32>
    %229 = vector.broadcast %228 : vector<9x1xf32> to vector<9x9xf32>
    %230 = arith.subf %226, %229 : vector<9x9xf32>
    %231 = math.exp %230 : vector<9x9xf32>
    %cst_100 = arith.constant dense<0.000000e+00> : vector<9xf32>
    %232 = vector.multi_reduction <add>, %231, %cst_100 [1] : vector<9x9xf32> to vector<9xf32>
    %233 = vector.shape_cast %232 : vector<9xf32> to vector<9x1xf32>
    %234 = tpu.reciprocal %233 {approx = true} : vector<9x1xf32> -> vector<9x1xf32>
    %235 = vector.broadcast %234 : vector<9x1xf32> to vector<9x9xf32>
    %236 = arith.mulf %231, %235 : vector<9x9xf32>
    %cst_101 = arith.constant dense<0.000000e+00> : vector<9x8xf32>
    %237 = tpu.matmul %236, %223, %cst_101 {dimension_numbers = #tpu.dot_dimension_numbers<[1], [0], [0], [1], [0, 0, 1, 1], [], []>} : vector<9x9xf32>, vector<9x8xf32>, vector<9x8xf32> -> vector<9x8xf32>
    %238 = vector.extract_strided_slice %177 {offsets = [16, 0], sizes = [8, 32], strides = [1, 1]} : vector<32x32xf32> to vector<8x32xf32>
    %cst_102 = arith.constant dense<0.000000e+00> : vector<9x32xf32>
    %239 = tpu.matmul %237, %238, %cst_102 {dimension_numbers = #tpu.dot_dimension_numbers<[1], [0], [0], [1], [0, 0, 1, 1], [], []>} : vector<9x8xf32>, vector<8x32xf32>, vector<9x32xf32> -> vector<9x32xf32>
    %240 = arith.addf %220, %239 : vector<9x32xf32>
    %241 = vector.extract_strided_slice %175 {offsets = [0, 24], sizes = [9, 8], strides = [1, 1]} : vector<9x96xf32> to vector<9x8xf32>
    %242 = vector.extract_strided_slice %175 {offsets = [0, 56], sizes = [9, 8], strides = [1, 1]} : vector<9x96xf32> to vector<9x8xf32>
    %243 = vector.extract_strided_slice %175 {offsets = [0, 88], sizes = [9, 8], strides = [1, 1]} : vector<9x96xf32> to vector<9x8xf32>
    %cst_103 = arith.constant dense<0.000000e+00> : vector<9x9xf32>
    %244 = tpu.matmul %241, %242, %cst_103 {dimension_numbers = #tpu.dot_dimension_numbers<[1], [1], [0], [0], [0, 0, 1, 0], [], []>} : vector<9x8xf32>, vector<9x8xf32>, vector<9x9xf32> -> vector<9x9xf32>
    %cst_104 = arith.constant 0.353553385 : f32
    %245 = vector.broadcast %cst_104 : f32 to vector<9x9xf32>
    %246 = arith.mulf %244, %245 : vector<9x9xf32>
    %cst_105 = arith.constant dense<0xFF800000> : vector<9xf32>
    %247 = vector.multi_reduction <maximumf>, %246, %cst_105 [1] : vector<9x9xf32> to vector<9xf32>
    %248 = vector.shape_cast %247 : vector<9xf32> to vector<9x1xf32>
    %249 = vector.broadcast %248 : vector<9x1xf32> to vector<9x9xf32>
    %250 = arith.subf %246, %249 : vector<9x9xf32>
    %251 = math.exp %250 : vector<9x9xf32>
    %cst_106 = arith.constant dense<0.000000e+00> : vector<9xf32>
    %252 = vector.multi_reduction <add>, %251, %cst_106 [1] : vector<9x9xf32> to vector<9xf32>
    %253 = vector.shape_cast %252 : vector<9xf32> to vector<9x1xf32>
    %254 = tpu.reciprocal %253 {approx = true} : vector<9x1xf32> -> vector<9x1xf32>
    %255 = vector.broadcast %254 : vector<9x1xf32> to vector<9x9xf32>
    %256 = arith.mulf %251, %255 : vector<9x9xf32>
    %cst_107 = arith.constant dense<0.000000e+00> : vector<9x8xf32>
    %257 = tpu.matmul %256, %243, %cst_107 {dimension_numbers = #tpu.dot_dimension_numbers<[1], [0], [0], [1], [0, 0, 1, 1], [], []>} : vector<9x9xf32>, vector<9x8xf32>, vector<9x8xf32> -> vector<9x8xf32>
    %258 = vector.extract_strided_slice %177 {offsets = [24, 0], sizes = [8, 32], strides = [1, 1]} : vector<32x32xf32> to vector<8x32xf32>
    %cst_108 = arith.constant dense<0.000000e+00> : vector<9x32xf32>
    %259 = tpu.matmul %257, %258, %cst_108 {dimension_numbers = #tpu.dot_dimension_numbers<[1], [0], [0], [1], [0, 0, 1, 1], [], []>} : vector<9x8xf32>, vector<8x32xf32>, vector<9x32xf32> -> vector<9x32xf32>
    %260 = arith.addf %240, %259 : vector<9x32xf32>
    %261 = arith.addf %152, %260 : vector<9x32xf32>
    %cst_109 = arith.constant dense<0.000000e+00> : vector<9xf32>
    %262 = vector.multi_reduction <add>, %261, %cst_109 [1] : vector<9x32xf32> to vector<9xf32>
    %263 = vector.shape_cast %262 : vector<9xf32> to vector<9x1xf32>
    %cst_110 = arith.constant 3.200000e+01 : f32
    %264 = vector.broadcast %cst_110 : f32 to vector<9x1xf32>
    %265 = arith.divf %263, %264 : vector<9x1xf32>
    %266 = vector.broadcast %265 : vector<9x1xf32> to vector<9x32xf32>
    %267 = arith.subf %261, %266 : vector<9x32xf32>
    %268 = arith.mulf %267, %267 : vector<9x32xf32>
    %cst_111 = arith.constant dense<0.000000e+00> : vector<9xf32>
    %269 = vector.multi_reduction <add>, %268, %cst_111 [1] : vector<9x32xf32> to vector<9xf32>
    %270 = vector.shape_cast %269 : vector<9xf32> to vector<9x1xf32>
    %cst_112 = arith.constant 3.200000e+01 : f32
    %271 = vector.broadcast %cst_112 : f32 to vector<9x1xf32>
    %272 = arith.divf %270, %271 : vector<9x1xf32>
    %cst_113 = arith.constant 9.99999974E-6 : f32
    %273 = vector.broadcast %cst_113 : f32 to vector<9x1xf32>
    %274 = arith.addf %272, %273 : vector<9x1xf32>
    %275 = math.rsqrt %274 : vector<9x1xf32>
    %276 = vector.broadcast %275 : vector<9x1xf32> to vector<9x32xf32>
    %277 = arith.mulf %267, %276 : vector<9x32xf32>
    %c1_114 = arith.constant 1 : index
    %c0_115 = arith.constant 0 : index
    %c0_116 = arith.constant 0 : index
    %278 = vector.load %arg8[%c1_114, %c0_115, %c0_116] : memref<2x32x64xf32, #tpu.memory_space<vmem>>, vector<1x32x64xf32>
    %279 = vector.shape_cast %278 : vector<1x32x64xf32> to vector<32x64xf32>
    %cst_117 = arith.constant dense<0.000000e+00> : vector<9x64xf32>
    %280 = tpu.matmul %277, %279, %cst_117 {dimension_numbers = #tpu.dot_dimension_numbers<[1], [0], [0], [1], [0, 0, 1, 1], [], []>} : vector<9x32xf32>, vector<32x64xf32>, vector<9x64xf32> -> vector<9x64xf32>
    %c1_118 = arith.constant 1 : index
    %c0_119 = arith.constant 0 : index
    %c0_120 = arith.constant 0 : index
    %281 = vector.load %arg9[%c1_118, %c0_119, %c0_120] : memref<2x1x64xf32, #tpu.memory_space<vmem>>, vector<1x1x64xf32>
    %282 = vector.shape_cast %281 : vector<1x1x64xf32> to vector<1x64xf32>
    %283 = vector.broadcast %282 : vector<1x64xf32> to vector<9x64xf32>
    %284 = arith.addf %280, %283 : vector<9x64xf32>
    %cst_121 = arith.constant 0.000000e+00 : f32
    %285 = vector.broadcast %cst_121 : f32 to vector<9x64xf32>
    %286 = arith.maximumf %284, %285 : vector<9x64xf32>
    %c1_122 = arith.constant 1 : index
    %c0_123 = arith.constant 0 : index
    %c0_124 = arith.constant 0 : index
    %287 = vector.load %arg10[%c1_122, %c0_123, %c0_124] : memref<2x64x32xf32, #tpu.memory_space<vmem>>, vector<1x64x32xf32>
    %288 = vector.shape_cast %287 : vector<1x64x32xf32> to vector<64x32xf32>
    %cst_125 = arith.constant dense<0.000000e+00> : vector<9x32xf32>
    %289 = tpu.matmul %286, %288, %cst_125 {dimension_numbers = #tpu.dot_dimension_numbers<[1], [0], [0], [1], [0, 0, 1, 1], [], []>} : vector<9x64xf32>, vector<64x32xf32>, vector<9x32xf32> -> vector<9x32xf32>
    %c1_126 = arith.constant 1 : index
    %c0_127 = arith.constant 0 : index
    %c0_128 = arith.constant 0 : index
    %290 = vector.load %arg11[%c1_126, %c0_127, %c0_128] : memref<2x1x32xf32, #tpu.memory_space<vmem>>, vector<1x1x32xf32>
    %291 = vector.shape_cast %290 : vector<1x1x32xf32> to vector<1x32xf32>
    %292 = vector.broadcast %291 : vector<1x32xf32> to vector<9x32xf32>
    %293 = arith.addf %289, %292 : vector<9x32xf32>
    %294 = arith.addf %261, %293 : vector<9x32xf32>
    %295 = vector.extract_strided_slice %294 {offsets = [0, 0], sizes = [1, 32], strides = [1, 1]} : vector<9x32xf32> to vector<1x32xf32>
    %c0_129 = arith.constant 0 : index
    %c0_130 = arith.constant 0 : index
    %296 = vector.load %arg12[%c0_129, %c0_130] : memref<32x32xf32, #tpu.memory_space<vmem>>, vector<32x32xf32>
    %cst_131 = arith.constant dense<0.000000e+00> : vector<1x32xf32>
    %297 = tpu.matmul %295, %296, %cst_131 {dimension_numbers = #tpu.dot_dimension_numbers<[1], [0], [0], [1], [0, 0, 1, 1], [], []>} : vector<1x32xf32>, vector<32x32xf32>, vector<1x32xf32> -> vector<1x32xf32>
    %c0_132 = arith.constant 0 : index
    %c0_133 = arith.constant 0 : index
    %298 = vector.load %arg13[%c0_132, %c0_133] : memref<1x32xf32, #tpu.memory_space<vmem>>, vector<1x32xf32>
    %299 = arith.addf %297, %298 : vector<1x32xf32>
    %cst_134 = arith.constant 0.000000e+00 : f32
    %300 = vector.broadcast %cst_134 : f32 to vector<1x32xf32>
    %301 = arith.maximumf %299, %300 : vector<1x32xf32>
    %c0_135 = arith.constant 0 : index
    %c0_136 = arith.constant 0 : index
    %302 = vector.load %arg14[%c0_135, %c0_136] : memref<32x4xf32, #tpu.memory_space<vmem>>, vector<32x4xf32>
    %cst_137 = arith.constant dense<0.000000e+00> : vector<1x4xf32>
    %303 = tpu.matmul %301, %302, %cst_137 {dimension_numbers = #tpu.dot_dimension_numbers<[1], [0], [0], [1], [0, 0, 1, 1], [], []>} : vector<1x32xf32>, vector<32x4xf32>, vector<1x4xf32> -> vector<1x4xf32>
    %c0_138 = arith.constant 0 : index
    %c0_139 = arith.constant 0 : index
    %304 = vector.load %arg15[%c0_138, %c0_139] : memref<1x4xf32, #tpu.memory_space<vmem>>, vector<1x4xf32>
    %305 = arith.addf %303, %304 : vector<1x4xf32>
    %c0_140 = arith.constant 0 : index
    %c0_141 = arith.constant 0 : index
    %c0_142 = arith.constant 0 : index
    %306 = vector.load %arg16[%c0_140, %c0_141, %c0_142] : memref<1x1x4xf32, #tpu.memory_space<vmem>>, vector<1x1x4xf32>
    %307 = vector.shape_cast %306 : vector<1x1x4xf32> to vector<1x4xf32>
    %308 = vector.shape_cast %305 : vector<1x4xf32> to vector<1x1x4xf32>
    tpu.vector_store %arg16[%c0_140, %c0_141, %c0_142], %308 {strides = array<i32>} : memref<1x1x4xf32, #tpu.memory_space<vmem>>, vector<1x1x4xf32>,
    return
  }
  func.func @transform_0(%arg0: i32) -> (i32, i32, i32) {
    %c0_i32 = arith.constant 0 : i32
    %c0_i32_0 = arith.constant 0 : i32
    %c0_i32_1 = arith.constant 0 : i32
    return %arg0, %c0_i32, %c0_i32_0 : i32, i32, i32
  }
  func.func @transform_1(%arg0: i32) -> (i32, i32) {
    %c0_i32 = arith.constant 0 : i32
    %c0_i32_0 = arith.constant 0 : i32
    %c0_i32_1 = arith.constant 0 : i32
    return %c0_i32, %c0_i32_0 : i32, i32
  }
  func.func @transform_2(%arg0: i32) -> (i32, i32) {
    %c0_i32 = arith.constant 0 : i32
    %c0_i32_0 = arith.constant 0 : i32
    %c0_i32_1 = arith.constant 0 : i32
    return %c0_i32, %c0_i32_0 : i32, i32
  }
  func.func @transform_3(%arg0: i32) -> (i32, i32, i32) {
    %c0_i32 = arith.constant 0 : i32
    %c0_i32_0 = arith.constant 0 : i32
    %c0_i32_1 = arith.constant 0 : i32
    %c0_i32_2 = arith.constant 0 : i32
    return %c0_i32, %c0_i32_0, %c0_i32_1 : i32, i32, i32
  }
  func.func @transform_4(%arg0: i32) -> (i32, i32, i32) {
    %c0_i32 = arith.constant 0 : i32
    %c0_i32_0 = arith.constant 0 : i32
    %c0_i32_1 = arith.constant 0 : i32
    %c0_i32_2 = arith.constant 0 : i32
    return %c0_i32, %c0_i32_0, %c0_i32_1 : i32, i32, i32
  }
  func.func @transform_5(%arg0: i32) -> (i32, i32, i32) {
    %c0_i32 = arith.constant 0 : i32
    %c0_i32_0 = arith.constant 0 : i32
    %c0_i32_1 = arith.constant 0 : i32
    %c0_i32_2 = arith.constant 0 : i32
    return %c0_i32, %c0_i32_0, %c0_i32_1 : i32, i32, i32
  }
  func.func @transform_6(%arg0: i32) -> (i32, i32, i32) {
    %c0_i32 = arith.constant 0 : i32
    %c0_i32_0 = arith.constant 0 : i32
    %c0_i32_1 = arith.constant 0 : i32
    %c0_i32_2 = arith.constant 0 : i32
    return %c0_i32, %c0_i32_0, %c0_i32_1 : i32, i32, i32
  }
  func.func @transform_7(%arg0: i32) -> (i32, i32, i32) {
    %c0_i32 = arith.constant 0 : i32
    %c0_i32_0 = arith.constant 0 : i32
    %c0_i32_1 = arith.constant 0 : i32
    %c0_i32_2 = arith.constant 0 : i32
    return %c0_i32, %c0_i32_0, %c0_i32_1 : i32, i32, i32
  }
  func.func @transform_8(%arg0: i32) -> (i32, i32, i32) {
    %c0_i32 = arith.constant 0 : i32
    %c0_i32_0 = arith.constant 0 : i32
    %c0_i32_1 = arith.constant 0 : i32
    %c0_i32_2 = arith.constant 0 : i32
    return %c0_i32, %c0_i32_0, %c0_i32_1 : i32, i32, i32
  }
  func.func @transform_9(%arg0: i32) -> (i32, i32, i32) {
    %c0_i32 = arith.constant 0 : i32
    %c0_i32_0 = arith.constant 0 : i32
    %c0_i32_1 = arith.constant 0 : i32
    %c0_i32_2 = arith.constant 0 : i32
    return %c0_i32, %c0_i32_0, %c0_i32_1 : i32, i32, i32
  }
  func.func @transform_10(%arg0: i32) -> (i32, i32, i32) {
    %c0_i32 = arith.constant 0 : i32
    %c0_i32_0 = arith.constant 0 : i32
    %c0_i32_1 = arith.constant 0 : i32
    %c0_i32_2 = arith.constant 0 : i32
    return %c0_i32, %c0_i32_0, %c0_i32_1 : i32, i32, i32
  }
  func.func @transform_11(%arg0: i32) -> (i32, i32) {
    %c0_i32 = arith.constant 0 : i32
    %c0_i32_0 = arith.constant 0 : i32
    %c0_i32_1 = arith.constant 0 : i32
    return %c0_i32, %c0_i32_0 : i32, i32
  }
  func.func @transform_12(%arg0: i32) -> (i32, i32) {
    %c0_i32 = arith.constant 0 : i32
    %c0_i32_0 = arith.constant 0 : i32
    %c0_i32_1 = arith.constant 0 : i32
    return %c0_i32, %c0_i32_0 : i32, i32
  }
  func.func @transform_13(%arg0: i32) -> (i32, i32) {
    %c0_i32 = arith.constant 0 : i32
    %c0_i32_0 = arith.constant 0 : i32
    %c0_i32_1 = arith.constant 0 : i32
    return %c0_i32, %c0_i32_0 : i32, i32
  }
  func.func @transform_14(%arg0: i32) -> (i32, i32) {
    %c0_i32 = arith.constant 0 : i32
    %c0_i32_0 = arith.constant 0 : i32
    %c0_i32_1 = arith.constant 0 : i32
    return %c0_i32, %c0_i32_0 : i32, i32
  }
  func.func @transform_15(%arg0: i32) -> (i32, i32, i32) {
    %c0_i32 = arith.constant 0 : i32
    %c0_i32_0 = arith.constant 0 : i32
    %c0_i32_1 = arith.constant 0 : i32
    return %arg0, %c0_i32, %c0_i32_0 : i32, i32, i32
  }
}

</mosaic_0001>

<llo_original>
// kernel: cls_transformer_forward.1
$region0: #{cls_transformer_forward.1}
  #allocation0 [shape = 'u32[]', space=smem, size = 0x4, offset = 0x4, fixed_abs, tag = 'smem constant byte address 0x4 - core index']
  #allocation1 [shape = 'u32[144,128]{1,0:T(1,128)}', space=vmem, size = 0x12000, scoped, tag = 'internal scratch']
  %s0 = inlined_call_operand.vmem [shape: s32[2,9,1], index: 0, kind: input, shape index: {}]
  %s1 = inlined_call_operand.vmem [shape: f32[33,32], index: 1, kind: input, shape index: {}]
  %s2 = inlined_call_operand.vmem [shape: f32[9,32], index: 2, kind: input, shape index: {}]
  %s3 = inlined_call_operand.vmem [shape: f32[2,32,96], index: 3, kind: input, shape index: {}]
  %s4 = inlined_call_operand.vmem [shape: f32[2,1,96], index: 4, kind: input, shape index: {}]
  %s5 = inlined_call_operand.vmem [shape: f32[2,32,32], index: 5, kind: input, shape index: {}]
  %s6 = inlined_call_operand.vmem [shape: f32[2,1,32], index: 6, kind: input, shape index: {}]
  %s7 = inlined_call_operand.vmem [shape: f32[2,32,64], index: 7, kind: input, shape index: {}]
  %s8 = inlined_call_operand.vmem [shape: f32[2,1,64], index: 8, kind: input, shape index: {}]
  %s9 = inlined_call_operand.vmem [shape: f32[2,64,32], index: 9, kind: input, shape index: {}]
  %s10 = inlined_call_operand.vmem [shape: f32[2,1,32], index: 10, kind: input, shape index: {}]
  %s11 = inlined_call_operand.vmem [shape: f32[32,32], index: 11, kind: input, shape index: {}]
  %s12 = inlined_call_operand.vmem [shape: f32[1,32], index: 12, kind: input, shape index: {}]
  %s13 = inlined_call_operand.vmem [shape: f32[32,4], index: 13, kind: input, shape index: {}]
  %s14 = inlined_call_operand.vmem [shape: f32[1,4], index: 14, kind: input, shape index: {}]
  %s15 = inlined_call_operand.hbm [shape: f32[2,1,4], index: 15, kind: output, shape index: {}]
  %s16 = sld [smem:[#allocation0]]
  $region93: #{cls_transformer_forward.1} parent=0
    _
  %s18 = ssub.s32 1, %s16
  %s19 = scalar_select 0, %s18, %s16
  $region1: #{cls_transformer_forward.1} parent=0
    #allocation2 [shape = 'u8[1024]{0}', space=vmem, size = 0x400, scoped, tag = 'output window, operand 0']
    #allocation3 [shape = 's32[2]{0}', space=sflag, size = 0x8, scoped, tag = 'scoped memory for cls_transformer_forward.1']
    %20 = vsyncpa [#allocation3], 0
    %s21 = scalar_lea.sflag [#allocation3], 1
    %22 = vsyncpa %s21, 0
    loop: start=0, step=1, limit=4
    $region2: #{cls_transformer_forward.1} parent=1 // loop_pre_header
      _
    $region3: #{cls_transformer_forward.1} parent=1 // loop_header
      %s24 = sphi 0, %s28
      %p25 = scmp.ge.s32.totalorder %s24, 4
      %s34 = sphi 0, %s36
      %s37 = sphi 0, %s34
      %s38 = sphi 0, %s37
      %s54 = sphi 0, %s38
      %s58 = sphi 0, %s58
      %s60 = sphi 0, %s58
      %s61 = sphi 0, %s60
      %s75 = sphi 0, %s61
      %s79 = sphi 0, %s79
      %s81 = sphi 0, %s79
      %s82 = sphi 0, %s81
      %s96 = sphi 0, %s82
      %s100 = sphi 0, %s100
      %s102 = sphi 0, %s100
      %s103 = sphi 0, %s102
      %s117 = sphi 0, %s103
      %s121 = sphi 0, %s121
      %s123 = sphi 0, %s121
      %s124 = sphi 0, %s123
      %s138 = sphi 0, %s124
      %s142 = sphi 0, %s142
      %s144 = sphi 0, %s142
      %s145 = sphi 0, %s144
      %s159 = sphi 0, %s145
      %s163 = sphi 0, %s163
      %s165 = sphi 0, %s163
      %s166 = sphi 0, %s165
      %s180 = sphi 0, %s166
      %s184 = sphi 0, %s184
      %s186 = sphi 0, %s184
      %s187 = sphi 0, %s186
      %s201 = sphi 0, %s187
      %s205 = sphi 0, %s205
      %s207 = sphi 0, %s205
      %s208 = sphi 0, %s207
      %s222 = sphi 0, %s208
      %s226 = sphi 0, %s226
      %s228 = sphi 0, %s226
      %s229 = sphi 0, %s228
      %s243 = sphi 0, %s229
      %s247 = sphi 0, %s247
      %s249 = sphi 0, %s247
      %s250 = sphi 0, %s249
      %s264 = sphi 0, %s250
      %s268 = sphi 0, %s268
      %s270 = sphi 0, %s268
      %s271 = sphi 0, %s270
      %s285 = sphi 0, %s271
      %s289 = sphi 0, %s289
      %s291 = sphi 0, %s289
      %s292 = sphi 0, %s291
      %s306 = sphi 0, %s292
      %s310 = sphi 0, %s310
      %s312 = sphi 0, %s310
      %s313 = sphi 0, %s312
      %s327 = sphi 0, %s313
      %s331 = sphi 0, %s331
      %s333 = sphi 0, %s331
      %s334 = sphi 0, %s333
      %s348 = sphi 0, %s334
      %s354 = sphi 0, %s356
      %s357 = sphi 0, %s354
      %s358 = sphi 0, %s357
      %s374 = sphi 0, %s358
    $region4: #{cls_transformer_forward.1} parent=1 // loop_header_branch
      %27 = sbr.rel (%p25) target = $region8
    $region5: #{cls_transformer_forward.1} parent=1 // loop_body
      %s29 = ssub.s32 %s24, 1
      %s30 = ssub.s32 %s24, 2
      %s31 = sadd.s32 %s24, 1
      %s32 = ssub.s32 %s24, %s31
      %p33 = scmp.eq.s32.totalorder %s32, 0
      %s35 = sadd.s32 %s34, 1
      %s36 = scalar_select %p33, %s34, %s35
      %p39 = pneg %p33
      %p40 = scmp.eq.s32.totalorder %s24, 1
      %p41 = por %p39, %p40
      %p42 = scmp.ne.s32.totalorder %s34, %s37
      %p43 = scmp.eq.s32.totalorder %s24, 0
      %p44 = por %p42, %p43
      %p45 = scmp.ne.s32.totalorder %s34, %s37
      %p46 = scmp.eq.s32.totalorder %s29, 1
      %p47 = por %p45, %p46
      %p48 = scmp.ne.s32.totalorder %s37, %s38
      %p49 = scmp.eq.s32.totalorder %s29, 0
      %p50 = por %p48, %p49
      %p51 = scmp.ne.s32.totalorder %s37, %s38
      %p52 = scmp.eq.s32.totalorder %s30, 1
      %p53 = por %p51, %p52
      %p55 = scmp.ne.s32.totalorder %s38, %s54
      %p56 = scmp.eq.s32.totalorder %s30, 0
      %p57 = por %p55, %p56
      %s59 = sadd.s32 %s58, 1
      %p62 = scmp.eq.s32.totalorder %s24, 1
      %p63 = scmp.ne.s32.totalorder %s58, %s60
      %p64 = scmp.eq.s32.totalorder %s24, 0
      %p65 = por %p63, %p64
      %p66 = scmp.ne.s32.totalorder %s58, %s60
      %p67 = scmp.eq.s32.totalorder %s29, 1
      %p68 = por %p66, %p67
      %p69 = scmp.ne.s32.totalorder %s60, %s61
      %p70 = scmp.eq.s32.totalorder %s29, 0
      %p71 = por %p69, %p70
      %p72 = scmp.ne.s32.totalorder %s60, %s61
      %p73 = scmp.eq.s32.totalorder %s30, 1
      %p74 = por %p72, %p73
      %p76 = scmp.ne.s32.totalorder %s61, %s75
      %p77 = scmp.eq.s32.totalorder %s30, 0
      %p78 = por %p76, %p77
      %s80 = sadd.s32 %s79, 1
      %p83 = scmp.eq.s32.totalorder %s24, 1
      %p84 = scmp.ne.s32.totalorder %s79, %s81
      %p85 = scmp.eq.s32.totalorder %s24, 0
      %p86 = por %p84, %p85
      %p87 = scmp.ne.s32.totalorder %s79, %s81
      %p88 = scmp.eq.s32.totalorder %s29, 1
      %p89 = por %p87, %p88
      %p90 = scmp.ne.s32.totalorder %s81, %s82
      %p91 = scmp.eq.s32.totalorder %s29, 0
      %p92 = por %p90, %p91
      %p93 = scmp.ne.s32.totalorder %s81, %s82
      %p94 = scmp.eq.s32.totalorder %s30, 1
      %p95 = por %p93, %p94
      %p97 = scmp.ne.s32.totalorder %s82, %s96
      %p98 = scmp.eq.s32.totalorder %s30, 0
      %p99 = por %p97, %p98
      %s101 = sadd.s32 %s100, 1
      %p104 = scmp.eq.s32.totalorder %s24, 1
      %p105 = scmp.ne.s32.totalorder %s100, %s102
      %p106 = scmp.eq.s32.totalorder %s24, 0
      %p107 = por %p105, %p106
      %p108 = scmp.ne.s32.totalorder %s100, %s102
      %p109 = scmp.eq.s32.totalorder %s29, 1
      %p110 = por %p108, %p109
      %p111 = scmp.ne.s32.totalorder %s102, %s103
      %p112 = scmp.eq.s32.totalorder %s29, 0
      %p113 = por %p111, %p112
      %p114 = scmp.ne.s32.totalorder %s102, %s103
      %p115 = scmp.eq.s32.totalorder %s30, 1
      %p116 = por %p114, %p115
      %p118 = scmp.ne.s32.totalorder %s103, %s117
      %p119 = scmp.eq.s32.totalorder %s30, 0
      %p120 = por %p118, %p119
      %s122 = sadd.s32 %s121, 1
      %p125 = scmp.eq.s32.totalorder %s24, 1
      %p126 = scmp.ne.s32.totalorder %s121, %s123
      %p127 = scmp.eq.s32.totalorder %s24, 0
      %p128 = por %p126, %p127
      %p129 = scmp.ne.s32.totalorder %s121, %s123
      %p130 = scmp.eq.s32.totalorder %s29, 1
      %p131 = por %p129, %p130
      %p132 = scmp.ne.s32.totalorder %s123, %s124
      %p133 = scmp.eq.s32.totalorder %s29, 0
      %p134 = por %p132, %p133
      %p135 = scmp.ne.s32.totalorder %s123, %s124
      %p136 = scmp.eq.s32.totalorder %s30, 1
      %p137 = por %p135, %p136
      %p139 = scmp.ne.s32.totalorder %s124, %s138
      %p140 = scmp.eq.s32.totalorder %s30, 0
      %p141 = por %p139, %p140
      %s143 = sadd.s32 %s142, 1
      %p146 = scmp.eq.s32.totalorder %s24, 1
      %p147 = scmp.ne.s32.totalorder %s142, %s144
      %p148 = scmp.eq.s32.totalorder %s24, 0
      %p149 = por %p147, %p148
      %p150 = scmp.ne.s32.totalorder %s142, %s144
      %p151 = scmp.eq.s32.totalorder %s29, 1
      %p152 = por %p150, %p151
      %p153 = scmp.ne.s32.totalorder %s144, %s145
      %p154 = scmp.eq.s32.totalorder %s29, 0
      %p155 = por %p153, %p154
      %p156 = scmp.ne.s32.totalorder %s144, %s145
      %p157 = scmp.eq.s32.totalorder %s30, 1
      %p158 = por %p156, %p157
      %p160 = scmp.ne.s32.totalorder %s145, %s159
      %p161 = scmp.eq.s32.totalorder %s30, 0
      %p162 = por %p160, %p161
      %s164 = sadd.s32 %s163, 1
      %p167 = scmp.eq.s32.totalorder %s24, 1
      %p168 = scmp.ne.s32.totalorder %s163, %s165
      %p169 = scmp.eq.s32.totalorder %s24, 0
      %p170 = por %p168, %p169
      %p171 = scmp.ne.s32.totalorder %s163, %s165
      %p172 = scmp.eq.s32.totalorder %s29, 1
      %p173 = por %p171, %p172
      %p174 = scmp.ne.s32.totalorder %s165, %s166
      %p175 = scmp.eq.s32.totalorder %s29, 0
      %p176 = por %p174, %p175
      %p177 = scmp.ne.s32.totalorder %s165, %s166
      %p178 = scmp.eq.s32.totalorder %s30, 1
      %p179 = por %p177, %p178
      %p181 = scmp.ne.s32.totalorder %s166, %s180
      %p182 = scmp.eq.s32.totalorder %s30, 0
      %p183 = por %p181, %p182
      %s185 = sadd.s32 %s184, 1
      %p188 = scmp.eq.s32.totalorder %s24, 1
      %p189 = scmp.ne.s32.totalorder %s184, %s186
      %p190 = scmp.eq.s32.totalorder %s24, 0
      %p191 = por %p189, %p190
      %p192 = scmp.ne.s32.totalorder %s184, %s186
      %p193 = scmp.eq.s32.totalorder %s29, 1
      %p194 = por %p192, %p193
      %p195 = scmp.ne.s32.totalorder %s186, %s187
      %p196 = scmp.eq.s32.totalorder %s29, 0
      %p197 = por %p195, %p196
      %p198 = scmp.ne.s32.totalorder %s186, %s187
      %p199 = scmp.eq.s32.totalorder %s30, 1
      %p200 = por %p198, %p199
      %p202 = scmp.ne.s32.totalorder %s187, %s201
      %p203 = scmp.eq.s32.totalorder %s30, 0
      %p204 = por %p202, %p203
      %s206 = sadd.s32 %s205, 1
      %p209 = scmp.eq.s32.totalorder %s24, 1
      %p210 = scmp.ne.s32.totalorder %s205, %s207
      %p211 = scmp.eq.s32.totalorder %s24, 0
      %p212 = por %p210, %p211
      %p213 = scmp.ne.s32.totalorder %s205, %s207
      %p214 = scmp.eq.s32.totalorder %s29, 1
      %p215 = por %p213, %p214
      %p216 = scmp.ne.s32.totalorder %s207, %s208
      %p217 = scmp.eq.s32.totalorder %s29, 0
      %p218 = por %p216, %p217
      %p219 = scmp.ne.s32.totalorder %s207, %s208
      %p220 = scmp.eq.s32.totalorder %s30, 1
      %p221 = por %p219, %p220
      %p223 = scmp.ne.s32.totalorder %s208, %s222
      %p224 = scmp.eq.s32.totalorder %s30, 0
      %p225 = por %p223, %p224
      %s227 = sadd.s32 %s226, 1
      %p230 = scmp.eq.s32.totalorder %s24, 1
      %p231 = scmp.ne.s32.totalorder %s226, %s228
      %p232 = scmp.eq.s32.totalorder %s24, 0
      %p233 = por %p231, %p232
      %p234 = scmp.ne.s32.totalorder %s226, %s228
      %p235 = scmp.eq.s32.totalorder %s29, 1
      %p236 = por %p234, %p235
      %p237 = scmp.ne.s32.totalorder %s228, %s229
      %p238 = scmp.eq.s32.totalorder %s29, 0
      %p239 = por %p237, %p238
      %p240 = scmp.ne.s32.totalorder %s228, %s229
      %p241 = scmp.eq.s32.totalorder %s30, 1
      %p242 = por %p240, %p241
      %p244 = scmp.ne.s32.totalorder %s229, %s243
      %p245 = scmp.eq.s32.totalorder %s30, 0
      %p246 = por %p244, %p245
      %s248 = sadd.s32 %s247, 1
      %p251 = scmp.eq.s32.totalorder %s24, 1
      %p252 = scmp.ne.s32.totalorder %s247, %s249
      %p253 = scmp.eq.s32.totalorder %s24, 0
      %p254 = por %p252, %p253
      %p255 = scmp.ne.s32.totalorder %s247, %s249
      %p256 = scmp.eq.s32.totalorder %s29, 1
      %p257 = por %p255, %p256
      %p258 = scmp.ne.s32.totalorder %s249, %s250
      %p259 = scmp.eq.s32.totalorder %s29, 0
      %p260 = por %p258, %p259
      %p261 = scmp.ne.s32.totalorder %s249, %s250
      %p262 = scmp.eq.s32.totalorder %s30, 1
      %p263 = por %p261, %p262
      %p265 = scmp.ne.s32.totalorder %s250, %s264
      %p266 = scmp.eq.s32.totalorder %s30, 0
      %p267 = por %p265, %p266
      %s269 = sadd.s32 %s268, 1
      %p272 = scmp.eq.s32.totalorder %s24, 1
      %p273 = scmp.ne.s32.totalorder %s268, %s270
      %p274 = scmp.eq.s32.totalorder %s24, 0
      %p275 = por %p273, %p274
      %p276 = scmp.ne.s32.totalorder %s268, %s270
      %p277 = scmp.eq.s32.totalorder %s29, 1
      %p278 = por %p276, %p277
      %p279 = scmp.ne.s32.totalorder %s270, %s271
      %p280 = scmp.eq.s32.totalorder %s29, 0
      %p281 = por %p279, %p280
      %p282 = scmp.ne.s32.totalorder %s270, %s271
      %p283 = scmp.eq.s32.totalorder %s30, 1
      %p284 = por %p282, %p283
      %p286 = scmp.ne.s32.totalorder %s271, %s285
      %p287 = scmp.eq.s32.totalorder %s30, 0
      %p288 = por %p286, %p287
      %s290 = sadd.s32 %s289, 1
      %p293 = scmp.eq.s32.totalorder %s24, 1
      %p294 = scmp.ne.s32.totalorder %s289, %s291
      %p295 = scmp.eq.s32.totalorder %s24, 0
      %p296 = por %p294, %p295
      %p297 = scmp.ne.s32.totalorder %s289, %s291
      %p298 = scmp.eq.s32.totalorder %s29, 1
      %p299 = por %p297, %p298
      %p300 = scmp.ne.s32.totalorder %s291, %s292
      %p301 = scmp.eq.s32.totalorder %s29, 0
      %p302 = por %p300, %p301
      %p303 = scmp.ne.s32.totalorder %s291, %s292
      %p304 = scmp.eq.s32.totalorder %s30, 1
      %p305 = por %p303, %p304
      %p307 = scmp.ne.s32.totalorder %s292, %s306
      %p308 = scmp.eq.s32.totalorder %s30, 0
      %p309 = por %p307, %p308
      %s311 = sadd.s32 %s310, 1
      %p314 = scmp.eq.s32.totalorder %s24, 1
      %p315 = scmp.ne.s32.totalorder %s310, %s312
      %p316 = scmp.eq.s32.totalorder %s24, 0
      %p317 = por %p315, %p316
      %p318 = scmp.ne.s32.totalorder %s310, %s312
      %p319 = scmp.eq.s32.totalorder %s29, 1
      %p320 = por %p318, %p319
      %p321 = scmp.ne.s32.totalorder %s312, %s313
      %p322 = scmp.eq.s32.totalorder %s29, 0
      %p323 = por %p321, %p322
      %p324 = scmp.ne.s32.totalorder %s312, %s313
      %p325 = scmp.eq.s32.totalorder %s30, 1
      %p326 = por %p324, %p325
      %p328 = scmp.ne.s32.totalorder %s313, %s327
      %p329 = scmp.eq.s32.totalorder %s30, 0
      %p330 = por %p328, %p329
      %s332 = sadd.s32 %s331, 1
      %p335 = scmp.eq.s32.totalorder %s24, 1
      %p336 = scmp.ne.s32.totalorder %s331, %s333
      %p337 = scmp.eq.s32.totalorder %s24, 0
      %p338 = por %p336, %p337
      %p339 = scmp.ne.s32.totalorder %s331, %s333
      %p340 = scmp.eq.s32.totalorder %s29, 1
      %p341 = por %p339, %p340
      %p342 = scmp.ne.s32.totalorder %s333, %s334
      %p343 = scmp.eq.s32.totalorder %s29, 0
      %p344 = por %p342, %p343
      %p345 = scmp.ne.s32.totalorder %s333, %s334
      %p346 = scmp.eq.s32.totalorder %s30, 1
      %p347 = por %p345, %p346
      %p349 = scmp.ne.s32.totalorder %s334, %s348
      %p350 = scmp.eq.s32.totalorder %s30, 0
      %p351 = por %p349, %p350
      %s352 = ssub.s32 %s24, %s31
      %p353 = scmp.eq.s32.totalorder %s352, 0
      %s355 = sadd.s32 %s354, 1
      %s356 = scalar_select %p353, %s354, %s355
      %p359 = pneg %p353
      %p360 = scmp.eq.s32.totalorder %s24, 1
      %p361 = por %p359, %p360
      %p362 = scmp.ne.s32.totalorder %s354, %s357
      %p363 = scmp.eq.s32.totalorder %s24, 0
      %p364 = por %p362, %p363
      %p365 = scmp.ne.s32.totalorder %s354, %s357
      %p366 = scmp.eq.s32.totalorder %s29, 1
      %p367 = por %p365, %p366
      %p368 = scmp.ne.s32.totalorder %s357, %s358
      %p369 = scmp.eq.s32.totalorder %s29, 0
      %p370 = por %p368, %p369
      %p371 = scmp.ne.s32.totalorder %s357, %s358
      %p372 = scmp.eq.s32.totalorder %s30, 1
      %p373 = por %p371, %p372
      %p375 = scmp.ne.s32.totalorder %s358, %s374
      %p376 = scmp.eq.s32.totalorder %s30, 0
      %p377 = por %p375, %p376
      %p378 = scmp.le.s32.totalorder 1, %s24
      %p379 = scmp.lt.s32.totalorder %s24, 3
      %p380 = pnand %p378, %p379
      %p381 = pneg %p380
      // Predicated region
      $region9: #{cls_transformer_forward.1} parent=5 // pred_check
        _
      $region10: #{cls_transformer_forward.1} parent=5 // pred_check_branch
        %383 = sbr.rel (%p380) target = $region12
      $region11: #{cls_transformer_forward.1} parent=5 // pred_region
        %s384 = ssub.s32 %s24, 1
        // Predicated region
        $region13: #{cls_transformer_forward.1} parent=11 // pred_check
          %p385 = pneg %p71
        $region14: #{cls_transformer_forward.1} parent=11 // pred_check_branch
          %387 = sbr.rel (%p385) target = $region16
        $region15: #{cls_transformer_forward.1} parent=11 // pred_region
          _
        $region16: #{cls_transformer_forward.1} parent=11 // pred_fallthru
          _
        // Predicated region
        $region17: #{cls_transformer_forward.1} parent=11 // pred_check
          %p388 = pneg %p92
        $region18: #{cls_transformer_forward.1} parent=11 // pred_check_branch
          %390 = sbr.rel (%p388) target = $region20
        $region19: #{cls_transformer_forward.1} parent=11 // pred_region
          _
        $region20: #{cls_transformer_forward.1} parent=11 // pred_fallthru
          _
        // Predicated region
        $region21: #{cls_transformer_forward.1} parent=11 // pred_check
          %p391 = pneg %p113
        $region22: #{cls_transformer_forward.1} parent=11 // pred_check_branch
          %393 = sbr.rel (%p391) target = $region24
        $region23: #{cls_transformer_forward.1} parent=11 // pred_region
          _
        $region24: #{cls_transformer_forward.1} parent=11 // pred_fallthru
          _
        // Predicated region
        $region25: #{cls_transformer_forward.1} parent=11 // pred_check
          %p394 = pneg %p134
        $region26: #{cls_transformer_forward.1} parent=11 // pred_check_branch
          %396 = sbr.rel (%p394) target = $region28
        $region27: #{cls_transformer_forward.1} parent=11 // pred_region
          _
        $region28: #{cls_transformer_forward.1} parent=11 // pred_fallthru
          _
        // Predicated region
        $region29: #{cls_transformer_forward.1} parent=11 // pred_check
          %p397 = pneg %p155
        $region30: #{cls_transformer_forward.1} parent=11 // pred_check_branch
          %399 = sbr.rel (%p397) target = $region32
        $region31: #{cls_transformer_forward.1} parent=11 // pred_region
          _
        $region32: #{cls_transformer_forward.1} parent=11 // pred_fallthru
          _
        // Predicated region
        $region33: #{cls_transformer_forward.1} parent=11 // pred_check
          %p400 = pneg %p176
        $region34: #{cls_transformer_forward.1} parent=11 // pred_check_branch
          %402 = sbr.rel (%p400) target = $region36
        $region35: #{cls_transformer_forward.1} parent=11 // pred_region
          _
        $region36: #{cls_transformer_forward.1} parent=11 // pred_fallthru
          _
        // Predicated region
        $region37: #{cls_transformer_forward.1} parent=11 // pred_check
          %p403 = pneg %p197
        $region38: #{cls_transformer_forward.1} parent=11 // pred_check_branch
          %405 = sbr.rel (%p403) target = $region40
        $region39: #{cls_transformer_forward.1} parent=11 // pred_region
          _
        $region40: #{cls_transformer_forward.1} parent=11 // pred_fallthru
          _
        // Predicated region
        $region41: #{cls_transformer_forward.1} parent=11 // pred_check
          %p406 = pneg %p218
        $region42: #{cls_transformer_forward.1} parent=11 // pred_check_branch
          %408 = sbr.rel (%p406) target = $region44
        $region43: #{cls_transformer_forward.1} parent=11 // pred_region
          _
        $region44: #{cls_transformer_forward.1} parent=11 // pred_fallthru
          _
        // Predicated region
        $region45: #{cls_transformer_forward.1} parent=11 // pred_check
          %p409 = pneg %p239
        $region46: #{cls_transformer_forward.1} parent=11 // pred_check_branch
          %411 = sbr.rel (%p409) target = $region48
        $region47: #{cls_transformer_forward.1} parent=11 // pred_region
          _
        $region48: #{cls_transformer_forward.1} parent=11 // pred_fallthru
          _
        // Predicated region
        $region49: #{cls_transformer_forward.1} parent=11 // pred_check
          %p412 = pneg %p260
        $region50: #{cls_transformer_forward.1} parent=11 // pred_check_branch
          %414 = sbr.rel (%p412) target = $region52
        $region51: #{cls_transformer_forward.1} parent=11 // pred_region
          _
        $region52: #{cls_transformer_forward.1} parent=11 // pred_fallthru
          _
        // Predicated region
        $region53: #{cls_transformer_forward.1} parent=11 // pred_check
          %p415 = pneg %p281
        $region54: #{cls_transformer_forward.1} parent=11 // pred_check_branch
          %417 = sbr.rel (%p415) target = $region56
        $region55: #{cls_transformer_forward.1} parent=11 // pred_region
          _
        $region56: #{cls_transformer_forward.1} parent=11 // pred_fallthru
          _
        // Predicated region
        $region57: #{cls_transformer_forward.1} parent=11 // pred_check
          %p418 = pneg %p302
        $region58: #{cls_transformer_forward.1} parent=11 // pred_check_branch
          %420 = sbr.rel (%p418) target = $region60
        $region59: #{cls_transformer_forward.1} parent=11 // pred_region
          _
        $region60: #{cls_transformer_forward.1} parent=11 // pred_fallthru
          _
        // Predicated region
        $region61: #{cls_transformer_forward.1} parent=11 // pred_check
          %p421 = pneg %p323
        $region62: #{cls_transformer_forward.1} parent=11 // pred_check_branch
          %423 = sbr.rel (%p421) target = $region64
        $region63: #{cls_transformer_forward.1} parent=11 // pred_region
          _
        $region64: #{cls_transformer_forward.1} parent=11 // pred_fallthru
          _
        // Predicated region
        $region65: #{cls_transformer_forward.1} parent=11 // pred_check
          %p424 = pneg %p344
        $region66: #{cls_transformer_forward.1} parent=11 // pred_check_branch
          %426 = sbr.rel (%p424) target = $region68
        $region67: #{cls_transformer_forward.1} parent=11 // pred_region
          _
        $region68: #{cls_transformer_forward.1} parent=11 // pred_fallthru
          _
      $region12: #{cls_transformer_forward.1} parent=5 // pred_fallthru
        _
      %p427 = scmp.lt.s32.totalorder %s24, 2
      // Predicated region
      $region69: #{cls_transformer_forward.1} parent=5 // pred_check
        %p428 = pneg %p427
      $region70: #{cls_transformer_forward.1} parent=5 // pred_check_branch
        %430 = sbr.rel (%p428) target = $region72
      $region71: #{cls_transformer_forward.1} parent=5 // pred_region
        // Predicated region
        $region73: #{cls_transformer_forward.1} parent=71 // pred_check
          %p431 = pneg %p44
        $region74: #{cls_transformer_forward.1} parent=71 // pred_check_branch
          %433 = sbr.rel (%p431) target = $region76
        $region75: #{cls_transformer_forward.1} parent=71 // pred_region
          %p434 = scmp.lt.s32.totalorder %s24, 1
          %s435 = scalar_select %p434, %s24, 1
          %s436 = smul.addr %s435, 2
          %s437 = smul.addr %s436, 8
          %s438 = scalar_lea.vmem %s0, %s437
        $region76: #{cls_transformer_forward.1} parent=71 // pred_fallthru
          _
      $region72: #{cls_transformer_forward.1} parent=5 // pred_fallthru
        _
      %p439 = scmp.le.s32.totalorder 1, %s24
      %p440 = scmp.lt.s32.totalorder %s24, 3
      %p441 = pnand %p439, %p440
      %p442 = pneg %p441
      // Predicated region
      $region77: #{cls_transformer_forward.1} parent=5 // pred_check
        _
      $region78: #{cls_transformer_forward.1} parent=5 // pred_check_branch
        %444 = sbr.rel (%p441) target = $region80
      $region79: #{cls_transformer_forward.1} parent=5 // pred_region
        %s445 = ssub.s32 %s24, 1
        %p446 = scmp.lt.s32.totalorder %s29, 1
        %s447 = scalar_select %p446, %s29, 1
        %s448 = smul.addr %s447, 2
        %s449 = smul.addr %s448, 8
        %s450 = scalar_lea.vmem %s0, %s449
        %p451 = pneg %p50
        %p452 = pneg %p47
        %p453 = pneg %p71
        %p454 = pneg %p68
        %p455 = pneg %p92
        %p456 = pneg %p89
        %p457 = pneg %p113
        %p458 = pneg %p110
        %p459 = pneg %p134
        %p460 = pneg %p131
        %p461 = pneg %p155
        %p462 = pneg %p152
        %p463 = pneg %p176
        %p464 = pneg %p173
        %p465 = pneg %p197
        %p466 = pneg %p194
        %p467 = pneg %p218
        %p468 = pneg %p215
        %p469 = pneg %p239
        %p470 = pneg %p236
        %p471 = pneg %p260
        %p472 = pneg %p257
        %p473 = pneg %p281
        %p474 = pneg %p278
        %p475 = pneg %p302
        %p476 = pneg %p299
        %p477 = pneg %p323
        %p478 = pneg %p320
        %p479 = pneg %p344
        %p480 = pneg %p341
        %p481 = pneg %p370
        %p482 = pneg %p367
        %s483 = sand.u32 %s357, 1
        %s484 = scalar_lea.sflag [#allocation3], %s483
        %s485 = sand.u32 %s357, 1
        %s486 = scalar_lea.vmem [#allocation2], %s485
        %p487 = scmp.lt.s32.totalorder %s29, 1
        %s488 = scalar_select %p487, %s29, 1
        %s489 = smul.addr %s488, 2
        %s490 = smul.addr %s489, 8
        %s491 = scalar_lea.vmem %s0, %s490
        %v492 = vld [vmem:[%s491] sm:$0xff]
        %v493 = vld [vmem:[%s491 + $0x8] sm:$0x1]
        %v494 = vlaneseq
        %v495 = vand.u32 %v494, 127
        %496 = vset.pattern.permute.xlu0 0
        %497 = vperm.xlu0 %496, %v492
        %v498 = vpop.permute.xlu0 %497
        %499 = vset.pattern.permute.xlu0 0
        %500 = vperm.xlu0 %499, %v493
        %v501 = vpop.permute.xlu0 %500
        %vm502 = vcmp.eq.s32.totalorder %v498, %v495
        %vm503 = vcmp.eq.s32.totalorder %v501, %v495
        %v504 = vsel %vm502, 1, 0
        %v505 = vsel %vm503, 1, 0
        %v506 = vcvt.s32.f32 %v504
        %v507 = vcvt.s32.f32 %v505
        %v508 = vld [vmem:[%s1] sm:$0xff]
        %v509 = vld [vmem:[%s1 + $0x8] sm:$0xff]
        %v510 = vld [vmem:[%s1 + $0x10] sm:$0xff]
        %v511 = vld [vmem:[%s1 + $0x18] sm:$0xff]
        %v512 = vld [vmem:[%s1 + $0x20] sm:$0x1]
        %v513 = vld [vmem:[%s2] sm:$0xff]
        %v514 = vld [vmem:[%s2 + $0x8] sm:$0x1]
        %vm515 = vcmask 269312
        %v517 = vsel %vm515, %v506, 0
        %v520 = vsel %vm515, %v507, 0
        %vm522 = vcmask 1040384
        %v524 = vsel %vm522, %v512, 0
        %526 = vmatprep.subr.mxu0 0.0
        %527 = vmatpush1.msra.mxu0 %v508
        %528 = vmatprep.subr.mxu0 0.0
        %529 = vmatpush1.msra.mxu0 %v509
        %530 = vmatprep.subr.mxu0 0.0
        %531 = vmatpush1.msra.mxu0 %v510
        %532 = vmatprep.subr.mxu0 0.0
        %533 = vmatpush1.msra.mxu0 %v511
        %534 = vmatprep.subr.mxu0 0.0
        %535 = vmatpush1.msra.mxu0 %v524
        %536 = vmatprep.subr.mxu0 0.0
        %537 = vmatpush1.msra.mxu0 0.0
        %538 = vmatprep.subr.mxu0 0.0
        %539 = vmatpush1.msra.mxu0 0.0
        %540 = vmatprep.subr.mxu0 0.0
        %541 = vmatpush1.msra.mxu0 0.0
        %542 = vmatprep.subr.mxu0 0.0
        %543 = vmatpush1.msra.mxu0 0.0
        %544 = vmatprep.subr.mxu0 0.0
        %545 = vmatpush1.msra.mxu0 0.0
        %546 = vmatprep.subr.mxu0 0.0
        %547 = vmatpush1.msra.mxu0 0.0
        %548 = vmatprep.subr.mxu0 0.0
        %549 = vmatpush1.msra.mxu0 0.0
        %550 = vmatprep.subr.mxu0 0.0
        %551 = vmatpush1.msra.mxu0 0.0
        %552 = vmatprep.subr.mxu0 0.0
        %553 = vmatpush1.msra.mxu0 0.0
        %554 = vmatprep.subr.mxu0 0.0
        %555 = vmatpush1.msra.mxu0 0.0
        %556 = vmatprep.subr.mxu0 0.0
        %557 = vmatpush1.msra.mxu0 0.0
        %558 = vmatprep.subr.mxu0 0.0
        %559 = vmatpush1.msra.mxu0 0.0
        %560 = vmatprep.subr.mxu0 0.0
        %561 = vmatpush1.msra.mxu0 0.0
        %562 = vmatprep.subr.mxu0 0.0
        %563 = vmatpush1.msra.mxu0 0.0
        %564 = vmatprep.subr.mxu0 0.0
        %565 = vmatpush1.msra.mxu0 0.0
        %566 = vmatprep.subr.mxu0 0.0
        %567 = vmatpush1.msra.mxu0 0.0
        %568 = vmatprep.subr.mxu0 0.0
        %569 = vmatpush1.msra.mxu0 0.0
        %570 = vmatprep.subr.mxu0 0.0
        %571 = vmatpush1.msra.mxu0 0.0
        %572 = vmatprep.subr.mxu0 0.0
        %573 = vmatpush1.msra.mxu0 0.0
        %574 = vmatprep.subr.mxu0 0.0
        %575 = vmatpush1.msra.mxu0 0.0
        %576 = vmatprep.subr.mxu0 0.0
        %577 = vmatpush1.msra.mxu0 0.0
        %578 = vmatprep.subr.mxu0 0.0
        %579 = vmatpush1.msra.mxu0 0.0
        %580 = vmatprep.subr.mxu0 0.0
        %581 = vmatpush1.msra.mxu0 0.0
        %582 = vmatprep.subr.mxu0 0.0
        %583 = vmatpush1.msra.mxu0 0.0
        %584 = vmatprep.subr.mxu0 0.0
        %585 = vmatpush1.msra.mxu0 0.0
        %586 = vmatprep.subr.mxu0 0.0
        %587 = vmatpush1.msra.mxu0 0.0
        %588 = vmatprep.subr.mxu0 0.0
        %589 = vmatpush1.msra.mxu0 0.0
        %590 = vmatprep.mubr.f32.mxu0 0.0
        %591 = vmatmul.mubr.f32.gmra.mrb[0].mxu0 %v517
        %v592 = vpop.f32.mrb[0].mxu0
        %v593 = vadd.f32 %v513, %v592
        %v594 = vpop.f32.mrb[0].mxu0
        %595 = vmatprep.mubr.f32.mxu0 0.0
        %596 = vmatmul.mubr.f32.gmra.mrb[0].mxu0 %v520
        %v597 = vpop.f32.mrb[0].mxu0
        %v598 = vadd.f32 %v514, %v597
        %v599 = vpop.f32.mrb[0].mxu0
        %600 = vdwg.mxu0
        %vm601 = vcmask 261120
        %v602 = vsel %vm601, %v593, 0.0
        %603 = vadd.xlane.f32.xlu0 %v602
        %v604 = vpop.xlane.xlu0 %603
        %vm605 = vcmask 253952
        %v606 = vsel %vm605, %v598, 0.0
        %607 = vadd.xlane.f32.xlu0 %v606
        %v608 = vpop.xlane.xlu0 %607
        %v609 = vrcp.pop 32.0
        %v610 = vmul.f32 %v604, %v609
        %v611 = vmul.f32 %v608, %v609
        %v612 = vsub.f32 %v593, %v610
        %v613 = vsub.f32 %v598, %v611
        %v614 = vmul.f32 %v612, %v612
        %v615 = vmul.f32 %v613, %v613
        %v616 = vsel %vm601, %v614, 0.0
        %617 = vadd.xlane.f32.xlu0 %v616
        %v618 = vpop.xlane.xlu0 %617
        %v619 = vsel %vm605, %v615, 0.0
        %620 = vadd.xlane.f32.xlu0 %v619
        %v621 = vpop.xlane.xlu0 %620
        %v622 = vmul.f32 %v618, %v609
        %v623 = vmul.f32 %v621, %v609
        %v624 = vadd.f32 %v622, 1e-05
        %v625 = vadd.f32 %v623, 1e-05
        %v626 = vrsqrt.pop %v624
        %v627 = vrsqrt.pop %v625
        %v628 = vmul.f32 %v612, %v626
        %v629 = vmul.f32 %v613, %v627
        %v630 = vld [vmem:[%s3] sm:$0xff]
        %v631 = vld [vmem:[%s3 + $0x8] sm:$0xff]
        %v632 = vld [vmem:[%s3 + $0x10] sm:$0xff]
        %v633 = vld [vmem:[%s3 + $0x18] sm:$0xff]
        %v634 = vld [vmem:[%s4] sm:$0x1]
        %v636 = vlaneseq
        %v637 = vshrl.u32 %v636, 7
        %v638 = vsub.s32 0, %v637
        %v639 = vrot.slane %v634, %v638
        %v642 = vsel %vm601, %v628, 0
        %v645 = vsel %vm601, %v629, 0
        %647 = vmatprep.subr.mxu0 0.0
        %648 = vmatpush1.msra.mxu0 %v630
        %649 = vmatprep.subr.mxu0 0.0
        %650 = vmatpush1.msra.mxu0 %v631
        %651 = vmatprep.subr.mxu0 0.0
        %652 = vmatpush1.msra.mxu0 %v632
        %653 = vmatprep.subr.mxu0 0.0
        %654 = vmatpush1.msra.mxu0 %v633
        %655 = vmatprep.subr.mxu0 0.0
        %656 = vmatpush1.msra.mxu0 0.0
        %657 = vmatprep.subr.mxu0 0.0
        %658 = vmatpush1.msra.mxu0 0.0
        %659 = vmatprep.subr.mxu0 0.0
        %660 = vmatpush1.msra.mxu0 0.0
        %661 = vmatprep.subr.mxu0 0.0
        %662 = vmatpush1.msra.mxu0 0.0
        %663 = vmatprep.subr.mxu0 0.0
        %664 = vmatpush1.msra.mxu0 0.0
        %665 = vmatprep.subr.mxu0 0.0
        %666 = vmatpush1.msra.mxu0 0.0
        %667 = vmatprep.subr.mxu0 0.0
        %668 = vmatpush1.msra.mxu0 0.0
        %669 = vmatprep.subr.mxu0 0.0
        %670 = vmatpush1.msra.mxu0 0.0
        %671 = vmatprep.subr.mxu0 0.0
        %672 = vmatpush1.msra.mxu0 0.0
        %673 = vmatprep.subr.mxu0 0.0
        %674 = vmatpush1.msra.mxu0 0.0
        %675 = vmatprep.subr.mxu0 0.0
        %676 = vmatpush1.msra.mxu0 0.0
        %677 = vmatprep.subr.mxu0 0.0
        %678 = vmatpush1.msra.mxu0 0.0
        %679 = vmatprep.subr.mxu0 0.0
        %680 = vmatpush1.msra.mxu0 0.0
        %681 = vmatprep.subr.mxu0 0.0
        %682 = vmatpush1.msra.mxu0 0.0
        %683 = vmatprep.subr.mxu0 0.0
        %684 = vmatpush1.msra.mxu0 0.0
        %685 = vmatprep.subr.mxu0 0.0
        %686 = vmatpush1.msra.mxu0 0.0
        %687 = vmatprep.subr.mxu0 0.0
        %688 = vmatpush1.msra.mxu0 0.0
        %689 = vmatprep.subr.mxu0 0.0
        %690 = vmatpush1.msra.mxu0 0.0
        %691 = vmatprep.subr.mxu0 0.0
        %692 = vmatpush1.msra.mxu0 0.0
        %693 = vmatprep.subr.mxu0 0.0
        %694 = vmatpush1.msra.mxu0 0.0
        %695 = vmatprep.subr.mxu0 0.0
        %696 = vmatpush1.msra.mxu0 0.0
        %697 = vmatprep.subr.mxu0 0.0
        %698 = vmatpush1.msra.mxu0 0.0
        %699 = vmatprep.subr.mxu0 0.0
        %700 = vmatpush1.msra.mxu0 0.0
        %701 = vmatprep.subr.mxu0 0.0
        %702 = vmatpush1.msra.mxu0 0.0
        %703 = vmatprep.subr.mxu0 0.0
        %704 = vmatpush1.msra.mxu0 0.0
        %705 = vmatprep.subr.mxu0 0.0
        %706 = vmatpush1.msra.mxu0 0.0
        %707 = vmatprep.subr.mxu0 0.0
        %708 = vmatpush1.msra.mxu0 0.0
        %709 = vmatprep.subr.mxu0 0.0
        %710 = vmatpush1.msra.mxu0 0.0
        %711 = vmatprep.mubr.f32.mxu0 0.0
        %712 = vmatmul.mubr.f32.gmra.mrb[0].mxu0 %v642
        %v713 = vpop.f32.mrb[0].mxu0
        %v714 = vadd.f32 %v639, %v713
        %v715 = vpop.f32.mrb[0].mxu0
        %716 = vmatprep.mubr.f32.mxu0 0.0
        %717 = vmatmul.mubr.f32.gmra.mrb[0].mxu0 %v645
        %v718 = vpop.f32.mrb[0].mxu0
        %v719 = vadd.f32 %v639, %v718
        %v720 = vpop.f32.mrb[0].mxu0
        %721 = vdwg.mxu0
        %v722 = vld [vmem:[%s5] sm:$0xff]
        %v723 = vld [vmem:[%s5 + $0x8] sm:$0xff]
        %v724 = vld [vmem:[%s5 + $0x10] sm:$0xff]
        %v725 = vld [vmem:[%s5 + $0x18] sm:$0xff]
        %v726 = vld [vmem:[%s6] sm:$0x1]
        %729 = vrot.lane.b32.xlu0 %v714, 96
        %v730 = vpop.permute.xlu0 %729
        %731 = vrot.lane.b32.xlu0 %v719, 96
        %v732 = vpop.permute.xlu0 %731
        %vm733 = vcmask 64512
        %v734 = vsel %vm733, %v714, 0
        %v736 = vsel %vm733, %v719, 0
        %v738 = vsel %vm733, %v730, 0
        %v740 = vsel %vm733, %v732, 0
        %742 = vmatprep.subr.mxu0 0.0
        %743 = vmatpush1.xpose.msra.mxu0 %v738
        %744 = vmatprep.subr.mxu0 0.0
        %745 = vmatpush1.xpose.msra.mxu0 %v740
        %746 = vmatprep.subr.mxu0 0.0
        %747 = vmatpush1.xpose.msra.mxu0 0.0
        %748 = vmatprep.subr.mxu0 0.0
        %749 = vmatpush1.xpose.msra.mxu0 0.0
        %750 = vmatprep.subr.mxu0 0.0
        %751 = vmatpush1.xpose.msra.mxu0 0.0
        %752 = vmatprep.subr.mxu0 0.0
        %753 = vmatpush1.xpose.msra.mxu0 0.0
        %754 = vmatprep.subr.mxu0 0.0
        %755 = vmatpush1.xpose.msra.mxu0 0.0
        %756 = vmatprep.subr.mxu0 0.0
        %757 = vmatpush1.xpose.msra.mxu0 0.0
        %758 = vmatprep.subr.mxu0 0.0
        %759 = vmatpush1.xpose.msra.mxu0 0.0
        %760 = vmatprep.subr.mxu0 0.0
        %761 = vmatpush1.xpose.msra.mxu0 0.0
        %762 = vmatprep.subr.mxu0 0.0
        %763 = vmatpush1.xpose.msra.mxu0 0.0
        %764 = vmatprep.subr.mxu0 0.0
        %765 = vmatpush1.xpose.msra.mxu0 0.0
        %766 = vmatprep.subr.mxu0 0.0
        %767 = vmatpush1.xpose.msra.mxu0 0.0
        %768 = vmatprep.subr.mxu0 0.0
        %769 = vmatpush1.xpose.msra.mxu0 0.0
        %770 = vmatprep.subr.mxu0 0.0
        %771 = vmatpush1.xpose.msra.mxu0 0.0
        %772 = vmatprep.subr.mxu0 0.0
        %773 = vmatpush1.xpose.msra.mxu0 0.0
        %774 = vmatprep.subr.mxu0 0.0
        %775 = vmatpush1.xpose.msra.mxu0 0.0
        %776 = vmatprep.subr.mxu0 0.0
        %777 = vmatpush1.xpose.msra.mxu0 0.0
        %778 = vmatprep.subr.mxu0 0.0
        %779 = vmatpush1.xpose.msra.mxu0 0.0
        %780 = vmatprep.subr.mxu0 0.0
        %781 = vmatpush1.xpose.msra.mxu0 0.0
        %782 = vmatprep.subr.mxu0 0.0
        %783 = vmatpush1.xpose.msra.mxu0 0.0
        %784 = vmatprep.subr.mxu0 0.0
        %785 = vmatpush1.xpose.msra.mxu0 0.0
        %786 = vmatprep.subr.mxu0 0.0
        %787 = vmatpush1.xpose.msra.mxu0 0.0
        %788 = vmatprep.subr.mxu0 0.0
        %789 = vmatpush1.xpose.msra.mxu0 0.0
        %790 = vmatprep.subr.mxu0 0.0
        %791 = vmatpush1.xpose.msra.mxu0 0.0
        %792 = vmatprep.subr.mxu0 0.0
        %793 = vmatpush1.xpose.msra.mxu0 0.0
        %794 = vmatprep.subr.mxu0 0.0
        %795 = vmatpush1.xpose.msra.mxu0 0.0
        %796 = vmatprep.subr.mxu0 0.0
        %797 = vmatpush1.xpose.msra.mxu0 0.0
        %798 = vmatprep.subr.mxu0 0.0
        %799 = vmatpush1.xpose.msra.mxu0 0.0
        %800 = vmatprep.subr.mxu0 0.0
        %801 = vmatpush1.xpose.msra.mxu0 0.0
        %802 = vmatprep.subr.mxu0 0.0
        %803 = vmatpush1.xpose.msra.mxu0 0.0
        %804 = vmatprep.subr.mxu0 0.0
        %805 = vmatpush1.xpose.msra.mxu0 0.0
        %806 = vmatprep.mubr.f32.mxu0 0.0
        %807 = vmatmul.mubr.f32.gmra.mrb[0].mxu0 %v734
        %v808 = vpop.f32.mrb[0].mxu0
        %v809 = vadd.f32 0.0, %v808
        %v810 = vpop.f32.mrb[0].mxu0
        %811 = vmatprep.mubr.f32.mxu0 0.0
        %812 = vmatmul.mubr.f32.gmra.mrb[0].mxu0 %v736
        %v813 = vpop.f32.mrb[0].mxu0
        %v814 = vadd.f32 0.0, %v813
        %v815 = vpop.f32.mrb[0].mxu0
        %816 = vdwg.mxu0
        %v817 = vmul.f32 %v809, 0.35355338
        %v818 = vmul.f32 %v814, 0.35355338
        %vm819 = vcmask 72704
        %v820 = vsel %vm819, %v817, -inf
        %821 = vmax.xlane.f32.xlu0 %v820
        %v822 = vpop.xlane.xlu0 %821
        %vm823 = vcmask 65536
        %v824 = vsel %vm823, %v818, -inf
        %825 = vmax.xlane.f32.xlu0 %v824
        %v826 = vpop.xlane.xlu0 %825
        %v827 = vsub.f32 %v817, %v822
        %v828 = vsub.f32 %v818, %v826
        %v829 = vmul.f32 %v827, 1.442695
        %v830 = vpow.pop %v829
        %v831 = vmul.f32 %v828, 1.442695
        %v832 = vpow.pop %v831
        %v833 = vsel %vm819, %v830, 0.0
        %834 = vadd.xlane.f32.xlu0 %v833
        %v835 = vpop.xlane.xlu0 %834
        %v836 = vsel %vm823, %v832, 0.0
        %837 = vadd.xlane.f32.xlu0 %v836
        %v838 = vpop.xlane.xlu0 %837
        %v839 = vrcp.pop %v835
        %v840 = vrcp.pop %v838
        %v841 = vmul.f32 %v830, %v839
        %v842 = vmul.f32 %v832, %v840
        %843 = vrot.lane.b32.xlu0 %v714, 64
        %v844 = vpop.permute.xlu0 %843
        %845 = vrot.lane.b32.xlu0 %v719, 64
        %v846 = vpop.permute.xlu0 %845
        %v849 = vsel %vm819, %v841, 0
        %v852 = vsel %vm819, %v842, 0
        %v854 = vsel %vm522, %v846, 0
        %856 = vmatprep.subr.mxu0 0.0
        %857 = vmatpush1.msra.mxu0 %v844
        %858 = vmatprep.subr.mxu0 0.0
        %859 = vmatpush1.msra.mxu0 %v854
        %860 = vmatprep.subr.mxu0 0.0
        %861 = vmatpush1.msra.mxu0 0.0
        %862 = vmatprep.subr.mxu0 0.0
        %863 = vmatpush1.msra.mxu0 0.0
        %864 = vmatprep.subr.mxu0 0.0
        %865 = vmatpush1.msra.mxu0 0.0
        %866 = vmatprep.subr.mxu0 0.0
        %867 = vmatpush1.msra.mxu0 0.0
        %868 = vmatprep.subr.mxu0 0.0
        %869 = vmatpush1.msra.mxu0 0.0
        %870 = vmatprep.subr.mxu0 0.0
        %871 = vmatpush1.msra.mxu0 0.0
        %872 = vmatprep.subr.mxu0 0.0
        %873 = vmatpush1.msra.mxu0 0.0
        %874 = vmatprep.subr.mxu0 0.0
        %875 = vmatpush1.msra.mxu0 0.0
        %876 = vmatprep.subr.mxu0 0.0
        %877 = vmatpush1.msra.mxu0 0.0
        %878 = vmatprep.subr.mxu0 0.0
        %879 = vmatpush1.msra.mxu0 0.0
        %880 = vmatprep.subr.mxu0 0.0
        %881 = vmatpush1.msra.mxu0 0.0
        %882 = vmatprep.subr.mxu0 0.0
        %883 = vmatpush1.msra.mxu0 0.0
        %884 = vmatprep.subr.mxu0 0.0
        %885 = vmatpush1.msra.mxu0 0.0
        %886 = vmatprep.subr.mxu0 0.0
        %887 = vmatpush1.msra.mxu0 0.0
        %888 = vmatprep.subr.mxu0 0.0
        %889 = vmatpush1.msra.mxu0 0.0
        %890 = vmatprep.subr.mxu0 0.0
        %891 = vmatpush1.msra.mxu0 0.0
        %892 = vmatprep.subr.mxu0 0.0
        %893 = vmatpush1.msra.mxu0 0.0
        %894 = vmatprep.subr.mxu0 0.0
        %895 = vmatpush1.msra.mxu0 0.0
        %896 = vmatprep.subr.mxu0 0.0
        %897 = vmatpush1.msra.mxu0 0.0
        %898 = vmatprep.subr.mxu0 0.0
        %899 = vmatpush1.msra.mxu0 0.0
        %900 = vmatprep.subr.mxu0 0.0
        %901 = vmatpush1.msra.mxu0 0.0
        %902 = vmatprep.subr.mxu0 0.0
        %903 = vmatpush1.msra.mxu0 0.0
        %904 = vmatprep.subr.mxu0 0.0
        %905 = vmatpush1.msra.mxu0 0.0
        %906 = vmatprep.subr.mxu0 0.0
        %907 = vmatpush1.msra.mxu0 0.0
        %908 = vmatprep.subr.mxu0 0.0
        %909 = vmatpush1.msra.mxu0 0.0
        %910 = vmatprep.subr.mxu0 0.0
        %911 = vmatpush1.msra.mxu0 0.0
        %912 = vmatprep.subr.mxu0 0.0
        %913 = vmatpush1.msra.mxu0 0.0
        %914 = vmatprep.subr.mxu0 0.0
        %915 = vmatpush1.msra.mxu0 0.0
        %916 = vmatprep.subr.mxu0 0.0
        %917 = vmatpush1.msra.mxu0 0.0
        %918 = vmatprep.subr.mxu0 0.0
        %919 = vmatpush1.msra.mxu0 0.0
        %920 = vmatprep.mubr.f32.mxu0 0.0
        %921 = vmatmul.mubr.f32.gmra.mrb[0].mxu0 %v849
        %v922 = vpop.f32.mrb[0].mxu0
        %v923 = vadd.f32 0.0, %v922
        %v924 = vpop.f32.mrb[0].mxu0
        %925 = vmatprep.mubr.f32.mxu0 0.0
        %926 = vmatmul.mubr.f32.gmra.mrb[0].mxu0 %v852
        %v927 = vpop.f32.mrb[0].mxu0
        %v928 = vadd.f32 0.0, %v927
        %v929 = vpop.f32.mrb[0].mxu0
        %930 = vdwg.mxu0
        %v932 = vsel %vm733, %v923, 0
        %v935 = vsel %vm733, %v928, 0
        %937 = vmatprep.subr.mxu0 0.0
        %938 = vmatpush1.msra.mxu0 %v722
        %939 = vmatprep.subr.mxu0 0.0
        %940 = vmatpush1.msra.mxu0 0.0
        %941 = vmatprep.subr.mxu0 0.0
        %942 = vmatpush1.msra.mxu0 0.0
        %943 = vmatprep.subr.mxu0 0.0
        %944 = vmatpush1.msra.mxu0 0.0
        %945 = vmatprep.subr.mxu0 0.0
        %946 = vmatpush1.msra.mxu0 0.0
        %947 = vmatprep.subr.mxu0 0.0
        %948 = vmatpush1.msra.mxu0 0.0
        %949 = vmatprep.subr.mxu0 0.0
        %950 = vmatpush1.msra.mxu0 0.0
        %951 = vmatprep.subr.mxu0 0.0
        %952 = vmatpush1.msra.mxu0 0.0
        %953 = vmatprep.subr.mxu0 0.0
        %954 = vmatpush1.msra.mxu0 0.0
        %955 = vmatprep.subr.mxu0 0.0
        %956 = vmatpush1.msra.mxu0 0.0
        %957 = vmatprep.subr.mxu0 0.0
        %958 = vmatpush1.msra.mxu0 0.0
        %959 = vmatprep.subr.mxu0 0.0
        %960 = vmatpush1.msra.mxu0 0.0
        %961 = vmatprep.subr.mxu0 0.0
        %962 = vmatpush1.msra.mxu0 0.0
        %963 = vmatprep.subr.mxu0 0.0
        %964 = vmatpush1.msra.mxu0 0.0
        %965 = vmatprep.subr.mxu0 0.0
        %966 = vmatpush1.msra.mxu0 0.0
        %967 = vmatprep.subr.mxu0 0.0
        %968 = vmatpush1.msra.mxu0 0.0
        %969 = vmatprep.subr.mxu0 0.0
        %970 = vmatpush1.msra.mxu0 0.0
        %971 = vmatprep.subr.mxu0 0.0
        %972 = vmatpush1.msra.mxu0 0.0
        %973 = vmatprep.subr.mxu0 0.0
        %974 = vmatpush1.msra.mxu0 0.0
        %975 = vmatprep.subr.mxu0 0.0
        %976 = vmatpush1.msra.mxu0 0.0
        %977 = vmatprep.subr.mxu0 0.0
        %978 = vmatpush1.msra.mxu0 0.0
        %979 = vmatprep.subr.mxu0 0.0
        %980 = vmatpush1.msra.mxu0 0.0
        %981 = vmatprep.subr.mxu0 0.0
        %982 = vmatpush1.msra.mxu0 0.0
        %983 = vmatprep.subr.mxu0 0.0
        %984 = vmatpush1.msra.mxu0 0.0
        %985 = vmatprep.subr.mxu0 0.0
        %986 = vmatpush1.msra.mxu0 0.0
        %987 = vmatprep.subr.mxu0 0.0
        %988 = vmatpush1.msra.mxu0 0.0
        %989 = vmatprep.subr.mxu0 0.0
        %990 = vmatpush1.msra.mxu0 0.0
        %991 = vmatprep.subr.mxu0 0.0
        %992 = vmatpush1.msra.mxu0 0.0
        %993 = vmatprep.subr.mxu0 0.0
        %994 = vmatpush1.msra.mxu0 0.0
        %995 = vmatprep.subr.mxu0 0.0
        %996 = vmatpush1.msra.mxu0 0.0
        %997 = vmatprep.subr.mxu0 0.0
        %998 = vmatpush1.msra.mxu0 0.0
        %999 = vmatprep.subr.mxu0 0.0
        %1000 = vmatpush1.msra.mxu0 0.0
        %1001 = vmatprep.mubr.f32.mxu0 0.0
        %1002 = vmatmul.mubr.f32.gmra.mrb[0].mxu0 %v932
        %v1003 = vpop.f32.mrb[0].mxu0
        %v1004 = vadd.f32 0.0, %v1003
        %v1005 = vpop.f32.mrb[0].mxu0
        %1006 = vmatprep.mubr.f32.mxu0 0.0
        %1007 = vmatmul.mubr.f32.gmra.mrb[0].mxu0 %v935
        %v1008 = vpop.f32.mrb[0].mxu0
        %v1009 = vadd.f32 0.0, %v1008
        %v1010 = vpop.f32.mrb[0].mxu0
        %1011 = vdwg.mxu0
        %v1013 = vlaneseq
        %v1014 = vshrl.u32 %v1013, 7
        %v1015 = vsub.s32 0, %v1014
        %v1016 = vrot.slane %v726, %v1015
        %v1018 = vadd.f32 %v1016, %v1004
        %v1019 = vadd.f32 %v1016, %v1009
        %1020 = vrot.lane.b32.xlu0 %v714, 120
        %v1021 = vpop.permute.xlu0 %1020
        %1022 = vrot.lane.b32.xlu0 %v719, 120
        %v1023 = vpop.permute.xlu0 %1022
        %1024 = vrot.lane.b32.xlu0 %v714, 88
        %v1025 = vpop.permute.xlu0 %1024
        %1026 = vrot.lane.b32.xlu0 %v719, 88
        %v1027 = vpop.permute.xlu0 %1026
        %v1028 = vsel %vm733, %v1021, 0
        %v1030 = vsel %vm733, %v1023, 0
        %v1032 = vsel %vm733, %v1025, 0
        %v1034 = vsel %vm733, %v1027, 0
        %1036 = vmatprep.subr.mxu0 0.0
        %1037 = vmatpush1.xpose.msra.mxu0 %v1032
        %1038 = vmatprep.subr.mxu0 0.0
        %1039 = vmatpush1.xpose.msra.mxu0 %v1034
        %1040 = vmatprep.subr.mxu0 0.0
        %1041 = vmatpush1.xpose.msra.mxu0 0.0
        %1042 = vmatprep.subr.mxu0 0.0
        %1043 = vmatpush1.xpose.msra.mxu0 0.0
        %1044 = vmatprep.subr.mxu0 0.0
        %1045 = vmatpush1.xpose.msra.mxu0 0.0
        %1046 = vmatprep.subr.mxu0 0.0
        %1047 = vmatpush1.xpose.msra.mxu0 0.0
        %1048 = vmatprep.subr.mxu0 0.0
        %1049 = vmatpush1.xpose.msra.mxu0 0.0
        %1050 = vmatprep.subr.mxu0 0.0
        %1051 = vmatpush1.xpose.msra.mxu0 0.0
        %1052 = vmatprep.subr.mxu0 0.0
        %1053 = vmatpush1.xpose.msra.mxu0 0.0
        %1054 = vmatprep.subr.mxu0 0.0
        %1055 = vmatpush1.xpose.msra.mxu0 0.0
        %1056 = vmatprep.subr.mxu0 0.0
        %1057 = vmatpush1.xpose.msra.mxu0 0.0
        %1058 = vmatprep.subr.mxu0 0.0
        %1059 = vmatpush1.xpose.msra.mxu0 0.0
        %1060 = vmatprep.subr.mxu0 0.0
        %1061 = vmatpush1.xpose.msra.mxu0 0.0
        %1062 = vmatprep.subr.mxu0 0.0
        %1063 = vmatpush1.xpose.msra.mxu0 0.0
        %1064 = vmatprep.subr.mxu0 0.0
        %1065 = vmatpush1.xpose.msra.mxu0 0.0
        %1066 = vmatprep.subr.mxu0 0.0
        %1067 = vmatpush1.xpose.msra.mxu0 0.0
        %1068 = vmatprep.subr.mxu0 0.0
        %1069 = vmatpush1.xpose.msra.mxu0 0.0
        %1070 = vmatprep.subr.mxu0 0.0
        %1071 = vmatpush1.xpose.msra.mxu0 0.0
        %1072 = vmatprep.subr.mxu0 0.0
        %1073 = vmatpush1.xpose.msra.mxu0 0.0
        %1074 = vmatprep.subr.mxu0 0.0
        %1075 = vmatpush1.xpose.msra.mxu0 0.0
        %1076 = vmatprep.subr.mxu0 0.0
        %1077 = vmatpush1.xpose.msra.mxu0 0.0
        %1078 = vmatprep.subr.mxu0 0.0
        %1079 = vmatpush1.xpose.msra.mxu0 0.0
        %1080 = vmatprep.subr.mxu0 0.0
        %1081 = vmatpush1.xpose.msra.mxu0 0.0
        %1082 = vmatprep.subr.mxu0 0.0
        %1083 = vmatpush1.xpose.msra.mxu0 0.0
        %1084 = vmatprep.subr.mxu0 0.0
        %1085 = vmatpush1.xpose.msra.mxu0 0.0
        %1086 = vmatprep.subr.mxu0 0.0
        %1087 = vmatpush1.xpose.msra.mxu0 0.0
        %1088 = vmatprep.subr.mxu0 0.0
        %1089 = vmatpush1.xpose.msra.mxu0 0.0
        %1090 = vmatprep.subr.mxu0 0.0
        %1091 = vmatpush1.xpose.msra.mxu0 0.0
        %1092 = vmatprep.subr.mxu0 0.0
        %1093 = vmatpush1.xpose.msra.mxu0 0.0
        %1094 = vmatprep.subr.mxu0 0.0
        %1095 = vmatpush1.xpose.msra.mxu0 0.0
        %1096 = vmatprep.subr.mxu0 0.0
        %1097 = vmatpush1.xpose.msra.mxu0 0.0
        %1098 = vmatprep.subr.mxu0 0.0
        %1099 = vmatpush1.xpose.msra.mxu0 0.0
        %1100 = vmatprep.mubr.f32.mxu0 0.0
        %1101 = vmatmul.mubr.f32.gmra.mrb[0].mxu0 %v1028
        %v1102 = vpop.f32.mrb[0].mxu0
        %v1103 = vadd.f32 0.0, %v1102
        %v1104 = vpop.f32.mrb[0].mxu0
        %1105 = vmatprep.mubr.f32.mxu0 0.0
        %1106 = vmatmul.mubr.f32.gmra.mrb[0].mxu0 %v1030
        %v1107 = vpop.f32.mrb[0].mxu0
        %v1108 = vadd.f32 0.0, %v1107
        %v1109 = vpop.f32.mrb[0].mxu0
        %1110 = vdwg.mxu0
        %v1111 = vmul.f32 %v1103, 0.35355338
        %v1112 = vmul.f32 %v1108, 0.35355338
        %v1113 = vsel %vm819, %v1111, -inf
        %1114 = vmax.xlane.f32.xlu0 %v1113
        %v1115 = vpop.xlane.xlu0 %1114
        %v1116 = vsel %vm823, %v1112, -inf
        %1117 = vmax.xlane.f32.xlu0 %v1116
        %v1118 = vpop.xlane.xlu0 %1117
        %v1119 = vsub.f32 %v1111, %v1115
        %v1120 = vsub.f32 %v1112, %v1118
        %v1121 = vmul.f32 %v1119, 1.442695
        %v1122 = vpow.pop %v1121
        %v1123 = vmul.f32 %v1120, 1.442695
        %v1124 = vpow.pop %v1123
        %v1125 = vsel %vm819, %v1122, 0.0
        %1126 = vadd.xlane.f32.xlu0 %v1125
        %v1127 = vpop.xlane.xlu0 %1126
        %v1128 = vsel %vm823, %v1124, 0.0
        %1129 = vadd.xlane.f32.xlu0 %v1128
        %v1130 = vpop.xlane.xlu0 %1129
        %v1131 = vrcp.pop %v1127
        %v1132 = vrcp.pop %v1130
        %v1133 = vmul.f32 %v1122, %v1131
        %v1134 = vmul.f32 %v1124, %v1132
        %1135 = vrot.lane.b32.xlu0 %v714, 56
        %v1136 = vpop.permute.xlu0 %1135
        %1137 = vrot.lane.b32.xlu0 %v719, 56
        %v1138 = vpop.permute.xlu0 %1137
        %v1141 = vsel %vm819, %v1133, 0
        %v1144 = vsel %vm819, %v1134, 0
        %v1146 = vsel %vm522, %v1138, 0
        %1148 = vmatprep.subr.mxu0 0.0
        %1149 = vmatpush1.msra.mxu0 %v1136
        %1150 = vmatprep.subr.mxu0 0.0
        %1151 = vmatpush1.msra.mxu0 %v1146
        %1152 = vmatprep.subr.mxu0 0.0
        %1153 = vmatpush1.msra.mxu0 0.0
        %1154 = vmatprep.subr.mxu0 0.0
        %1155 = vmatpush1.msra.mxu0 0.0
        %1156 = vmatprep.subr.mxu0 0.0
        %1157 = vmatpush1.msra.mxu0 0.0
        %1158 = vmatprep.subr.mxu0 0.0
        %1159 = vmatpush1.msra.mxu0 0.0
        %1160 = vmatprep.subr.mxu0 0.0
        %1161 = vmatpush1.msra.mxu0 0.0
        %1162 = vmatprep.subr.mxu0 0.0
        %1163 = vmatpush1.msra.mxu0 0.0
        %1164 = vmatprep.subr.mxu0 0.0
        %1165 = vmatpush1.msra.mxu0 0.0
        %1166 = vmatprep.subr.mxu0 0.0
        %1167 = vmatpush1.msra.mxu0 0.0
        %1168 = vmatprep.subr.mxu0 0.0
        %1169 = vmatpush1.msra.mxu0 0.0
        %1170 = vmatprep.subr.mxu0 0.0
        %1171 = vmatpush1.msra.mxu0 0.0
        %1172 = vmatprep.subr.mxu0 0.0
        %1173 = vmatpush1.msra.mxu0 0.0
        %1174 = vmatprep.subr.mxu0 0.0
        %1175 = vmatpush1.msra.mxu0 0.0
        %1176 = vmatprep.subr.mxu0 0.0
        %1177 = vmatpush1.msra.mxu0 0.0
        %1178 = vmatprep.subr.mxu0 0.0
        %1179 = vmatpush1.msra.mxu0 0.0
        %1180 = vmatprep.subr.mxu0 0.0
        %1181 = vmatpush1.msra.mxu0 0.0
        %1182 = vmatprep.subr.mxu0 0.0
        %1183 = vmatpush1.msra.mxu0 0.0
        %1184 = vmatprep.subr.mxu0 0.0
        %1185 = vmatpush1.msra.mxu0 0.0
        %1186 = vmatprep.subr.mxu0 0.0
        %1187 = vmatpush1.msra.mxu0 0.0
        %1188 = vmatprep.subr.mxu0 0.0
        %1189 = vmatpush1.msra.mxu0 0.0
        %1190 = vmatprep.subr.mxu0 0.0
        %1191 = vmatpush1.msra.mxu0 0.0
        %1192 = vmatprep.subr.mxu0 0.0
        %1193 = vmatpush1.msra.mxu0 0.0
        %1194 = vmatprep.subr.mxu0 0.0
        %1195 = vmatpush1.msra.mxu0 0.0
        %1196 = vmatprep.subr.mxu0 0.0
        %1197 = vmatpush1.msra.mxu0 0.0
        %1198 = vmatprep.subr.mxu0 0.0
        %1199 = vmatpush1.msra.mxu0 0.0
        %1200 = vmatprep.subr.mxu0 0.0
        %1201 = vmatpush1.msra.mxu0 0.0
        %1202 = vmatprep.subr.mxu0 0.0
        %1203 = vmatpush1.msra.mxu0 0.0
        %1204 = vmatprep.subr.mxu0 0.0
        %1205 = vmatpush1.msra.mxu0 0.0
        %1206 = vmatprep.subr.mxu0 0.0
        %1207 = vmatpush1.msra.mxu0 0.0
        %1208 = vmatprep.subr.mxu0 0.0
        %1209 = vmatpush1.msra.mxu0 0.0
        %1210 = vmatprep.subr.mxu0 0.0
        %1211 = vmatpush1.msra.mxu0 0.0
        %1212 = vmatprep.mubr.f32.mxu0 0.0
        %1213 = vmatmul.mubr.f32.gmra.mrb[0].mxu0 %v1141
        %v1214 = vpop.f32.mrb[0].mxu0
        %v1215 = vadd.f32 0.0, %v1214
        %v1216 = vpop.f32.mrb[0].mxu0
        %1217 = vmatprep.mubr.f32.mxu0 0.0
        %1218 = vmatmul.mubr.f32.gmra.mrb[0].mxu0 %v1144
        %v1219 = vpop.f32.mrb[0].mxu0
        %v1220 = vadd.f32 0.0, %v1219
        %v1221 = vpop.f32.mrb[0].mxu0
        %1222 = vdwg.mxu0
        %v1224 = vsel %vm733, %v1215, 0
        %v1227 = vsel %vm733, %v1220, 0
        %1229 = vmatprep.subr.mxu0 0.0
        %1230 = vmatpush1.msra.mxu0 %v723
        %1231 = vmatprep.subr.mxu0 0.0
        %1232 = vmatpush1.msra.mxu0 0.0
        %1233 = vmatprep.subr.mxu0 0.0
        %1234 = vmatpush1.msra.mxu0 0.0
        %1235 = vmatprep.subr.mxu0 0.0
        %1236 = vmatpush1.msra.mxu0 0.0
        %1237 = vmatprep.subr.mxu0 0.0
        %1238 = vmatpush1.msra.mxu0 0.0
        %1239 = vmatprep.subr.mxu0 0.0
        %1240 = vmatpush1.msra.mxu0 0.0
        %1241 = vmatprep.subr.mxu0 0.0
        %1242 = vmatpush1.msra.mxu0 0.0
        %1243 = vmatprep.subr.mxu0 0.0
        %1244 = vmatpush1.msra.mxu0 0.0
        %1245 = vmatprep.subr.mxu0 0.0
        %1246 = vmatpush1.msra.mxu0 0.0
        %1247 = vmatprep.subr.mxu0 0.0
        %1248 = vmatpush1.msra.mxu0 0.0
        %1249 = vmatprep.subr.mxu0 0.0
        %1250 = vmatpush1.msra.mxu0 0.0
        %1251 = vmatprep.subr.mxu0 0.0
        %1252 = vmatpush1.msra.mxu0 0.0
        %1253 = vmatprep.subr.mxu0 0.0
        %1254 = vmatpush1.msra.mxu0 0.0
        %1255 = vmatprep.subr.mxu0 0.0
        %1256 = vmatpush1.msra.mxu0 0.0
        %1257 = vmatprep.subr.mxu0 0.0
        %1258 = vmatpush1.msra.mxu0 0.0
        %1259 = vmatprep.subr.mxu0 0.0
        %1260 = vmatpush1.msra.mxu0 0.0
        %1261 = vmatprep.subr.mxu0 0.0
        %1262 = vmatpush1.msra.mxu0 0.0
        %1263 = vmatprep.subr.mxu0 0.0
        %1264 = vmatpush1.msra.mxu0 0.0
        %1265 = vmatprep.subr.mxu0 0.0
        %1266 = vmatpush1.msra.mxu0 0.0
        %1267 = vmatprep.subr.mxu0 0.0
        %1268 = vmatpush1.msra.mxu0 0.0
        %1269 = vmatprep.subr.mxu0 0.0
        %1270 = vmatpush1.msra.mxu0 0.0
        %1271 = vmatprep.subr.mxu0 0.0
        %1272 = vmatpush1.msra.mxu0 0.0
        %1273 = vmatprep.subr.mxu0 0.0
        %1274 = vmatpush1.msra.mxu0 0.0
        %1275 = vmatprep.subr.mxu0 0.0
        %1276 = vmatpush1.msra.mxu0 0.0
        %1277 = vmatprep.subr.mxu0 0.0
        %1278 = vmatpush1.msra.mxu0 0.0
        %1279 = vmatprep.subr.mxu0 0.0
        %1280 = vmatpush1.msra.mxu0 0.0
        %1281 = vmatprep.subr.mxu0 0.0
        %1282 = vmatpush1.msra.mxu0 0.0
        %1283 = vmatprep.subr.mxu0 0.0
        %1284 = vmatpush1.msra.mxu0 0.0
        %1285 = vmatprep.subr.mxu0 0.0
        %1286 = vmatpush1.msra.mxu0 0.0
        %1287 = vmatprep.subr.mxu0 0.0
        %1288 = vmatpush1.msra.mxu0 0.0
        %1289 = vmatprep.subr.mxu0 0.0
        %1290 = vmatpush1.msra.mxu0 0.0
        %1291 = vmatprep.subr.mxu0 0.0
        %1292 = vmatpush1.msra.mxu0 0.0
        %1293 = vmatprep.mubr.f32.mxu0 0.0
        %1294 = vmatmul.mubr.f32.gmra.mrb[0].mxu0 %v1224
        %v1295 = vpop.f32.mrb[0].mxu0
        %v1296 = vadd.f32 0.0, %v1295
        %v1297 = vpop.f32.mrb[0].mxu0
        %1298 = vmatprep.mubr.f32.mxu0 0.0
        %1299 = vmatmul.mubr.f32.gmra.mrb[0].mxu0 %v1227
        %v1300 = vpop.f32.mrb[0].mxu0
        %v1301 = vadd.f32 0.0, %v1300
        %v1302 = vpop.f32.mrb[0].mxu0
        %1303 = vdwg.mxu0
        %v1304 = vadd.f32 %v1018, %v1296
        %v1305 = vadd.f32 %v1019, %v1301
        %1306 = vrot.lane.b32.xlu0 %v714, 112
        %v1307 = vpop.permute.xlu0 %1306
        %1308 = vrot.lane.b32.xlu0 %v719, 112
        %v1309 = vpop.permute.xlu0 %1308
        %1310 = vrot.lane.b32.xlu0 %v714, 80
        %v1311 = vpop.permute.xlu0 %1310
        %1312 = vrot.lane.b32.xlu0 %v719, 80
        %v1313 = vpop.permute.xlu0 %1312
        %v1314 = vsel %vm733, %v1307, 0
        %v1316 = vsel %vm733, %v1309, 0
        %v1318 = vsel %vm733, %v1311, 0
        %v1320 = vsel %vm733, %v1313, 0
        %1322 = vmatprep.subr.mxu0 0.0
        %1323 = vmatpush1.xpose.msra.mxu0 %v1318
        %1324 = vmatprep.subr.mxu0 0.0
        %1325 = vmatpush1.xpose.msra.mxu0 %v1320
        %1326 = vmatprep.subr.mxu0 0.0
        %1327 = vmatpush1.xpose.msra.mxu0 0.0
        %1328 = vmatprep.subr.mxu0 0.0
        %1329 = vmatpush1.xpose.msra.mxu0 0.0
        %1330 = vmatprep.subr.mxu0 0.0
        %1331 = vmatpush1.xpose.msra.mxu0 0.0
        %1332 = vmatprep.subr.mxu0 0.0
        %1333 = vmatpush1.xpose.msra.mxu0 0.0
        %1334 = vmatprep.subr.mxu0 0.0
        %1335 = vmatpush1.xpose.msra.mxu0 0.0
        %1336 = vmatprep.subr.mxu0 0.0
        %1337 = vmatpush1.xpose.msra.mxu0 0.0
        %1338 = vmatprep.subr.mxu0 0.0
        %1339 = vmatpush1.xpose.msra.mxu0 0.0
        %1340 = vmatprep.subr.mxu0 0.0
        %1341 = vmatpush1.xpose.msra.mxu0 0.0
        %1342 = vmatprep.subr.mxu0 0.0
        %1343 = vmatpush1.xpose.msra.mxu0 0.0
        %1344 = vmatprep.subr.mxu0 0.0
        %1345 = vmatpush1.xpose.msra.mxu0 0.0
        %1346 = vmatprep.subr.mxu0 0.0
        %1347 = vmatpush1.xpose.msra.mxu0 0.0
        %1348 = vmatprep.subr.mxu0 0.0
        %1349 = vmatpush1.xpose.msra.mxu0 0.0
        %1350 = vmatprep.subr.mxu0 0.0
        %1351 = vmatpush1.xpose.msra.mxu0 0.0
        %1352 = vmatprep.subr.mxu0 0.0
        %1353 = vmatpush1.xpose.msra.mxu0 0.0
        %1354 = vmatprep.subr.mxu0 0.0
        %1355 = vmatpush1.xpose.msra.mxu0 0.0
        %1356 = vmatprep.subr.mxu0 0.0
        %1357 = vmatpush1.xpose.msra.mxu0 0.0
        %1358 = vmatprep.subr.mxu0 0.0
        %1359 = vmatpush1.xpose.msra.mxu0 0.0
        %1360 = vmatprep.subr.mxu0 0.0
        %1361 = vmatpush1.xpose.msra.mxu0 0.0
        %1362 = vmatprep.subr.mxu0 0.0
        %1363 = vmatpush1.xpose.msra.mxu0 0.0
        %1364 = vmatprep.subr.mxu0 0.0
        %1365 = vmatpush1.xpose.msra.mxu0 0.0
        %1366 = vmatprep.subr.mxu0 0.0
        %1367 = vmatpush1.xpose.msra.mxu0 0.0
        %1368 = vmatprep.subr.mxu0 0.0
        %1369 = vmatpush1.xpose.msra.mxu0 0.0
        %1370 = vmatprep.subr.mxu0 0.0
        %1371 = vmatpush1.xpose.msra.mxu0 0.0
        %1372 = vmatprep.subr.mxu0 0.0
        %1373 = vmatpush1.xpose.msra.mxu0 0.0
        %1374 = vmatprep.subr.mxu0 0.0
        %1375 = vmatpush1.xpose.msra.mxu0 0.0
        %1376 = vmatprep.subr.mxu0 0.0
        %1377 = vmatpush1.xpose.msra.mxu0 0.0
        %1378 = vmatprep.subr.mxu0 0.0
        %1379 = vmatpush1.xpose.msra.mxu0 0.0
        %1380 = vmatprep.subr.mxu0 0.0
        %1381 = vmatpush1.xpose.msra.mxu0 0.0
        %1382 = vmatprep.subr.mxu0 0.0
        %1383 = vmatpush1.xpose.msra.mxu0 0.0
        %1384 = vmatprep.subr.mxu0 0.0
        %1385 = vmatpush1.xpose.msra.mxu0 0.0
        %1386 = vmatprep.mubr.f32.mxu0 0.0
        %1387 = vmatmul.mubr.f32.gmra.mrb[0].mxu0 %v1314
        %v1388 = vpop.f32.mrb[0].mxu0
        %v1389 = vadd.f32 0.0, %v1388
        %v1390 = vpop.f32.mrb[0].mxu0
        %1391 = vmatprep.mubr.f32.mxu0 0.0
        %1392 = vmatmul.mubr.f32.gmra.mrb[0].mxu0 %v1316
        %v1393 = vpop.f32.mrb[0].mxu0
        %v1394 = vadd.f32 0.0, %v1393
        %v1395 = vpop.f32.mrb[0].mxu0
        %1396 = vdwg.mxu0
        %v1397 = vmul.f32 %v1389, 0.35355338
        %v1398 = vmul.f32 %v1394, 0.35355338
        %v1399 = vsel %vm819, %v1397, -inf
        %1400 = vmax.xlane.f32.xlu0 %v1399
        %v1401 = vpop.xlane.xlu0 %1400
        %v1402 = vsel %vm823, %v1398, -inf
        %1403 = vmax.xlane.f32.xlu0 %v1402
        %v1404 = vpop.xlane.xlu0 %1403
        %v1405 = vsub.f32 %v1397, %v1401
        %v1406 = vsub.f32 %v1398, %v1404
        %v1407 = vmul.f32 %v1405, 1.442695
        %v1408 = vpow.pop %v1407
        %v1409 = vmul.f32 %v1406, 1.442695
        %v1410 = vpow.pop %v1409
        %v1411 = vsel %vm819, %v1408, 0.0
        %1412 = vadd.xlane.f32.xlu0 %v1411
        %v1413 = vpop.xlane.xlu0 %1412
        %v1414 = vsel %vm823, %v1410, 0.0
        %1415 = vadd.xlane.f32.xlu0 %v1414
        %v1416 = vpop.xlane.xlu0 %1415
        %v1417 = vrcp.pop %v1413
        %v1418 = vrcp.pop %v1416
        %v1419 = vmul.f32 %v1408, %v1417
        %v1420 = vmul.f32 %v1410, %v1418
        %1421 = vrot.lane.b32.xlu0 %v714, 48
        %v1422 = vpop.permute.xlu0 %1421
        %1423 = vrot.lane.b32.xlu0 %v719, 48
        %v1424 = vpop.permute.xlu0 %1423
        %v1427 = vsel %vm819, %v1419, 0
        %v1430 = vsel %vm819, %v1420, 0
        %v1432 = vsel %vm522, %v1424, 0
        %1434 = vmatprep.subr.mxu0 0.0
        %1435 = vmatpush1.msra.mxu0 %v1422
        %1436 = vmatprep.subr.mxu0 0.0
        %1437 = vmatpush1.msra.mxu0 %v1432
        %1438 = vmatprep.subr.mxu0 0.0
        %1439 = vmatpush1.msra.mxu0 0.0
        %1440 = vmatprep.subr.mxu0 0.0
        %1441 = vmatpush1.msra.mxu0 0.0
        %1442 = vmatprep.subr.mxu0 0.0
        %1443 = vmatpush1.msra.mxu0 0.0
        %1444 = vmatprep.subr.mxu0 0.0
        %1445 = vmatpush1.msra.mxu0 0.0
        %1446 = vmatprep.subr.mxu0 0.0
        %1447 = vmatpush1.msra.mxu0 0.0
        %1448 = vmatprep.subr.mxu0 0.0
        %1449 = vmatpush1.msra.mxu0 0.0
        %1450 = vmatprep.subr.mxu0 0.0
        %1451 = vmatpush1.msra.mxu0 0.0
        %1452 = vmatprep.subr.mxu0 0.0
        %1453 = vmatpush1.msra.mxu0 0.0
        %1454 = vmatprep.subr.mxu0 0.0
        %1455 = vmatpush1.msra.mxu0 0.0
        %1456 = vmatprep.subr.mxu0 0.0
        %1457 = vmatpush1.msra.mxu0 0.0
        %1458 = vmatprep.subr.mxu0 0.0
        %1459 = vmatpush1.msra.mxu0 0.0
        %1460 = vmatprep.subr.mxu0 0.0
        %1461 = vmatpush1.msra.mxu0 0.0
        %1462 = vmatprep.subr.mxu0 0.0
        %1463 = vmatpush1.msra.mxu0 0.0
        %1464 = vmatprep.subr.mxu0 0.0
        %1465 = vmatpush1.msra.mxu0 0.0
        %1466 = vmatprep.subr.mxu0 0.0
        %1467 = vmatpush1.msra.mxu0 0.0
        %1468 = vmatprep.subr.mxu0 0.0
        %1469 = vmatpush1.msra.mxu0 0.0
        %1470 = vmatprep.subr.mxu0 0.0
        %1471 = vmatpush1.msra.mxu0 0.0
        %1472 = vmatprep.subr.mxu0 0.0
        %1473 = vmatpush1.msra.mxu0 0.0
        %1474 = vmatprep.subr.mxu0 0.0
        %1475 = vmatpush1.msra.mxu0 0.0
        %1476 = vmatprep.subr.mxu0 0.0
        %1477 = vmatpush1.msra.mxu0 0.0
        %1478 = vmatprep.subr.mxu0 0.0
        %1479 = vmatpush1.msra.mxu0 0.0
        %1480 = vmatprep.subr.mxu0 0.0
        %1481 = vmatpush1.msra.mxu0 0.0
        %1482 = vmatprep.subr.mxu0 0.0
        %1483 = vmatpush1.msra.mxu0 0.0
        %1484 = vmatprep.subr.mxu0 0.0
        %1485 = vmatpush1.msra.mxu0 0.0
        %1486 = vmatprep.subr.mxu0 0.0
        %1487 = vmatpush1.msra.mxu0 0.0
        %1488 = vmatprep.subr.mxu0 0.0
        %1489 = vmatpush1.msra.mxu0 0.0
        %1490 = vmatprep.subr.mxu0 0.0
        %1491 = vmatpush1.msra.mxu0 0.0
        %1492 = vmatprep.subr.mxu0 0.0
        %1493 = vmatpush1.msra.mxu0 0.0
        %1494 = vmatprep.subr.mxu0 0.0
        %1495 = vmatpush1.msra.mxu0 0.0
        %1496 = vmatprep.subr.mxu0 0.0
        %1497 = vmatpush1.msra.mxu0 0.0
        %1498 = vmatprep.mubr.f32.mxu0 0.0
        %1499 = vmatmul.mubr.f32.gmra.mrb[0].mxu0 %v1427
        %v1500 = vpop.f32.mrb[0].mxu0
        %v1501 = vadd.f32 0.0, %v1500
        %v1502 = vpop.f32.mrb[0].mxu0
        %1503 = vmatprep.mubr.f32.mxu0 0.0
        %1504 = vmatmul.mubr.f32.gmra.mrb[0].mxu0 %v1430
        %v1505 = vpop.f32.mrb[0].mxu0
        %v1506 = vadd.f32 0.0, %v1505
        %v1507 = vpop.f32.mrb[0].mxu0
        %1508 = vdwg.mxu0
        %v1510 = vsel %vm733, %v1501, 0
        %v1513 = vsel %vm733, %v1506, 0
        %1515 = vmatprep.subr.mxu0 0.0
        %1516 = vmatpush1.msra.mxu0 %v724
        %1517 = vmatprep.subr.mxu0 0.0
        %1518 = vmatpush1.msra.mxu0 0.0
        %1519 = vmatprep.subr.mxu0 0.0
        %1520 = vmatpush1.msra.mxu0 0.0
        %1521 = vmatprep.subr.mxu0 0.0
        %1522 = vmatpush1.msra.mxu0 0.0
        %1523 = vmatprep.subr.mxu0 0.0
        %1524 = vmatpush1.msra.mxu0 0.0
        %1525 = vmatprep.subr.mxu0 0.0
        %1526 = vmatpush1.msra.mxu0 0.0
        %1527 = vmatprep.subr.mxu0 0.0
        %1528 = vmatpush1.msra.mxu0 0.0
        %1529 = vmatprep.subr.mxu0 0.0
        %1530 = vmatpush1.msra.mxu0 0.0
        %1531 = vmatprep.subr.mxu0 0.0
        %1532 = vmatpush1.msra.mxu0 0.0
        %1533 = vmatprep.subr.mxu0 0.0
        %1534 = vmatpush1.msra.mxu0 0.0
        %1535 = vmatprep.subr.mxu0 0.0
        %1536 = vmatpush1.msra.mxu0 0.0
        %1537 = vmatprep.subr.mxu0 0.0
        %1538 = vmatpush1.msra.mxu0 0.0
        %1539 = vmatprep.subr.mxu0 0.0
        %1540 = vmatpush1.msra.mxu0 0.0
        %1541 = vmatprep.subr.mxu0 0.0
        %1542 = vmatpush1.msra.mxu0 0.0
        %1543 = vmatprep.subr.mxu0 0.0
        %1544 = vmatpush1.msra.mxu0 0.0
        %1545 = vmatprep.subr.mxu0 0.0
        %1546 = vmatpush1.msra.mxu0 0.0
        %1547 = vmatprep.subr.mxu0 0.0
        %1548 = vmatpush1.msra.mxu0 0.0
        %1549 = vmatprep.subr.mxu0 0.0
        %1550 = vmatpush1.msra.mxu0 0.0
        %1551 = vmatprep.subr.mxu0 0.0
        %1552 = vmatpush1.msra.mxu0 0.0
        %1553 = vmatprep.subr.mxu0 0.0
        %1554 = vmatpush1.msra.mxu0 0.0
        %1555 = vmatprep.subr.mxu0 0.0
        %1556 = vmatpush1.msra.mxu0 0.0
        %1557 = vmatprep.subr.mxu0 0.0
        %1558 = vmatpush1.msra.mxu0 0.0
        %1559 = vmatprep.subr.mxu0 0.0
        %1560 = vmatpush1.msra.mxu0 0.0
        %1561 = vmatprep.subr.mxu0 0.0
        %1562 = vmatpush1.msra.mxu0 0.0
        %1563 = vmatprep.subr.mxu0 0.0
        %1564 = vmatpush1.msra.mxu0 0.0
        %1565 = vmatprep.subr.mxu0 0.0
        %1566 = vmatpush1.msra.mxu0 0.0
        %1567 = vmatprep.subr.mxu0 0.0
        %1568 = vmatpush1.msra.mxu0 0.0
        %1569 = vmatprep.subr.mxu0 0.0
        %1570 = vmatpush1.msra.mxu0 0.0
        %1571 = vmatprep.subr.mxu0 0.0
        %1572 = vmatpush1.msra.mxu0 0.0
        %1573 = vmatprep.subr.mxu0 0.0
        %1574 = vmatpush1.msra.mxu0 0.0
        %1575 = vmatprep.subr.mxu0 0.0
        %1576 = vmatpush1.msra.mxu0 0.0
        %1577 = vmatprep.subr.mxu0 0.0
        %1578 = vmatpush1.msra.mxu0 0.0
        %1579 = vmatprep.mubr.f32.mxu0 0.0
        %1580 = vmatmul.mubr.f32.gmra.mrb[0].mxu0 %v1510
        %v1581 = vpop.f32.mrb[0].mxu0
        %v1582 = vadd.f32 0.0, %v1581
        %v1583 = vpop.f32.mrb[0].mxu0
        %1584 = vmatprep.mubr.f32.mxu0 0.0
        %1585 = vmatmul.mubr.f32.gmra.mrb[0].mxu0 %v1513
        %v1586 = vpop.f32.mrb[0].mxu0
        %v1587 = vadd.f32 0.0, %v1586
        %v1588 = vpop.f32.mrb[0].mxu0
        %1589 = vdwg.mxu0
        %v1590 = vadd.f32 %v1304, %v1582
        %v1591 = vadd.f32 %v1305, %v1587
        %1592 = vrot.lane.b32.xlu0 %v714, 104
        %v1593 = vpop.permute.xlu0 %1592
        %1594 = vrot.lane.b32.xlu0 %v719, 104
        %v1595 = vpop.permute.xlu0 %1594
        %1596 = vrot.lane.b32.xlu0 %v714, 72
        %v1597 = vpop.permute.xlu0 %1596
        %1598 = vrot.lane.b32.xlu0 %v719, 72
        %v1599 = vpop.permute.xlu0 %1598
        %v1600 = vsel %vm733, %v1593, 0
        %v1602 = vsel %vm733, %v1595, 0
        %v1604 = vsel %vm733, %v1597, 0
        %v1606 = vsel %vm733, %v1599, 0
        %1608 = vmatprep.subr.mxu0 0.0
        %1609 = vmatpush1.xpose.msra.mxu0 %v1604
        %1610 = vmatprep.subr.mxu0 0.0
        %1611 = vmatpush1.xpose.msra.mxu0 %v1606
        %1612 = vmatprep.subr.mxu0 0.0
        %1613 = vmatpush1.xpose.msra.mxu0 0.0
        %1614 = vmatprep.subr.mxu0 0.0
        %1615 = vmatpush1.xpose.msra.mxu0 0.0
        %1616 = vmatprep.subr.mxu0 0.0
        %1617 = vmatpush1.xpose.msra.mxu0 0.0
        %1618 = vmatprep.subr.mxu0 0.0
        %1619 = vmatpush1.xpose.msra.mxu0 0.0
        %1620 = vmatprep.subr.mxu0 0.0
        %1621 = vmatpush1.xpose.msra.mxu0 0.0
        %1622 = vmatprep.subr.mxu0 0.0
        %1623 = vmatpush1.xpose.msra.mxu0 0.0
        %1624 = vmatprep.subr.mxu0 0.0
        %1625 = vmatpush1.xpose.msra.mxu0 0.0
        %1626 = vmatprep.subr.mxu0 0.0
        %1627 = vmatpush1.xpose.msra.mxu0 0.0
        %1628 = vmatprep.subr.mxu0 0.0
        %1629 = vmatpush1.xpose.msra.mxu0 0.0
        %1630 = vmatprep.subr.mxu0 0.0
        %1631 = vmatpush1.xpose.msra.mxu0 0.0
        %1632 = vmatprep.subr.mxu0 0.0
        %1633 = vmatpush1.xpose.msra.mxu0 0.0
        %1634 = vmatprep.subr.mxu0 0.0
        %1635 = vmatpush1.xpose.msra.mxu0 0.0
        %1636 = vmatprep.subr.mxu0 0.0
        %1637 = vmatpush1.xpose.msra.mxu0 0.0
        %1638 = vmatprep.subr.mxu0 0.0
        %1639 = vmatpush1.xpose.msra.mxu0 0.0
        %1640 = vmatprep.subr.mxu0 0.0
        %1641 = vmatpush1.xpose.msra.mxu0 0.0
        %1642 = vmatprep.subr.mxu0 0.0
        %1643 = vmatpush1.xpose.msra.mxu0 0.0
        %1644 = vmatprep.subr.mxu0 0.0
        %1645 = vmatpush1.xpose.msra.mxu0 0.0
        %1646 = vmatprep.subr.mxu0 0.0
        %1647 = vmatpush1.xpose.msra.mxu0 0.0
        %1648 = vmatprep.subr.mxu0 0.0
        %1649 = vmatpush1.xpose.msra.mxu0 0.0
        %1650 = vmatprep.subr.mxu0 0.0
        %1651 = vmatpush1.xpose.msra.mxu0 0.0
        %1652 = vmatprep.subr.mxu0 0.0
        %1653 = vmatpush1.xpose.msra.mxu0 0.0
        %1654 = vmatprep.subr.mxu0 0.0
        %1655 = vmatpush1.xpose.msra.mxu0 0.0
        %1656 = vmatprep.subr.mxu0 0.0
        %1657 = vmatpush1.xpose.msra.mxu0 0.0
        %1658 = vmatprep.subr.mxu0 0.0
        %1659 = vmatpush1.xpose.msra.mxu0 0.0
        %1660 = vmatprep.subr.mxu0 0.0
        %1661 = vmatpush1.xpose.msra.mxu0 0.0
        %1662 = vmatprep.subr.mxu0 0.0
        %1663 = vmatpush1.xpose.msra.mxu0 0.0
        %1664 = vmatprep.subr.mxu0 0.0
        %1665 = vmatpush1.xpose.msra.mxu0 0.0
        %1666 = vmatprep.subr.mxu0 0.0
        %1667 = vmatpush1.xpose.msra.mxu0 0.0
        %1668 = vmatprep.subr.mxu0 0.0
        %1669 = vmatpush1.xpose.msra.mxu0 0.0
        %1670 = vmatprep.subr.mxu0 0.0
        %1671 = vmatpush1.xpose.msra.mxu0 0.0
        %1672 = vmatprep.mubr.f32.mxu0 0.0
        %1673 = vmatmul.mubr.f32.gmra.mrb[0].mxu0 %v1600
        %v1674 = vpop.f32.mrb[0].mxu0
        %v1675 = vadd.f32 0.0, %v1674
        %v1676 = vpop.f32.mrb[0].mxu0
        %1677 = vmatprep.mubr.f32.mxu0 0.0
        %1678 = vmatmul.mubr.f32.gmra.mrb[0].mxu0 %v1602
        %v1679 = vpop.f32.mrb[0].mxu0
        %v1680 = vadd.f32 0.0, %v1679
        %v1681 = vpop.f32.mrb[0].mxu0
        %1682 = vdwg.mxu0
        %v1683 = vmul.f32 %v1675, 0.35355338
        %v1684 = vmul.f32 %v1680, 0.35355338
        %v1685 = vsel %vm819, %v1683, -inf
        %1686 = vmax.xlane.f32.xlu0 %v1685
        %v1687 = vpop.xlane.xlu0 %1686
        %v1688 = vsel %vm823, %v1684, -inf
        %1689 = vmax.xlane.f32.xlu0 %v1688
        %v1690 = vpop.xlane.xlu0 %1689
        %v1691 = vsub.f32 %v1683, %v1687
        %v1692 = vsub.f32 %v1684, %v1690
        %v1693 = vmul.f32 %v1691, 1.442695
        %v1694 = vpow.pop %v1693
        %v1695 = vmul.f32 %v1692, 1.442695
        %v1696 = vpow.pop %v1695
        %v1697 = vsel %vm819, %v1694, 0.0
        %1698 = vadd.xlane.f32.xlu0 %v1697
        %v1699 = vpop.xlane.xlu0 %1698
        %v1700 = vsel %vm823, %v1696, 0.0
        %1701 = vadd.xlane.f32.xlu0 %v1700
        %v1702 = vpop.xlane.xlu0 %1701
        %v1703 = vrcp.pop %v1699
        %v1704 = vrcp.pop %v1702
        %v1705 = vmul.f32 %v1694, %v1703
        %v1706 = vmul.f32 %v1696, %v1704
        %1707 = vrot.lane.b32.xlu0 %v714, 40
        %v1708 = vpop.permute.xlu0 %1707
        %1709 = vrot.lane.b32.xlu0 %v719, 40
        %v1710 = vpop.permute.xlu0 %1709
        %v1713 = vsel %vm819, %v1705, 0
        %v1716 = vsel %vm819, %v1706, 0
        %v1718 = vsel %vm522, %v1710, 0
        %1720 = vmatprep.subr.mxu0 0.0
        %1721 = vmatpush1.msra.mxu0 %v1708
        %1722 = vmatprep.subr.mxu0 0.0
        %1723 = vmatpush1.msra.mxu0 %v1718
        %1724 = vmatprep.subr.mxu0 0.0
        %1725 = vmatpush1.msra.mxu0 0.0
        %1726 = vmatprep.subr.mxu0 0.0
        %1727 = vmatpush1.msra.mxu0 0.0
        %1728 = vmatprep.subr.mxu0 0.0
        %1729 = vmatpush1.msra.mxu0 0.0
        %1730 = vmatprep.subr.mxu0 0.0
        %1731 = vmatpush1.msra.mxu0 0.0
        %1732 = vmatprep.subr.mxu0 0.0
        %1733 = vmatpush1.msra.mxu0 0.0
        %1734 = vmatprep.subr.mxu0 0.0
        %1735 = vmatpush1.msra.mxu0 0.0
        %1736 = vmatprep.subr.mxu0 0.0
        %1737 = vmatpush1.msra.mxu0 0.0
        %1738 = vmatprep.subr.mxu0 0.0
        %1739 = vmatpush1.msra.mxu0 0.0
        %1740 = vmatprep.subr.mxu0 0.0
        %1741 = vmatpush1.msra.mxu0 0.0
        %1742 = vmatprep.subr.mxu0 0.0
        %1743 = vmatpush1.msra.mxu0 0.0
        %1744 = vmatprep.subr.mxu0 0.0
        %1745 = vmatpush1.msra.mxu0 0.0
        %1746 = vmatprep.subr.mxu0 0.0
        %1747 = vmatpush1.msra.mxu0 0.0
        %1748 = vmatprep.subr.mxu0 0.0
        %1749 = vmatpush1.msra.mxu0 0.0
        %1750 = vmatprep.subr.mxu0 0.0
        %1751 = vmatpush1.msra.mxu0 0.0
        %1752 = vmatprep.subr.mxu0 0.0
        %1753 = vmatpush1.msra.mxu0 0.0
        %1754 = vmatprep.subr.mxu0 0.0
        %1755 = vmatpush1.msra.mxu0 0.0
        %1756 = vmatprep.subr.mxu0 0.0
        %1757 = vmatpush1.msra.mxu0 0.0
        %1758 = vmatprep.subr.mxu0 0.0
        %1759 = vmatpush1.msra.mxu0 0.0
        %1760 = vmatprep.subr.mxu0 0.0
        %1761 = vmatpush1.msra.mxu0 0.0
        %1762 = vmatprep.subr.mxu0 0.0
        %1763 = vmatpush1.msra.mxu0 0.0
        %1764 = vmatprep.subr.mxu0 0.0
        %1765 = vmatpush1.msra.mxu0 0.0
        %1766 = vmatprep.subr.mxu0 0.0
        %1767 = vmatpush1.msra.mxu0 0.0
        %1768 = vmatprep.subr.mxu0 0.0
        %1769 = vmatpush1.msra.mxu0 0.0
        %1770 = vmatprep.subr.mxu0 0.0
        %1771 = vmatpush1.msra.mxu0 0.0
        %1772 = vmatprep.subr.mxu0 0.0
        %1773 = vmatpush1.msra.mxu0 0.0
        %1774 = vmatprep.subr.mxu0 0.0
        %1775 = vmatpush1.msra.mxu0 0.0
        %1776 = vmatprep.subr.mxu0 0.0
        %1777 = vmatpush1.msra.mxu0 0.0
        %1778 = vmatprep.subr.mxu0 0.0
        %1779 = vmatpush1.msra.mxu0 0.0
        %1780 = vmatprep.subr.mxu0 0.0
        %1781 = vmatpush1.msra.mxu0 0.0
        %1782 = vmatprep.subr.mxu0 0.0
        %1783 = vmatpush1.msra.mxu0 0.0
        %1784 = vmatprep.mubr.f32.mxu0 0.0
        %1785 = vmatmul.mubr.f32.gmra.mrb[0].mxu0 %v1713
        %v1786 = vpop.f32.mrb[0].mxu0
        %v1787 = vadd.f32 0.0, %v1786
        %v1788 = vpop.f32.mrb[0].mxu0
        %1789 = vmatprep.mubr.f32.mxu0 0.0
        %1790 = vmatmul.mubr.f32.gmra.mrb[0].mxu0 %v1716
        %v1791 = vpop.f32.mrb[0].mxu0
        %v1792 = vadd.f32 0.0, %v1791
        %v1793 = vpop.f32.mrb[0].mxu0
        %1794 = vdwg.mxu0
        %v1796 = vsel %vm733, %v1787, 0
        %v1799 = vsel %vm733, %v1792, 0
        %1801 = vmatprep.subr.mxu0 0.0
        %1802 = vmatpush1.msra.mxu0 %v725
        %1803 = vmatprep.subr.mxu0 0.0
        %1804 = vmatpush1.msra.mxu0 0.0
        %1805 = vmatprep.subr.mxu0 0.0
        %1806 = vmatpush1.msra.mxu0 0.0
        %1807 = vmatprep.subr.mxu0 0.0
        %1808 = vmatpush1.msra.mxu0 0.0
        %1809 = vmatprep.subr.mxu0 0.0
        %1810 = vmatpush1.msra.mxu0 0.0
        %1811 = vmatprep.subr.mxu0 0.0
        %1812 = vmatpush1.msra.mxu0 0.0
        %1813 = vmatprep.subr.mxu0 0.0
        %1814 = vmatpush1.msra.mxu0 0.0
        %1815 = vmatprep.subr.mxu0 0.0
        %1816 = vmatpush1.msra.mxu0 0.0
        %1817 = vmatprep.subr.mxu0 0.0
        %1818 = vmatpush1.msra.mxu0 0.0
        %1819 = vmatprep.subr.mxu0 0.0
        %1820 = vmatpush1.msra.mxu0 0.0
        %1821 = vmatprep.subr.mxu0 0.0
        %1822 = vmatpush1.msra.mxu0 0.0
        %1823 = vmatprep.subr.mxu0 0.0
        %1824 = vmatpush1.msra.mxu0 0.0
        %1825 = vmatprep.subr.mxu0 0.0
        %1826 = vmatpush1.msra.mxu0 0.0
        %1827 = vmatprep.subr.mxu0 0.0
        %1828 = vmatpush1.msra.mxu0 0.0
        %1829 = vmatprep.subr.mxu0 0.0
        %1830 = vmatpush1.msra.mxu0 0.0
        %1831 = vmatprep.subr.mxu0 0.0
        %1832 = vmatpush1.msra.mxu0 0.0
        %1833 = vmatprep.subr.mxu0 0.0
        %1834 = vmatpush1.msra.mxu0 0.0
        %1835 = vmatprep.subr.mxu0 0.0
        %1836 = vmatpush1.msra.mxu0 0.0
        %1837 = vmatprep.subr.mxu0 0.0
        %1838 = vmatpush1.msra.mxu0 0.0
        %1839 = vmatprep.subr.mxu0 0.0
        %1840 = vmatpush1.msra.mxu0 0.0
        %1841 = vmatprep.subr.mxu0 0.0
        %1842 = vmatpush1.msra.mxu0 0.0
        %1843 = vmatprep.subr.mxu0 0.0
        %1844 = vmatpush1.msra.mxu0 0.0
        %1845 = vmatprep.subr.mxu0 0.0
        %1846 = vmatpush1.msra.mxu0 0.0
        %1847 = vmatprep.subr.mxu0 0.0
        %1848 = vmatpush1.msra.mxu0 0.0
        %1849 = vmatprep.subr.mxu0 0.0
        %1850 = vmatpush1.msra.mxu0 0.0
        %1851 = vmatprep.subr.mxu0 0.0
        %1852 = vmatpush1.msra.mxu0 0.0
        %1853 = vmatprep.subr.mxu0 0.0
        %1854 = vmatpush1.msra.mxu0 0.0
        %1855 = vmatprep.subr.mxu0 0.0
        %1856 = vmatpush1.msra.mxu0 0.0
        %1857 = vmatprep.subr.mxu0 0.0
        %1858 = vmatpush1.msra.mxu0 0.0
        %1859 = vmatprep.subr.mxu0 0.0
        %1860 = vmatpush1.msra.mxu0 0.0
        %1861 = vmatprep.subr.mxu0 0.0
        %1862 = vmatpush1.msra.mxu0 0.0
        %1863 = vmatprep.subr.mxu0 0.0
        %1864 = vmatpush1.msra.mxu0 0.0
        %1865 = vmatprep.mubr.f32.mxu0 0.0
        %1866 = vmatmul.mubr.f32.gmra.mrb[0].mxu0 %v1796
        %v1867 = vpop.f32.mrb[0].mxu0
        %v1868 = vadd.f32 0.0, %v1867
        %v1869 = vpop.f32.mrb[0].mxu0
        %1870 = vmatprep.mubr.f32.mxu0 0.0
        %1871 = vmatmul.mubr.f32.gmra.mrb[0].mxu0 %v1799
        %v1872 = vpop.f32.mrb[0].mxu0
        %v1873 = vadd.f32 0.0, %v1872
        %v1874 = vpop.f32.mrb[0].mxu0
        %1875 = vdwg.mxu0
        %v1876 = vadd.f32 %v1590, %v1868
        %v1877 = vadd.f32 %v1591, %v1873
        %v1878 = vadd.f32 %v593, %v1876
        %v1879 = vadd.f32 %v598, %v1877
        %v1880 = vsel %vm601, %v1878, 0.0
        %1881 = vadd.xlane.f32.xlu0 %v1880
        %v1882 = vpop.xlane.xlu0 %1881
        %v1883 = vsel %vm605, %v1879, 0.0
        %1884 = vadd.xlane.f32.xlu0 %v1883
        %v1885 = vpop.xlane.xlu0 %1884
        %v1886 = vmul.f32 %v1882, %v609
        %v1887 = vmul.f32 %v1885, %v609
        %v1888 = vsub.f32 %v1878, %v1886
        %v1889 = vsub.f32 %v1879, %v1887
        %v1890 = vmul.f32 %v1888, %v1888
        %v1891 = vmul.f32 %v1889, %v1889
        %v1892 = vsel %vm601, %v1890, 0.0
        %1893 = vadd.xlane.f32.xlu0 %v1892
        %v1894 = vpop.xlane.xlu0 %1893
        %v1895 = vsel %vm605, %v1891, 0.0
        %1896 = vadd.xlane.f32.xlu0 %v1895
        %v1897 = vpop.xlane.xlu0 %1896
        %v1898 = vmul.f32 %v1894, %v609
        %v1899 = vmul.f32 %v1897, %v609
        %v1900 = vadd.f32 %v1898, 1e-05
        %v1901 = vadd.f32 %v1899, 1e-05
        %v1902 = vrsqrt.pop %v1900
        %v1903 = vrsqrt.pop %v1901
        %v1904 = vmul.f32 %v1888, %v1902
        %v1905 = vmul.f32 %v1889, %v1903
        %v1906 = vld [vmem:[%s7] sm:$0xff]
        %v1907 = vld [vmem:[%s7 + $0x8] sm:$0xff]
        %v1908 = vld [vmem:[%s7 + $0x10] sm:$0xff]
        %v1909 = vld [vmem:[%s7 + $0x18] sm:$0xff]
        %v1910 = vld [vmem:[%s8] sm:$0x1]
        %v1912 = vlaneseq
        %v1913 = vshrl.u32 %v1912, 7
        %v1914 = vsub.s32 0, %v1913
        %v1915 = vrot.slane %v1910, %v1914
        %v1918 = vsel %vm601, %v1904, 0
        %v1921 = vsel %vm601, %v1905, 0
        %1923 = vmatprep.subr.mxu0 0.0
        %1924 = vmatpush1.msra.mxu0 %v1906
        %1925 = vmatprep.subr.mxu0 0.0
        %1926 = vmatpush1.msra.mxu0 %v1907
        %1927 = vmatprep.subr.mxu0 0.0
        %1928 = vmatpush1.msra.mxu0 %v1908
        %1929 = vmatprep.subr.mxu0 0.0
        %1930 = vmatpush1.msra.mxu0 %v1909
        %1931 = vmatprep.subr.mxu0 0.0
        %1932 = vmatpush1.msra.mxu0 0.0
        %1933 = vmatprep.subr.mxu0 0.0
        %1934 = vmatpush1.msra.mxu0 0.0
        %1935 = vmatprep.subr.mxu0 0.0
        %1936 = vmatpush1.msra.mxu0 0.0
        %1937 = vmatprep.subr.mxu0 0.0
        %1938 = vmatpush1.msra.mxu0 0.0
        %1939 = vmatprep.subr.mxu0 0.0
        %1940 = vmatpush1.msra.mxu0 0.0
        %1941 = vmatprep.subr.mxu0 0.0
        %1942 = vmatpush1.msra.mxu0 0.0
        %1943 = vmatprep.subr.mxu0 0.0
        %1944 = vmatpush1.msra.mxu0 0.0
        %1945 = vmatprep.subr.mxu0 0.0
        %1946 = vmatpush1.msra.mxu0 0.0
        %1947 = vmatprep.subr.mxu0 0.0
        %1948 = vmatpush1.msra.mxu0 0.0
        %1949 = vmatprep.subr.mxu0 0.0
        %1950 = vmatpush1.msra.mxu0 0.0
        %1951 = vmatprep.subr.mxu0 0.0
        %1952 = vmatpush1.msra.mxu0 0.0
        %1953 = vmatprep.subr.mxu0 0.0
        %1954 = vmatpush1.msra.mxu0 0.0
        %1955 = vmatprep.subr.mxu0 0.0
        %1956 = vmatpush1.msra.mxu0 0.0
        %1957 = vmatprep.subr.mxu0 0.0
        %1958 = vmatpush1.msra.mxu0 0.0
        %1959 = vmatprep.subr.mxu0 0.0
        %1960 = vmatpush1.msra.mxu0 0.0
        %1961 = vmatprep.subr.mxu0 0.0
        %1962 = vmatpush1.msra.mxu0 0.0
        %1963 = vmatprep.subr.mxu0 0.0
        %1964 = vmatpush1.msra.mxu0 0.0
        %1965 = vmatprep.subr.mxu0 0.0
        %1966 = vmatpush1.msra.mxu0 0.0
        %1967 = vmatprep.subr.mxu0 0.0
        %1968 = vmatpush1.msra.mxu0 0.0
        %1969 = vmatprep.subr.mxu0 0.0
        %1970 = vmatpush1.msra.mxu0 0.0
        %1971 = vmatprep.subr.mxu0 0.0
        %1972 = vmatpush1.msra.mxu0 0.0
        %1973 = vmatprep.subr.mxu0 0.0
        %1974 = vmatpush1.msra.mxu0 0.0
        %1975 = vmatprep.subr.mxu0 0.0
        %1976 = vmatpush1.msra.mxu0 0.0
        %1977 = vmatprep.subr.mxu0 0.0
        %1978 = vmatpush1.msra.mxu0 0.0
        %1979 = vmatprep.subr.mxu0 0.0
        %1980 = vmatpush1.msra.mxu0 0.0
        %1981 = vmatprep.subr.mxu0 0.0
        %1982 = vmatpush1.msra.mxu0 0.0
        %1983 = vmatprep.subr.mxu0 0.0
        %1984 = vmatpush1.msra.mxu0 0.0
        %1985 = vmatprep.subr.mxu0 0.0
        %1986 = vmatpush1.msra.mxu0 0.0
        %1987 = vmatprep.mubr.f32.mxu0 0.0
        %1988 = vmatmul.mubr.f32.gmra.mrb[0].mxu0 %v1918
        %v1989 = vpop.f32.mrb[0].mxu0
        %v1990 = vadd.f32 %v1915, %v1989
        %v1991 = vpop.f32.mrb[0].mxu0
        %1992 = vmatprep.mubr.f32.mxu0 0.0
        %1993 = vmatmul.mubr.f32.gmra.mrb[0].mxu0 %v1921
        %v1994 = vpop.f32.mrb[0].mxu0
        %v1995 = vadd.f32 %v1915, %v1994
        %v1996 = vpop.f32.mrb[0].mxu0
        %1997 = vdwg.mxu0
        %v1998 = vmax.f32 %v1990, 0.0
        %v1999 = vmax.f32 %v1995, 0.0
        %v2000 = vld [vmem:[%s9] sm:$0xff]
        %v2001 = vld [vmem:[%s9 + $0x8] sm:$0xff]
        %v2002 = vld [vmem:[%s9 + $0x10] sm:$0xff]
        %v2003 = vld [vmem:[%s9 + $0x18] sm:$0xff]
        %v2004 = vld [vmem:[%s9 + $0x20] sm:$0xff]
        %v2005 = vld [vmem:[%s9 + $0x28] sm:$0xff]
        %v2006 = vld [vmem:[%s9 + $0x30] sm:$0xff]
        %v2007 = vld [vmem:[%s9 + $0x38] sm:$0xff]
        %v2008 = vld [vmem:[%s10] sm:$0x1]
        %v2010 = vlaneseq
        %v2011 = vshrl.u32 %v2010, 7
        %v2012 = vsub.s32 0, %v2011
        %v2013 = vrot.slane %v2008, %v2012
        %vm2015 = vcmask 523264
        %v2017 = vsel %vm2015, %v1998, 0
        %v2020 = vsel %vm2015, %v1999, 0
        %2022 = vmatprep.subr.mxu0 0.0
        %2023 = vmatpush1.msra.mxu0 %v2000
        %2024 = vmatprep.subr.mxu0 0.0
        %2025 = vmatpush1.msra.mxu0 %v2001
        %2026 = vmatprep.subr.mxu0 0.0
        %2027 = vmatpush1.msra.mxu0 %v2002
        %2028 = vmatprep.subr.mxu0 0.0
        %2029 = vmatpush1.msra.mxu0 %v2003
        %2030 = vmatprep.subr.mxu0 0.0
        %2031 = vmatpush1.msra.mxu0 %v2004
        %2032 = vmatprep.subr.mxu0 0.0
        %2033 = vmatpush1.msra.mxu0 %v2005
        %2034 = vmatprep.subr.mxu0 0.0
        %2035 = vmatpush1.msra.mxu0 %v2006
        %2036 = vmatprep.subr.mxu0 0.0
        %2037 = vmatpush1.msra.mxu0 %v2007
        %2038 = vmatprep.subr.mxu0 0.0
        %2039 = vmatpush1.msra.mxu0 0.0
        %2040 = vmatprep.subr.mxu0 0.0
        %2041 = vmatpush1.msra.mxu0 0.0
        %2042 = vmatprep.subr.mxu0 0.0
        %2043 = vmatpush1.msra.mxu0 0.0
        %2044 = vmatprep.subr.mxu0 0.0
        %2045 = vmatpush1.msra.mxu0 0.0
        %2046 = vmatprep.subr.mxu0 0.0
        %2047 = vmatpush1.msra.mxu0 0.0
        %2048 = vmatprep.subr.mxu0 0.0
        %2049 = vmatpush1.msra.mxu0 0.0
        %2050 = vmatprep.subr.mxu0 0.0
        %2051 = vmatpush1.msra.mxu0 0.0
        %2052 = vmatprep.subr.mxu0 0.0
        %2053 = vmatpush1.msra.mxu0 0.0
        %2054 = vmatprep.subr.mxu0 0.0
        %2055 = vmatpush1.msra.mxu0 0.0
        %2056 = vmatprep.subr.mxu0 0.0
        %2057 = vmatpush1.msra.mxu0 0.0
        %2058 = vmatprep.subr.mxu0 0.0
        %2059 = vmatpush1.msra.mxu0 0.0
        %2060 = vmatprep.subr.mxu0 0.0
        %2061 = vmatpush1.msra.mxu0 0.0
        %2062 = vmatprep.subr.mxu0 0.0
        %2063 = vmatpush1.msra.mxu0 0.0
        %2064 = vmatprep.subr.mxu0 0.0
        %2065 = vmatpush1.msra.mxu0 0.0
        %2066 = vmatprep.subr.mxu0 0.0
        %2067 = vmatpush1.msra.mxu0 0.0
        %2068 = vmatprep.subr.mxu0 0.0
        %2069 = vmatpush1.msra.mxu0 0.0
        %2070 = vmatprep.subr.mxu0 0.0
        %2071 = vmatpush1.msra.mxu0 0.0
        %2072 = vmatprep.subr.mxu0 0.0
        %2073 = vmatpush1.msra.mxu0 0.0
        %2074 = vmatprep.subr.mxu0 0.0
        %2075 = vmatpush1.msra.mxu0 0.0
        %2076 = vmatprep.subr.mxu0 0.0
        %2077 = vmatpush1.msra.mxu0 0.0
        %2078 = vmatprep.subr.mxu0 0.0
        %2079 = vmatpush1.msra.mxu0 0.0
        %2080 = vmatprep.subr.mxu0 0.0
        %2081 = vmatpush1.msra.mxu0 0.0
        %2082 = vmatprep.subr.mxu0 0.0
        %2083 = vmatpush1.msra.mxu0 0.0
        %2084 = vmatprep.subr.mxu0 0.0
        %2085 = vmatpush1.msra.mxu0 0.0
        %2086 = vmatprep.mubr.f32.mxu0 0.0
        %2087 = vmatmul.mubr.f32.gmra.mrb[0].mxu0 %v2017
        %v2088 = vpop.f32.mrb[0].mxu0
        %v2089 = vadd.f32 %v2013, %v2088
        %v2090 = vpop.f32.mrb[0].mxu0
        %2091 = vmatprep.mubr.f32.mxu0 0.0
        %2092 = vmatmul.mubr.f32.gmra.mrb[0].mxu0 %v2020
        %v2093 = vpop.f32.mrb[0].mxu0
        %v2094 = vadd.f32 %v2013, %v2093
        %v2095 = vpop.f32.mrb[0].mxu0
        %2096 = vdwg.mxu0
        %v2097 = vadd.f32 %v1878, %v2089
        %v2098 = vadd.f32 %v1879, %v2094
        %v2099 = vsel %vm601, %v2097, 0.0
        %2100 = vadd.xlane.f32.xlu0 %v2099
        %v2101 = vpop.xlane.xlu0 %2100
        %v2102 = vsel %vm605, %v2098, 0.0
        %2103 = vadd.xlane.f32.xlu0 %v2102
        %v2104 = vpop.xlane.xlu0 %2103
        %v2105 = vmul.f32 %v2101, %v609
        %v2106 = vmul.f32 %v2104, %v609
        %v2107 = vsub.f32 %v2097, %v2105
        %v2108 = vsub.f32 %v2098, %v2106
        %v2109 = vmul.f32 %v2107, %v2107
        %v2110 = vmul.f32 %v2108, %v2108
        %v2111 = vsel %vm601, %v2109, 0.0
        %2112 = vadd.xlane.f32.xlu0 %v2111
        %v2113 = vpop.xlane.xlu0 %2112
        %v2114 = vsel %vm605, %v2110, 0.0
        %2115 = vadd.xlane.f32.xlu0 %v2114
        %v2116 = vpop.xlane.xlu0 %2115
        %v2117 = vmul.f32 %v2113, %v609
        %v2118 = vmul.f32 %v2116, %v609
        %v2119 = vadd.f32 %v2117, 1e-05
        %v2120 = vadd.f32 %v2118, 1e-05
        %v2121 = vrsqrt.pop %v2119
        %v2122 = vrsqrt.pop %v2120
        %v2123 = vmul.f32 %v2107, %v2121
        %v2124 = vmul.f32 %v2108, %v2122
        %s2125 = scalar_lea.vmem %s3, 32
        %v2126 = vld [vmem:[%s2125] sm:$0xff]
        %v2127 = vld [vmem:[%s2125 + $0x8] sm:$0xff]
        %v2128 = vld [vmem:[%s2125 + $0x10] sm:$0xff]
        %v2129 = vld [vmem:[%s2125 + $0x18] sm:$0xff]
        %s2130 = scalar_lea.vmem %s4, 1
        %v2131 = vld [vmem:[%s2130] sm:$0x1]
        %v2133 = vlaneseq
        %v2134 = vshrl.u32 %v2133, 7
        %v2135 = vsub.s32 0, %v2134
        %v2136 = vrot.slane %v2131, %v2135
        %v2139 = vsel %vm601, %v2123, 0
        %v2142 = vsel %vm601, %v2124, 0
        %2144 = vmatprep.subr.mxu0 0.0
        %2145 = vmatpush1.msra.mxu0 %v2126
        %2146 = vmatprep.subr.mxu0 0.0
        %2147 = vmatpush1.msra.mxu0 %v2127
        %2148 = vmatprep.subr.mxu0 0.0
        %2149 = vmatpush1.msra.mxu0 %v2128
        %2150 = vmatprep.subr.mxu0 0.0
        %2151 = vmatpush1.msra.mxu0 %v2129
        %2152 = vmatprep.subr.mxu0 0.0
        %2153 = vmatpush1.msra.mxu0 0.0
        %2154 = vmatprep.subr.mxu0 0.0
        %2155 = vmatpush1.msra.mxu0 0.0
        %2156 = vmatprep.subr.mxu0 0.0
        %2157 = vmatpush1.msra.mxu0 0.0
        %2158 = vmatprep.subr.mxu0 0.0
        %2159 = vmatpush1.msra.mxu0 0.0
        %2160 = vmatprep.subr.mxu0 0.0
        %2161 = vmatpush1.msra.mxu0 0.0
        %2162 = vmatprep.subr.mxu0 0.0
        %2163 = vmatpush1.msra.mxu0 0.0
        %2164 = vmatprep.subr.mxu0 0.0
        %2165 = vmatpush1.msra.mxu0 0.0
        %2166 = vmatprep.subr.mxu0 0.0
        %2167 = vmatpush1.msra.mxu0 0.0
        %2168 = vmatprep.subr.mxu0 0.0
        %2169 = vmatpush1.msra.mxu0 0.0
        %2170 = vmatprep.subr.mxu0 0.0
        %2171 = vmatpush1.msra.mxu0 0.0
        %2172 = vmatprep.subr.mxu0 0.0
        %2173 = vmatpush1.msra.mxu0 0.0
        %2174 = vmatprep.subr.mxu0 0.0
        %2175 = vmatpush1.msra.mxu0 0.0
        %2176 = vmatprep.subr.mxu0 0.0
        %2177 = vmatpush1.msra.mxu0 0.0
        %2178 = vmatprep.subr.mxu0 0.0
        %2179 = vmatpush1.msra.mxu0 0.0
        %2180 = vmatprep.subr.mxu0 0.0
        %2181 = vmatpush1.msra.mxu0 0.0
        %2182 = vmatprep.subr.mxu0 0.0
        %2183 = vmatpush1.msra.mxu0 0.0
        %2184 = vmatprep.subr.mxu0 0.0
        %2185 = vmatpush1.msra.mxu0 0.0
        %2186 = vmatprep.subr.mxu0 0.0
        %2187 = vmatpush1.msra.mxu0 0.0
        %2188 = vmatprep.subr.mxu0 0.0
        %2189 = vmatpush1.msra.mxu0 0.0
        %2190 = vmatprep.subr.mxu0 0.0
        %2191 = vmatpush1.msra.mxu0 0.0
        %2192 = vmatprep.subr.mxu0 0.0
        %2193 = vmatpush1.msra.mxu0 0.0
        %2194 = vmatprep.subr.mxu0 0.0
        %2195 = vmatpush1.msra.mxu0 0.0
        %2196 = vmatprep.subr.mxu0 0.0
        %2197 = vmatpush1.msra.mxu0 0.0
        %2198 = vmatprep.subr.mxu0 0.0
        %2199 = vmatpush1.msra.mxu0 0.0
        %2200 = vmatprep.subr.mxu0 0.0
        %2201 = vmatpush1.msra.mxu0 0.0
        %2202 = vmatprep.subr.mxu0 0.0
        %2203 = vmatpush1.msra.mxu0 0.0
        %2204 = vmatprep.subr.mxu0 0.0
        %2205 = vmatpush1.msra.mxu0 0.0
        %2206 = vmatprep.subr.mxu0 0.0
        %2207 = vmatpush1.msra.mxu0 0.0
        %2208 = vmatprep.mubr.f32.mxu0 0.0
        %2209 = vmatmul.mubr.f32.gmra.mrb[0].mxu0 %v2139
        %v2210 = vpop.f32.mrb[0].mxu0
        %v2211 = vadd.f32 %v2136, %v2210
        %v2212 = vpop.f32.mrb[0].mxu0
        %2213 = vmatprep.mubr.f32.mxu0 0.0
        %2214 = vmatmul.mubr.f32.gmra.mrb[0].mxu0 %v2142
        %v2215 = vpop.f32.mrb[0].mxu0
        %v2216 = vadd.f32 %v2136, %v2215
        %v2217 = vpop.f32.mrb[0].mxu0
        %2218 = vdwg.mxu0
        %s2219 = scalar_lea.vmem %s5, 32
        %v2220 = vld [vmem:[%s2219] sm:$0xff]
        %v2221 = vld [vmem:[%s2219 + $0x8] sm:$0xff]
        %v2222 = vld [vmem:[%s2219 + $0x10] sm:$0xff]
        %v2223 = vld [vmem:[%s2219 + $0x18] sm:$0xff]
        %s2224 = scalar_lea.vmem %s6, 1
        %v2225 = vld [vmem:[%s2224] sm:$0x1]
        %2228 = vrot.lane.b32.xlu0 %v2211, 96
        %v2229 = vpop.permute.xlu0 %2228
        %2230 = vrot.lane.b32.xlu0 %v2216, 96
        %v2231 = vpop.permute.xlu0 %2230
        %v2232 = vsel %vm733, %v2211, 0
        %v2234 = vsel %vm733, %v2216, 0
        %v2236 = vsel %vm733, %v2229, 0
        %v2238 = vsel %vm733, %v2231, 0
        %2240 = vmatprep.subr.mxu0 0.0
        %2241 = vmatpush1.xpose.msra.mxu0 %v2236
        %2242 = vmatprep.subr.mxu0 0.0
        %2243 = vmatpush1.xpose.msra.mxu0 %v2238
        %2244 = vmatprep.subr.mxu0 0.0
        %2245 = vmatpush1.xpose.msra.mxu0 0.0
        %2246 = vmatprep.subr.mxu0 0.0
        %2247 = vmatpush1.xpose.msra.mxu0 0.0
        %2248 = vmatprep.subr.mxu0 0.0
        %2249 = vmatpush1.xpose.msra.mxu0 0.0
        %2250 = vmatprep.subr.mxu0 0.0
        %2251 = vmatpush1.xpose.msra.mxu0 0.0
        %2252 = vmatprep.subr.mxu0 0.0
        %2253 = vmatpush1.xpose.msra.mxu0 0.0
        %2254 = vmatprep.subr.mxu0 0.0
        %2255 = vmatpush1.xpose.msra.mxu0 0.0
        %2256 = vmatprep.subr.mxu0 0.0
        %2257 = vmatpush1.xpose.msra.mxu0 0.0
        %2258 = vmatprep.subr.mxu0 0.0
        %2259 = vmatpush1.xpose.msra.mxu0 0.0
        %2260 = vmatprep.subr.mxu0 0.0
        %2261 = vmatpush1.xpose.msra.mxu0 0.0
        %2262 = vmatprep.subr.mxu0 0.0
        %2263 = vmatpush1.xpose.msra.mxu0 0.0
        %2264 = vmatprep.subr.mxu0 0.0
        %2265 = vmatpush1.xpose.msra.mxu0 0.0
        %2266 = vmatprep.subr.mxu0 0.0
        %2267 = vmatpush1.xpose.msra.mxu0 0.0
        %2268 = vmatprep.subr.mxu0 0.0
        %2269 = vmatpush1.xpose.msra.mxu0 0.0
        %2270 = vmatprep.subr.mxu0 0.0
        %2271 = vmatpush1.xpose.msra.mxu0 0.0
        %2272 = vmatprep.subr.mxu0 0.0
        %2273 = vmatpush1.xpose.msra.mxu0 0.0
        %2274 = vmatprep.subr.mxu0 0.0
        %2275 = vmatpush1.xpose.msra.mxu0 0.0
        %2276 = vmatprep.subr.mxu0 0.0
        %2277 = vmatpush1.xpose.msra.mxu0 0.0
        %2278 = vmatprep.subr.mxu0 0.0
        %2279 = vmatpush1.xpose.msra.mxu0 0.0
        %2280 = vmatprep.subr.mxu0 0.0
        %2281 = vmatpush1.xpose.msra.mxu0 0.0
        %2282 = vmatprep.subr.mxu0 0.0
        %2283 = vmatpush1.xpose.msra.mxu0 0.0
        %2284 = vmatprep.subr.mxu0 0.0
        %2285 = vmatpush1.xpose.msra.mxu0 0.0
        %2286 = vmatprep.subr.mxu0 0.0
        %2287 = vmatpush1.xpose.msra.mxu0 0.0
        %2288 = vmatprep.subr.mxu0 0.0
        %2289 = vmatpush1.xpose.msra.mxu0 0.0
        %2290 = vmatprep.subr.mxu0 0.0
        %2291 = vmatpush1.xpose.msra.mxu0 0.0
        %2292 = vmatprep.subr.mxu0 0.0
        %2293 = vmatpush1.xpose.msra.mxu0 0.0
        %2294 = vmatprep.subr.mxu0 0.0
        %2295 = vmatpush1.xpose.msra.mxu0 0.0
        %2296 = vmatprep.subr.mxu0 0.0
        %2297 = vmatpush1.xpose.msra.mxu0 0.0
        %2298 = vmatprep.subr.mxu0 0.0
        %2299 = vmatpush1.xpose.msra.mxu0 0.0
        %2300 = vmatprep.subr.mxu0 0.0
        %2301 = vmatpush1.xpose.msra.mxu0 0.0
        %2302 = vmatprep.subr.mxu0 0.0
        %2303 = vmatpush1.xpose.msra.mxu0 0.0
        %2304 = vmatprep.mubr.f32.mxu0 0.0
        %2305 = vmatmul.mubr.f32.gmra.mrb[0].mxu0 %v2232
        %v2306 = vpop.f32.mrb[0].mxu0
        %v2307 = vadd.f32 0.0, %v2306
        %v2308 = vpop.f32.mrb[0].mxu0
        %2309 = vmatprep.mubr.f32.mxu0 0.0
        %2310 = vmatmul.mubr.f32.gmra.mrb[0].mxu0 %v2234
        %v2311 = vpop.f32.mrb[0].mxu0
        %v2312 = vadd.f32 0.0, %v2311
        %v2313 = vpop.f32.mrb[0].mxu0
        %2314 = vdwg.mxu0
        %v2315 = vmul.f32 %v2307, 0.35355338
        %v2316 = vmul.f32 %v2312, 0.35355338
        %v2317 = vsel %vm819, %v2315, -inf
        %2318 = vmax.xlane.f32.xlu0 %v2317
        %v2319 = vpop.xlane.xlu0 %2318
        %v2320 = vsel %vm823, %v2316, -inf
        %2321 = vmax.xlane.f32.xlu0 %v2320
        %v2322 = vpop.xlane.xlu0 %2321
        %v2323 = vsub.f32 %v2315, %v2319
        %v2324 = vsub.f32 %v2316, %v2322
        %v2325 = vmul.f32 %v2323, 1.442695
        %v2326 = vpow.pop %v2325
        %v2327 = vmul.f32 %v2324, 1.442695
        %v2328 = vpow.pop %v2327
        %v2329 = vsel %vm819, %v2326, 0.0
        %2330 = vadd.xlane.f32.xlu0 %v2329
        %v2331 = vpop.xlane.xlu0 %2330
        %v2332 = vsel %vm823, %v2328, 0.0
        %2333 = vadd.xlane.f32.xlu0 %v2332
        %v2334 = vpop.xlane.xlu0 %2333
        %v2335 = vrcp.pop %v2331
        %v2336 = vrcp.pop %v2334
        %v2337 = vmul.f32 %v2326, %v2335
        %v2338 = vmul.f32 %v2328, %v2336
        %2339 = vrot.lane.b32.xlu0 %v2211, 64
        %v2340 = vpop.permute.xlu0 %2339
        %2341 = vrot.lane.b32.xlu0 %v2216, 64
        %v2342 = vpop.permute.xlu0 %2341
        %v2345 = vsel %vm819, %v2337, 0
        %v2348 = vsel %vm819, %v2338, 0
        %v2350 = vsel %vm522, %v2342, 0
        %2352 = vmatprep.subr.mxu0 0.0
        %2353 = vmatpush1.msra.mxu0 %v2340
        %2354 = vmatprep.subr.mxu0 0.0
        %2355 = vmatpush1.msra.mxu0 %v2350
        %2356 = vmatprep.subr.mxu0 0.0
        %2357 = vmatpush1.msra.mxu0 0.0
        %2358 = vmatprep.subr.mxu0 0.0
        %2359 = vmatpush1.msra.mxu0 0.0
        %2360 = vmatprep.subr.mxu0 0.0
        %2361 = vmatpush1.msra.mxu0 0.0
        %2362 = vmatprep.subr.mxu0 0.0
        %2363 = vmatpush1.msra.mxu0 0.0
        %2364 = vmatprep.subr.mxu0 0.0
        %2365 = vmatpush1.msra.mxu0 0.0
        %2366 = vmatprep.subr.mxu0 0.0
        %2367 = vmatpush1.msra.mxu0 0.0
        %2368 = vmatprep.subr.mxu0 0.0
        %2369 = vmatpush1.msra.mxu0 0.0
        %2370 = vmatprep.subr.mxu0 0.0
        %2371 = vmatpush1.msra.mxu0 0.0
        %2372 = vmatprep.subr.mxu0 0.0
        %2373 = vmatpush1.msra.mxu0 0.0
        %2374 = vmatprep.subr.mxu0 0.0
        %2375 = vmatpush1.msra.mxu0 0.0
        %2376 = vmatprep.subr.mxu0 0.0
        %2377 = vmatpush1.msra.mxu0 0.0
        %2378 = vmatprep.subr.mxu0 0.0
        %2379 = vmatpush1.msra.mxu0 0.0
        %2380 = vmatprep.subr.mxu0 0.0
        %2381 = vmatpush1.msra.mxu0 0.0
        %2382 = vmatprep.subr.mxu0 0.0
        %2383 = vmatpush1.msra.mxu0 0.0
        %2384 = vmatprep.subr.mxu0 0.0
        %2385 = vmatpush1.msra.mxu0 0.0
        %2386 = vmatprep.subr.mxu0 0.0
        %2387 = vmatpush1.msra.mxu0 0.0
        %2388 = vmatprep.subr.mxu0 0.0
        %2389 = vmatpush1.msra.mxu0 0.0
        %2390 = vmatprep.subr.mxu0 0.0
        %2391 = vmatpush1.msra.mxu0 0.0
        %2392 = vmatprep.subr.mxu0 0.0
        %2393 = vmatpush1.msra.mxu0 0.0
        %2394 = vmatprep.subr.mxu0 0.0
        %2395 = vmatpush1.msra.mxu0 0.0
        %2396 = vmatprep.subr.mxu0 0.0
        %2397 = vmatpush1.msra.mxu0 0.0
        %2398 = vmatprep.subr.mxu0 0.0
        %2399 = vmatpush1.msra.mxu0 0.0
        %2400 = vmatprep.subr.mxu0 0.0
        %2401 = vmatpush1.msra.mxu0 0.0
        %2402 = vmatprep.subr.mxu0 0.0
        %2403 = vmatpush1.msra.mxu0 0.0
        %2404 = vmatprep.subr.mxu0 0.0
        %2405 = vmatpush1.msra.mxu0 0.0
        %2406 = vmatprep.subr.mxu0 0.0
        %2407 = vmatpush1.msra.mxu0 0.0
        %2408 = vmatprep.subr.mxu0 0.0
        %2409 = vmatpush1.msra.mxu0 0.0
        %2410 = vmatprep.subr.mxu0 0.0
        %2411 = vmatpush1.msra.mxu0 0.0
        %2412 = vmatprep.subr.mxu0 0.0
        %2413 = vmatpush1.msra.mxu0 0.0
        %2414 = vmatprep.subr.mxu0 0.0
        %2415 = vmatpush1.msra.mxu0 0.0
        %2416 = vmatprep.mubr.f32.mxu0 0.0
        %2417 = vmatmul.mubr.f32.gmra.mrb[0].mxu0 %v2345
        %v2418 = vpop.f32.mrb[0].mxu0
        %v2419 = vadd.f32 0.0, %v2418
        %v2420 = vpop.f32.mrb[0].mxu0
        %2421 = vmatprep.mubr.f32.mxu0 0.0
        %2422 = vmatmul.mubr.f32.gmra.mrb[0].mxu0 %v2348
        %v2423 = vpop.f32.mrb[0].mxu0
        %v2424 = vadd.f32 0.0, %v2423
        %v2425 = vpop.f32.mrb[0].mxu0
        %2426 = vdwg.mxu0
        %v2428 = vsel %vm733, %v2419, 0
        %v2431 = vsel %vm733, %v2424, 0
        %2433 = vmatprep.subr.mxu0 0.0
        %2434 = vmatpush1.msra.mxu0 %v2220
        %2435 = vmatprep.subr.mxu0 0.0
        %2436 = vmatpush1.msra.mxu0 0.0
        %2437 = vmatprep.subr.mxu0 0.0
        %2438 = vmatpush1.msra.mxu0 0.0
        %2439 = vmatprep.subr.mxu0 0.0
        %2440 = vmatpush1.msra.mxu0 0.0
        %2441 = vmatprep.subr.mxu0 0.0
        %2442 = vmatpush1.msra.mxu0 0.0
        %2443 = vmatprep.subr.mxu0 0.0
        %2444 = vmatpush1.msra.mxu0 0.0
        %2445 = vmatprep.subr.mxu0 0.0
        %2446 = vmatpush1.msra.mxu0 0.0
        %2447 = vmatprep.subr.mxu0 0.0
        %2448 = vmatpush1.msra.mxu0 0.0
        %2449 = vmatprep.subr.mxu0 0.0
        %2450 = vmatpush1.msra.mxu0 0.0
        %2451 = vmatprep.subr.mxu0 0.0
        %2452 = vmatpush1.msra.mxu0 0.0
        %2453 = vmatprep.subr.mxu0 0.0
        %2454 = vmatpush1.msra.mxu0 0.0
        %2455 = vmatprep.subr.mxu0 0.0
        %2456 = vmatpush1.msra.mxu0 0.0
        %2457 = vmatprep.subr.mxu0 0.0
        %2458 = vmatpush1.msra.mxu0 0.0
        %2459 = vmatprep.subr.mxu0 0.0
        %2460 = vmatpush1.msra.mxu0 0.0
        %2461 = vmatprep.subr.mxu0 0.0
        %2462 = vmatpush1.msra.mxu0 0.0
        %2463 = vmatprep.subr.mxu0 0.0
        %2464 = vmatpush1.msra.mxu0 0.0
        %2465 = vmatprep.subr.mxu0 0.0
        %2466 = vmatpush1.msra.mxu0 0.0
        %2467 = vmatprep.subr.mxu0 0.0
        %2468 = vmatpush1.msra.mxu0 0.0
        %2469 = vmatprep.subr.mxu0 0.0
        %2470 = vmatpush1.msra.mxu0 0.0
        %2471 = vmatprep.subr.mxu0 0.0
        %2472 = vmatpush1.msra.mxu0 0.0
        %2473 = vmatprep.subr.mxu0 0.0
        %2474 = vmatpush1.msra.mxu0 0.0
        %2475 = vmatprep.subr.mxu0 0.0
        %2476 = vmatpush1.msra.mxu0 0.0
        %2477 = vmatprep.subr.mxu0 0.0
        %2478 = vmatpush1.msra.mxu0 0.0
        %2479 = vmatprep.subr.mxu0 0.0
        %2480 = vmatpush1.msra.mxu0 0.0
        %2481 = vmatprep.subr.mxu0 0.0
        %2482 = vmatpush1.msra.mxu0 0.0
        %2483 = vmatprep.subr.mxu0 0.0
        %2484 = vmatpush1.msra.mxu0 0.0
        %2485 = vmatprep.subr.mxu0 0.0
        %2486 = vmatpush1.msra.mxu0 0.0
        %2487 = vmatprep.subr.mxu0 0.0
        %2488 = vmatpush1.msra.mxu0 0.0
        %2489 = vmatprep.subr.mxu0 0.0
        %2490 = vmatpush1.msra.mxu0 0.0
        %2491 = vmatprep.subr.mxu0 0.0
        %2492 = vmatpush1.msra.mxu0 0.0
        %2493 = vmatprep.subr.mxu0 0.0
        %2494 = vmatpush1.msra.mxu0 0.0
        %2495 = vmatprep.subr.mxu0 0.0
        %2496 = vmatpush1.msra.mxu0 0.0
        %2497 = vmatprep.mubr.f32.mxu0 0.0
        %2498 = vmatmul.mubr.f32.gmra.mrb[0].mxu0 %v2428
        %v2499 = vpop.f32.mrb[0].mxu0
        %v2500 = vadd.f32 0.0, %v2499
        %v2501 = vpop.f32.mrb[0].mxu0
        %2502 = vmatprep.mubr.f32.mxu0 0.0
        %2503 = vmatmul.mubr.f32.gmra.mrb[0].mxu0 %v2431
        %v2504 = vpop.f32.mrb[0].mxu0
        %v2505 = vadd.f32 0.0, %v2504
        %v2506 = vpop.f32.mrb[0].mxu0
        %2507 = vdwg.mxu0
        %v2509 = vlaneseq
        %v2510 = vshrl.u32 %v2509, 7
        %v2511 = vsub.s32 0, %v2510
        %v2512 = vrot.slane %v2225, %v2511
        %v2514 = vadd.f32 %v2512, %v2500
        %v2515 = vadd.f32 %v2512, %v2505
        %2516 = vrot.lane.b32.xlu0 %v2211, 120
        %v2517 = vpop.permute.xlu0 %2516
        %2518 = vrot.lane.b32.xlu0 %v2216, 120
        %v2519 = vpop.permute.xlu0 %2518
        %2520 = vrot.lane.b32.xlu0 %v2211, 88
        %v2521 = vpop.permute.xlu0 %2520
        %2522 = vrot.lane.b32.xlu0 %v2216, 88
        %v2523 = vpop.permute.xlu0 %2522
        %v2524 = vsel %vm733, %v2517, 0
        %v2526 = vsel %vm733, %v2519, 0
        %v2528 = vsel %vm733, %v2521, 0
        %v2530 = vsel %vm733, %v2523, 0
        %2532 = vmatprep.subr.mxu0 0.0
        %2533 = vmatpush1.xpose.msra.mxu0 %v2528
        %2534 = vmatprep.subr.mxu0 0.0
        %2535 = vmatpush1.xpose.msra.mxu0 %v2530
        %2536 = vmatprep.subr.mxu0 0.0
        %2537 = vmatpush1.xpose.msra.mxu0 0.0
        %2538 = vmatprep.subr.mxu0 0.0
        %2539 = vmatpush1.xpose.msra.mxu0 0.0
        %2540 = vmatprep.subr.mxu0 0.0
        %2541 = vmatpush1.xpose.msra.mxu0 0.0
        %2542 = vmatprep.subr.mxu0 0.0
        %2543 = vmatpush1.xpose.msra.mxu0 0.0
        %2544 = vmatprep.subr.mxu0 0.0
        %2545 = vmatpush1.xpose.msra.mxu0 0.0
        %2546 = vmatprep.subr.mxu0 0.0
        %2547 = vmatpush1.xpose.msra.mxu0 0.0
        %2548 = vmatprep.subr.mxu0 0.0
        %2549 = vmatpush1.xpose.msra.mxu0 0.0
        %2550 = vmatprep.subr.mxu0 0.0
        %2551 = vmatpush1.xpose.msra.mxu0 0.0
        %2552 = vmatprep.subr.mxu0 0.0
        %2553 = vmatpush1.xpose.msra.mxu0 0.0
        %2554 = vmatprep.subr.mxu0 0.0
        %2555 = vmatpush1.xpose.msra.mxu0 0.0
        %2556 = vmatprep.subr.mxu0 0.0
        %2557 = vmatpush1.xpose.msra.mxu0 0.0
        %2558 = vmatprep.subr.mxu0 0.0
        %2559 = vmatpush1.xpose.msra.mxu0 0.0
        %2560 = vmatprep.subr.mxu0 0.0
        %2561 = vmatpush1.xpose.msra.mxu0 0.0
        %2562 = vmatprep.subr.mxu0 0.0
        %2563 = vmatpush1.xpose.msra.mxu0 0.0
        %2564 = vmatprep.subr.mxu0 0.0
        %2565 = vmatpush1.xpose.msra.mxu0 0.0
        %2566 = vmatprep.subr.mxu0 0.0
        %2567 = vmatpush1.xpose.msra.mxu0 0.0
        %2568 = vmatprep.subr.mxu0 0.0
        %2569 = vmatpush1.xpose.msra.mxu0 0.0
        %2570 = vmatprep.subr.mxu0 0.0
        %2571 = vmatpush1.xpose.msra.mxu0 0.0
        %2572 = vmatprep.subr.mxu0 0.0
        %2573 = vmatpush1.xpose.msra.mxu0 0.0
        %2574 = vmatprep.subr.mxu0 0.0
        %2575 = vmatpush1.xpose.msra.mxu0 0.0
        %2576 = vmatprep.subr.mxu0 0.0
        %2577 = vmatpush1.xpose.msra.mxu0 0.0
        %2578 = vmatprep.subr.mxu0 0.0
        %2579 = vmatpush1.xpose.msra.mxu0 0.0
        %2580 = vmatprep.subr.mxu0 0.0
        %2581 = vmatpush1.xpose.msra.mxu0 0.0
        %2582 = vmatprep.subr.mxu0 0.0
        %2583 = vmatpush1.xpose.msra.mxu0 0.0
        %2584 = vmatprep.subr.mxu0 0.0
        %2585 = vmatpush1.xpose.msra.mxu0 0.0
        %2586 = vmatprep.subr.mxu0 0.0
        %2587 = vmatpush1.xpose.msra.mxu0 0.0
        %2588 = vmatprep.subr.mxu0 0.0
        %2589 = vmatpush1.xpose.msra.mxu0 0.0
        %2590 = vmatprep.subr.mxu0 0.0
        %2591 = vmatpush1.xpose.msra.mxu0 0.0
        %2592 = vmatprep.subr.mxu0 0.0
        %2593 = vmatpush1.xpose.msra.mxu0 0.0
        %2594 = vmatprep.subr.mxu0 0.0
        %2595 = vmatpush1.xpose.msra.mxu0 0.0
        %2596 = vmatprep.mubr.f32.mxu0 0.0
        %2597 = vmatmul.mubr.f32.gmra.mrb[0].mxu0 %v2524
        %v2598 = vpop.f32.mrb[0].mxu0
        %v2599 = vadd.f32 0.0, %v2598
        %v2600 = vpop.f32.mrb[0].mxu0
        %2601 = vmatprep.mubr.f32.mxu0 0.0
        %2602 = vmatmul.mubr.f32.gmra.mrb[0].mxu0 %v2526
        %v2603 = vpop.f32.mrb[0].mxu0
        %v2604 = vadd.f32 0.0, %v2603
        %v2605 = vpop.f32.mrb[0].mxu0
        %2606 = vdwg.mxu0
        %v2607 = vmul.f32 %v2599, 0.35355338
        %v2608 = vmul.f32 %v2604, 0.35355338
        %v2609 = vsel %vm819, %v2607, -inf
        %2610 = vmax.xlane.f32.xlu0 %v2609
        %v2611 = vpop.xlane.xlu0 %2610
        %v2612 = vsel %vm823, %v2608, -inf
        %2613 = vmax.xlane.f32.xlu0 %v2612
        %v2614 = vpop.xlane.xlu0 %2613
        %v2615 = vsub.f32 %v2607, %v2611
        %v2616 = vsub.f32 %v2608, %v2614
        %v2617 = vmul.f32 %v2615, 1.442695
        %v2618 = vpow.pop %v2617
        %v2619 = vmul.f32 %v2616, 1.442695
        %v2620 = vpow.pop %v2619
        %v2621 = vsel %vm819, %v2618, 0.0
        %2622 = vadd.xlane.f32.xlu0 %v2621
        %v2623 = vpop.xlane.xlu0 %2622
        %v2624 = vsel %vm823, %v2620, 0.0
        %2625 = vadd.xlane.f32.xlu0 %v2624
        %v2626 = vpop.xlane.xlu0 %2625
        %v2627 = vrcp.pop %v2623
        %v2628 = vrcp.pop %v2626
        %v2629 = vmul.f32 %v2618, %v2627
        %v2630 = vmul.f32 %v2620, %v2628
        %2631 = vrot.lane.b32.xlu0 %v2211, 56
        %v2632 = vpop.permute.xlu0 %2631
        %2633 = vrot.lane.b32.xlu0 %v2216, 56
        %v2634 = vpop.permute.xlu0 %2633
        %v2637 = vsel %vm819, %v2629, 0
        %v2640 = vsel %vm819, %v2630, 0
        %v2642 = vsel %vm522, %v2634, 0
        %2644 = vmatprep.subr.mxu0 0.0
        %2645 = vmatpush1.msra.mxu0 %v2632
        %2646 = vmatprep.subr.mxu0 0.0
        %2647 = vmatpush1.msra.mxu0 %v2642
        %2648 = vmatprep.subr.mxu0 0.0
        %2649 = vmatpush1.msra.mxu0 0.0
        %2650 = vmatprep.subr.mxu0 0.0
        %2651 = vmatpush1.msra.mxu0 0.0
        %2652 = vmatprep.subr.mxu0 0.0
        %2653 = vmatpush1.msra.mxu0 0.0
        %2654 = vmatprep.subr.mxu0 0.0
        %2655 = vmatpush1.msra.mxu0 0.0
        %2656 = vmatprep.subr.mxu0 0.0
        %2657 = vmatpush1.msra.mxu0 0.0
        %2658 = vmatprep.subr.mxu0 0.0
        %2659 = vmatpush1.msra.mxu0 0.0
        %2660 = vmatprep.subr.mxu0 0.0
        %2661 = vmatpush1.msra.mxu0 0.0
        %2662 = vmatprep.subr.mxu0 0.0
        %2663 = vmatpush1.msra.mxu0 0.0
        %2664 = vmatprep.subr.mxu0 0.0
        %2665 = vmatpush1.msra.mxu0 0.0
        %2666 = vmatprep.subr.mxu0 0.0
        %2667 = vmatpush1.msra.mxu0 0.0
        %2668 = vmatprep.subr.mxu0 0.0
        %2669 = vmatpush1.msra.mxu0 0.0
        %2670 = vmatprep.subr.mxu0 0.0
        %2671 = vmatpush1.msra.mxu0 0.0
        %2672 = vmatprep.subr.mxu0 0.0
        %2673 = vmatpush1.msra.mxu0 0.0
        %2674 = vmatprep.subr.mxu0 0.0
        %2675 = vmatpush1.msra.mxu0 0.0
        %2676 = vmatprep.subr.mxu0 0.0
        %2677 = vmatpush1.msra.mxu0 0.0
        %2678 = vmatprep.subr.mxu0 0.0
        %2679 = vmatpush1.msra.mxu0 0.0
        %2680 = vmatprep.subr.mxu0 0.0
        %2681 = vmatpush1.msra.mxu0 0.0
        %2682 = vmatprep.subr.mxu0 0.0
        %2683 = vmatpush1.msra.mxu0 0.0
        %2684 = vmatprep.subr.mxu0 0.0
        %2685 = vmatpush1.msra.mxu0 0.0
        %2686 = vmatprep.subr.mxu0 0.0
        %2687 = vmatpush1.msra.mxu0 0.0
        %2688 = vmatprep.subr.mxu0 0.0
        %2689 = vmatpush1.msra.mxu0 0.0
        %2690 = vmatprep.subr.mxu0 0.0
        %2691 = vmatpush1.msra.mxu0 0.0
        %2692 = vmatprep.subr.mxu0 0.0
        %2693 = vmatpush1.msra.mxu0 0.0
        %2694 = vmatprep.subr.mxu0 0.0
        %2695 = vmatpush1.msra.mxu0 0.0
        %2696 = vmatprep.subr.mxu0 0.0
        %2697 = vmatpush1.msra.mxu0 0.0
        %2698 = vmatprep.subr.mxu0 0.0
        %2699 = vmatpush1.msra.mxu0 0.0
        %2700 = vmatprep.subr.mxu0 0.0
        %2701 = vmatpush1.msra.mxu0 0.0
        %2702 = vmatprep.subr.mxu0 0.0
        %2703 = vmatpush1.msra.mxu0 0.0
        %2704 = vmatprep.subr.mxu0 0.0
        %2705 = vmatpush1.msra.mxu0 0.0
        %2706 = vmatprep.subr.mxu0 0.0
        %2707 = vmatpush1.msra.mxu0 0.0
        %2708 = vmatprep.mubr.f32.mxu0 0.0
        %2709 = vmatmul.mubr.f32.gmra.mrb[0].mxu0 %v2637
        %v2710 = vpop.f32.mrb[0].mxu0
        %v2711 = vadd.f32 0.0, %v2710
        %v2712 = vpop.f32.mrb[0].mxu0
        %2713 = vmatprep.mubr.f32.mxu0 0.0
        %2714 = vmatmul.mubr.f32.gmra.mrb[0].mxu0 %v2640
        %v2715 = vpop.f32.mrb[0].mxu0
        %v2716 = vadd.f32 0.0, %v2715
        %v2717 = vpop.f32.mrb[0].mxu0
        %2718 = vdwg.mxu0
        %v2720 = vsel %vm733, %v2711, 0
        %v2723 = vsel %vm733, %v2716, 0
        %2725 = vmatprep.subr.mxu0 0.0
        %2726 = vmatpush1.msra.mxu0 %v2221
        %2727 = vmatprep.subr.mxu0 0.0
        %2728 = vmatpush1.msra.mxu0 0.0
        %2729 = vmatprep.subr.mxu0 0.0
        %2730 = vmatpush1.msra.mxu0 0.0
        %2731 = vmatprep.subr.mxu0 0.0
        %2732 = vmatpush1.msra.mxu0 0.0
        %2733 = vmatprep.subr.mxu0 0.0
        %2734 = vmatpush1.msra.mxu0 0.0
        %2735 = vmatprep.subr.mxu0 0.0
        %2736 = vmatpush1.msra.mxu0 0.0
        %2737 = vmatprep.subr.mxu0 0.0
        %2738 = vmatpush1.msra.mxu0 0.0
        %2739 = vmatprep.subr.mxu0 0.0
        %2740 = vmatpush1.msra.mxu0 0.0
        %2741 = vmatprep.subr.mxu0 0.0
        %2742 = vmatpush1.msra.mxu0 0.0
        %2743 = vmatprep.subr.mxu0 0.0
        %2744 = vmatpush1.msra.mxu0 0.0
        %2745 = vmatprep.subr.mxu0 0.0
        %2746 = vmatpush1.msra.mxu0 0.0
        %2747 = vmatprep.subr.mxu0 0.0
        %2748 = vmatpush1.msra.mxu0 0.0
        %2749 = vmatprep.subr.mxu0 0.0
        %2750 = vmatpush1.msra.mxu0 0.0
        %2751 = vmatprep.subr.mxu0 0.0
        %2752 = vmatpush1.msra.mxu0 0.0
        %2753 = vmatprep.subr.mxu0 0.0
        %2754 = vmatpush1.msra.mxu0 0.0
        %2755 = vmatprep.subr.mxu0 0.0
        %2756 = vmatpush1.msra.mxu0 0.0
        %2757 = vmatprep.subr.mxu0 0.0
        %2758 = vmatpush1.msra.mxu0 0.0
        %2759 = vmatprep.subr.mxu0 0.0
        %2760 = vmatpush1.msra.mxu0 0.0
        %2761 = vmatprep.subr.mxu0 0.0
        %2762 = vmatpush1.msra.mxu0 0.0
        %2763 = vmatprep.subr.mxu0 0.0
        %2764 = vmatpush1.msra.mxu0 0.0
        %2765 = vmatprep.subr.mxu0 0.0
        %2766 = vmatpush1.msra.mxu0 0.0
        %2767 = vmatprep.subr.mxu0 0.0
        %2768 = vmatpush1.msra.mxu0 0.0
        %2769 = vmatprep.subr.mxu0 0.0
        %2770 = vmatpush1.msra.mxu0 0.0
        %2771 = vmatprep.subr.mxu0 0.0
        %2772 = vmatpush1.msra.mxu0 0.0
        %2773 = vmatprep.subr.mxu0 0.0
        %2774 = vmatpush1.msra.mxu0 0.0
        %2775 = vmatprep.subr.mxu0 0.0
        %2776 = vmatpush1.msra.mxu0 0.0
        %2777 = vmatprep.subr.mxu0 0.0
        %2778 = vmatpush1.msra.mxu0 0.0
        %2779 = vmatprep.subr.mxu0 0.0
        %2780 = vmatpush1.msra.mxu0 0.0
        %2781 = vmatprep.subr.mxu0 0.0
        %2782 = vmatpush1.msra.mxu0 0.0
        %2783 = vmatprep.subr.mxu0 0.0
        %2784 = vmatpush1.msra.mxu0 0.0
        %2785 = vmatprep.subr.mxu0 0.0
        %2786 = vmatpush1.msra.mxu0 0.0
        %2787 = vmatprep.subr.mxu0 0.0
        %2788 = vmatpush1.msra.mxu0 0.0
        %2789 = vmatprep.mubr.f32.mxu0 0.0
        %2790 = vmatmul.mubr.f32.gmra.mrb[0].mxu0 %v2720
        %v2791 = vpop.f32.mrb[0].mxu0
        %v2792 = vadd.f32 0.0, %v2791
        %v2793 = vpop.f32.mrb[0].mxu0
        %2794 = vmatprep.mubr.f32.mxu0 0.0
        %2795 = vmatmul.mubr.f32.gmra.mrb[0].mxu0 %v2723
        %v2796 = vpop.f32.mrb[0].mxu0
        %v2797 = vadd.f32 0.0, %v2796
        %v2798 = vpop.f32.mrb[0].mxu0
        %2799 = vdwg.mxu0
        %v2800 = vadd.f32 %v2514, %v2792
        %v2801 = vadd.f32 %v2515, %v2797
        %2802 = vrot.lane.b32.xlu0 %v2211, 112
        %v2803 = vpop.permute.xlu0 %2802
        %2804 = vrot.lane.b32.xlu0 %v2216, 112
        %v2805 = vpop.permute.xlu0 %2804
        %2806 = vrot.lane.b32.xlu0 %v2211, 80
        %v2807 = vpop.permute.xlu0 %2806
        %2808 = vrot.lane.b32.xlu0 %v2216, 80
        %v2809 = vpop.permute.xlu0 %2808
        %v2810 = vsel %vm733, %v2803, 0
        %v2812 = vsel %vm733, %v2805, 0
        %v2814 = vsel %vm733, %v2807, 0
        %v2816 = vsel %vm733, %v2809, 0
        %2818 = vmatprep.subr.mxu0 0.0
        %2819 = vmatpush1.xpose.msra.mxu0 %v2814
        %2820 = vmatprep.subr.mxu0 0.0
        %2821 = vmatpush1.xpose.msra.mxu0 %v2816
        %2822 = vmatprep.subr.mxu0 0.0
        %2823 = vmatpush1.xpose.msra.mxu0 0.0
        %2824 = vmatprep.subr.mxu0 0.0
        %2825 = vmatpush1.xpose.msra.mxu0 0.0
        %2826 = vmatprep.subr.mxu0 0.0
        %2827 = vmatpush1.xpose.msra.mxu0 0.0
        %2828 = vmatprep.subr.mxu0 0.0
        %2829 = vmatpush1.xpose.msra.mxu0 0.0
        %2830 = vmatprep.subr.mxu0 0.0
        %2831 = vmatpush1.xpose.msra.mxu0 0.0
        %2832 = vmatprep.subr.mxu0 0.0
        %2833 = vmatpush1.xpose.msra.mxu0 0.0
        %2834 = vmatprep.subr.mxu0 0.0
        %2835 = vmatpush1.xpose.msra.mxu0 0.0
        %2836 = vmatprep.subr.mxu0 0.0
        %2837 = vmatpush1.xpose.msra.mxu0 0.0
        %2838 = vmatprep.subr.mxu0 0.0
        %2839 = vmatpush1.xpose.msra.mxu0 0.0
        %2840 = vmatprep.subr.mxu0 0.0
        %2841 = vmatpush1.xpose.msra.mxu0 0.0
        %2842 = vmatprep.subr.mxu0 0.0
        %2843 = vmatpush1.xpose.msra.mxu0 0.0
        %2844 = vmatprep.subr.mxu0 0.0
        %2845 = vmatpush1.xpose.msra.mxu0 0.0
        %2846 = vmatprep.subr.mxu0 0.0
        %2847 = vmatpush1.xpose.msra.mxu0 0.0
        %2848 = vmatprep.subr.mxu0 0.0
        %2849 = vmatpush1.xpose.msra.mxu0 0.0
        %2850 = vmatprep.subr.mxu0 0.0
        %2851 = vmatpush1.xpose.msra.mxu0 0.0
        %2852 = vmatprep.subr.mxu0 0.0
        %2853 = vmatpush1.xpose.msra.mxu0 0.0
        %2854 = vmatprep.subr.mxu0 0.0
        %2855 = vmatpush1.xpose.msra.mxu0 0.0
        %2856 = vmatprep.subr.mxu0 0.0
        %2857 = vmatpush1.xpose.msra.mxu0 0.0
        %2858 = vmatprep.subr.mxu0 0.0
        %2859 = vmatpush1.xpose.msra.mxu0 0.0
        %2860 = vmatprep.subr.mxu0 0.0
        %2861 = vmatpush1.xpose.msra.mxu0 0.0
        %2862 = vmatprep.subr.mxu0 0.0
        %2863 = vmatpush1.xpose.msra.mxu0 0.0
        %2864 = vmatprep.subr.mxu0 0.0
        %2865 = vmatpush1.xpose.msra.mxu0 0.0
        %2866 = vmatprep.subr.mxu0 0.0
        %2867 = vmatpush1.xpose.msra.mxu0 0.0
        %2868 = vmatprep.subr.mxu0 0.0
        %2869 = vmatpush1.xpose.msra.mxu0 0.0
        %2870 = vmatprep.subr.mxu0 0.0
        %2871 = vmatpush1.xpose.msra.mxu0 0.0
        %2872 = vmatprep.subr.mxu0 0.0
        %2873 = vmatpush1.xpose.msra.mxu0 0.0
        %2874 = vmatprep.subr.mxu0 0.0
        %2875 = vmatpush1.xpose.msra.mxu0 0.0
        %2876 = vmatprep.subr.mxu0 0.0
        %2877 = vmatpush1.xpose.msra.mxu0 0.0
        %2878 = vmatprep.subr.mxu0 0.0
        %2879 = vmatpush1.xpose.msra.mxu0 0.0
        %2880 = vmatprep.subr.mxu0 0.0
        %2881 = vmatpush1.xpose.msra.mxu0 0.0
        %2882 = vmatprep.mubr.f32.mxu0 0.0
        %2883 = vmatmul.mubr.f32.gmra.mrb[0].mxu0 %v2810
        %v2884 = vpop.f32.mrb[0].mxu0
        %v2885 = vadd.f32 0.0, %v2884
        %v2886 = vpop.f32.mrb[0].mxu0
        %2887 = vmatprep.mubr.f32.mxu0 0.0
        %2888 = vmatmul.mubr.f32.gmra.mrb[0].mxu0 %v2812
        %v2889 = vpop.f32.mrb[0].mxu0
        %v2890 = vadd.f32 0.0, %v2889
        %v2891 = vpop.f32.mrb[0].mxu0
        %2892 = vdwg.mxu0
        %v2893 = vmul.f32 %v2885, 0.35355338
        %v2894 = vmul.f32 %v2890, 0.35355338
        %v2895 = vsel %vm819, %v2893, -inf
        %2896 = vmax.xlane.f32.xlu0 %v2895
        %v2897 = vpop.xlane.xlu0 %2896
        %v2898 = vsel %vm823, %v2894, -inf
        %2899 = vmax.xlane.f32.xlu0 %v2898
        %v2900 = vpop.xlane.xlu0 %2899
        %v2901 = vsub.f32 %v2893, %v2897
        %v2902 = vsub.f32 %v2894, %v2900
        %v2903 = vmul.f32 %v2901, 1.442695
        %v2904 = vpow.pop %v2903
        %v2905 = vmul.f32 %v2902, 1.442695
        %v2906 = vpow.pop %v2905
        %v2907 = vsel %vm819, %v2904, 0.0
        %2908 = vadd.xlane.f32.xlu0 %v2907
        %v2909 = vpop.xlane.xlu0 %2908
        %v2910 = vsel %vm823, %v2906, 0.0
        %2911 = vadd.xlane.f32.xlu0 %v2910
        %v2912 = vpop.xlane.xlu0 %2911
        %v2913 = vrcp.pop %v2909
        %v2914 = vrcp.pop %v2912
        %v2915 = vmul.f32 %v2904, %v2913
        %v2916 = vmul.f32 %v2906, %v2914
        %2917 = vrot.lane.b32.xlu0 %v2211, 48
        %v2918 = vpop.permute.xlu0 %2917
        %2919 = vrot.lane.b32.xlu0 %v2216, 48
        %v2920 = vpop.permute.xlu0 %2919
        %v2923 = vsel %vm819, %v2915, 0
        %v2926 = vsel %vm819, %v2916, 0
        %v2928 = vsel %vm522, %v2920, 0
        %2930 = vmatprep.subr.mxu0 0.0
        %2931 = vmatpush1.msra.mxu0 %v2918
        %2932 = vmatprep.subr.mxu0 0.0
        %2933 = vmatpush1.msra.mxu0 %v2928
        %2934 = vmatprep.subr.mxu0 0.0
        %2935 = vmatpush1.msra.mxu0 0.0
        %2936 = vmatprep.subr.mxu0 0.0
        %2937 = vmatpush1.msra.mxu0 0.0
        %2938 = vmatprep.subr.mxu0 0.0
        %2939 = vmatpush1.msra.mxu0 0.0
        %2940 = vmatprep.subr.mxu0 0.0
        %2941 = vmatpush1.msra.mxu0 0.0
        %2942 = vmatprep.subr.mxu0 0.0
        %2943 = vmatpush1.msra.mxu0 0.0
        %2944 = vmatprep.subr.mxu0 0.0
        %2945 = vmatpush1.msra.mxu0 0.0
        %2946 = vmatprep.subr.mxu0 0.0
        %2947 = vmatpush1.msra.mxu0 0.0
        %2948 = vmatprep.subr.mxu0 0.0
        %2949 = vmatpush1.msra.mxu0 0.0
        %2950 = vmatprep.subr.mxu0 0.0
        %2951 = vmatpush1.msra.mxu0 0.0
        %2952 = vmatprep.subr.mxu0 0.0
        %2953 = vmatpush1.msra.mxu0 0.0
        %2954 = vmatprep.subr.mxu0 0.0
        %2955 = vmatpush1.msra.mxu0 0.0
        %2956 = vmatprep.subr.mxu0 0.0
        %2957 = vmatpush1.msra.mxu0 0.0
        %2958 = vmatprep.subr.mxu0 0.0
        %2959 = vmatpush1.msra.mxu0 0.0
        %2960 = vmatprep.subr.mxu0 0.0
        %2961 = vmatpush1.msra.mxu0 0.0
        %2962 = vmatprep.subr.mxu0 0.0
        %2963 = vmatpush1.msra.mxu0 0.0
        %2964 = vmatprep.subr.mxu0 0.0
        %2965 = vmatpush1.msra.mxu0 0.0
        %2966 = vmatprep.subr.mxu0 0.0
        %2967 = vmatpush1.msra.mxu0 0.0
        %2968 = vmatprep.subr.mxu0 0.0
        %2969 = vmatpush1.msra.mxu0 0.0
        %2970 = vmatprep.subr.mxu0 0.0
        %2971 = vmatpush1.msra.mxu0 0.0
        %2972 = vmatprep.subr.mxu0 0.0
        %2973 = vmatpush1.msra.mxu0 0.0
        %2974 = vmatprep.subr.mxu0 0.0
        %2975 = vmatpush1.msra.mxu0 0.0
        %2976 = vmatprep.subr.mxu0 0.0
        %2977 = vmatpush1.msra.mxu0 0.0
        %2978 = vmatprep.subr.mxu0 0.0
        %2979 = vmatpush1.msra.mxu0 0.0
        %2980 = vmatprep.subr.mxu0 0.0
        %2981 = vmatpush1.msra.mxu0 0.0
        %2982 = vmatprep.subr.mxu0 0.0
        %2983 = vmatpush1.msra.mxu0 0.0
        %2984 = vmatprep.subr.mxu0 0.0
        %2985 = vmatpush1.msra.mxu0 0.0
        %2986 = vmatprep.subr.mxu0 0.0
        %2987 = vmatpush1.msra.mxu0 0.0
        %2988 = vmatprep.subr.mxu0 0.0
        %2989 = vmatpush1.msra.mxu0 0.0
        %2990 = vmatprep.subr.mxu0 0.0
        %2991 = vmatpush1.msra.mxu0 0.0
        %2992 = vmatprep.subr.mxu0 0.0
        %2993 = vmatpush1.msra.mxu0 0.0
        %2994 = vmatprep.mubr.f32.mxu0 0.0
        %2995 = vmatmul.mubr.f32.gmra.mrb[0].mxu0 %v2923
        %v2996 = vpop.f32.mrb[0].mxu0
        %v2997 = vadd.f32 0.0, %v2996
        %v2998 = vpop.f32.mrb[0].mxu0
        %2999 = vmatprep.mubr.f32.mxu0 0.0
        %3000 = vmatmul.mubr.f32.gmra.mrb[0].mxu0 %v2926
        %v3001 = vpop.f32.mrb[0].mxu0
        %v3002 = vadd.f32 0.0, %v3001
        %v3003 = vpop.f32.mrb[0].mxu0
        %3004 = vdwg.mxu0
        %v3006 = vsel %vm733, %v2997, 0
        %v3009 = vsel %vm733, %v3002, 0
        %3011 = vmatprep.subr.mxu0 0.0
        %3012 = vmatpush1.msra.mxu0 %v2222
        %3013 = vmatprep.subr.mxu0 0.0
        %3014 = vmatpush1.msra.mxu0 0.0
        %3015 = vmatprep.subr.mxu0 0.0
        %3016 = vmatpush1.msra.mxu0 0.0
        %3017 = vmatprep.subr.mxu0 0.0
        %3018 = vmatpush1.msra.mxu0 0.0
        %3019 = vmatprep.subr.mxu0 0.0
        %3020 = vmatpush1.msra.mxu0 0.0
        %3021 = vmatprep.subr.mxu0 0.0
        %3022 = vmatpush1.msra.mxu0 0.0
        %3023 = vmatprep.subr.mxu0 0.0
        %3024 = vmatpush1.msra.mxu0 0.0
        %3025 = vmatprep.subr.mxu0 0.0
        %3026 = vmatpush1.msra.mxu0 0.0
        %3027 = vmatprep.subr.mxu0 0.0
        %3028 = vmatpush1.msra.mxu0 0.0
        %3029 = vmatprep.subr.mxu0 0.0
        %3030 = vmatpush1.msra.mxu0 0.0
        %3031 = vmatprep.subr.mxu0 0.0
        %3032 = vmatpush1.msra.mxu0 0.0
        %3033 = vmatprep.subr.mxu0 0.0
        %3034 = vmatpush1.msra.mxu0 0.0
        %3035 = vmatprep.subr.mxu0 0.0
        %3036 = vmatpush1.msra.mxu0 0.0
        %3037 = vmatprep.subr.mxu0 0.0
        %3038 = vmatpush1.msra.mxu0 0.0
        %3039 = vmatprep.subr.mxu0 0.0
        %3040 = vmatpush1.msra.mxu0 0.0
        %3041 = vmatprep.subr.mxu0 0.0
        %3042 = vmatpush1.msra.mxu0 0.0
        %3043 = vmatprep.subr.mxu0 0.0
        %3044 = vmatpush1.msra.mxu0 0.0
        %3045 = vmatprep.subr.mxu0 0.0
        %3046 = vmatpush1.msra.mxu0 0.0
        %3047 = vmatprep.subr.mxu0 0.0
        %3048 = vmatpush1.msra.mxu0 0.0
        %3049 = vmatprep.subr.mxu0 0.0
        %3050 = vmatpush1.msra.mxu0 0.0
        %3051 = vmatprep.subr.mxu0 0.0
        %3052 = vmatpush1.msra.mxu0 0.0
        %3053 = vmatprep.subr.mxu0 0.0
        %3054 = vmatpush1.msra.mxu0 0.0
        %3055 = vmatprep.subr.mxu0 0.0
        %3056 = vmatpush1.msra.mxu0 0.0
        %3057 = vmatprep.subr.mxu0 0.0
        %3058 = vmatpush1.msra.mxu0 0.0
        %3059 = vmatprep.subr.mxu0 0.0
        %3060 = vmatpush1.msra.mxu0 0.0
        %3061 = vmatprep.subr.mxu0 0.0
        %3062 = vmatpush1.msra.mxu0 0.0
        %3063 = vmatprep.subr.mxu0 0.0
        %3064 = vmatpush1.msra.mxu0 0.0
        %3065 = vmatprep.subr.mxu0 0.0
        %3066 = vmatpush1.msra.mxu0 0.0
        %3067 = vmatprep.subr.mxu0 0.0
        %3068 = vmatpush1.msra.mxu0 0.0
        %3069 = vmatprep.subr.mxu0 0.0
        %3070 = vmatpush1.msra.mxu0 0.0
        %3071 = vmatprep.subr.mxu0 0.0
        %3072 = vmatpush1.msra.mxu0 0.0
        %3073 = vmatprep.subr.mxu0 0.0
        %3074 = vmatpush1.msra.mxu0 0.0
        %3075 = vmatprep.mubr.f32.mxu0 0.0
        %3076 = vmatmul.mubr.f32.gmra.mrb[0].mxu0 %v3006
        %v3077 = vpop.f32.mrb[0].mxu0
        %v3078 = vadd.f32 0.0, %v3077
        %v3079 = vpop.f32.mrb[0].mxu0
        %3080 = vmatprep.mubr.f32.mxu0 0.0
        %3081 = vmatmul.mubr.f32.gmra.mrb[0].mxu0 %v3009
        %v3082 = vpop.f32.mrb[0].mxu0
        %v3083 = vadd.f32 0.0, %v3082
        %v3084 = vpop.f32.mrb[0].mxu0
        %3085 = vdwg.mxu0
        %v3086 = vadd.f32 %v2800, %v3078
        %v3087 = vadd.f32 %v2801, %v3083
        %3088 = vrot.lane.b32.xlu0 %v2211, 104
        %v3089 = vpop.permute.xlu0 %3088
        %3090 = vrot.lane.b32.xlu0 %v2216, 104
        %v3091 = vpop.permute.xlu0 %3090
        %3092 = vrot.lane.b32.xlu0 %v2211, 72
        %v3093 = vpop.permute.xlu0 %3092
        %3094 = vrot.lane.b32.xlu0 %v2216, 72
        %v3095 = vpop.permute.xlu0 %3094
        %v3096 = vsel %vm733, %v3089, 0
        %v3098 = vsel %vm733, %v3091, 0
        %v3100 = vsel %vm733, %v3093, 0
        %v3102 = vsel %vm733, %v3095, 0
        %3104 = vmatprep.subr.mxu0 0.0
        %3105 = vmatpush1.xpose.msra.mxu0 %v3100
        %3106 = vmatprep.subr.mxu0 0.0
        %3107 = vmatpush1.xpose.msra.mxu0 %v3102
        %3108 = vmatprep.subr.mxu0 0.0
        %3109 = vmatpush1.xpose.msra.mxu0 0.0
        %3110 = vmatprep.subr.mxu0 0.0
        %3111 = vmatpush1.xpose.msra.mxu0 0.0
        %3112 = vmatprep.subr.mxu0 0.0
        %3113 = vmatpush1.xpose.msra.mxu0 0.0
        %3114 = vmatprep.subr.mxu0 0.0
        %3115 = vmatpush1.xpose.msra.mxu0 0.0
        %3116 = vmatprep.subr.mxu0 0.0
        %3117 = vmatpush1.xpose.msra.mxu0 0.0
        %3118 = vmatprep.subr.mxu0 0.0
        %3119 = vmatpush1.xpose.msra.mxu0 0.0
        %3120 = vmatprep.subr.mxu0 0.0
        %3121 = vmatpush1.xpose.msra.mxu0 0.0
        %3122 = vmatprep.subr.mxu0 0.0
        %3123 = vmatpush1.xpose.msra.mxu0 0.0
        %3124 = vmatprep.subr.mxu0 0.0
        %3125 = vmatpush1.xpose.msra.mxu0 0.0
        %3126 = vmatprep.subr.mxu0 0.0
        %3127 = vmatpush1.xpose.msra.mxu0 0.0
        %3128 = vmatprep.subr.mxu0 0.0
        %3129 = vmatpush1.xpose.msra.mxu0 0.0
        %3130 = vmatprep.subr.mxu0 0.0
        %3131 = vmatpush1.xpose.msra.mxu0 0.0
        %3132 = vmatprep.subr.mxu0 0.0
        %3133 = vmatpush1.xpose.msra.mxu0 0.0
        %3134 = vmatprep.subr.mxu0 0.0
        %3135 = vmatpush1.xpose.msra.mxu0 0.0
        %3136 = vmatprep.subr.mxu0 0.0
        %3137 = vmatpush1.xpose.msra.mxu0 0.0
        %3138 = vmatprep.subr.mxu0 0.0
        %3139 = vmatpush1.xpose.msra.mxu0 0.0
        %3140 = vmatprep.subr.mxu0 0.0
        %3141 = vmatpush1.xpose.msra.mxu0 0.0
        %3142 = vmatprep.subr.mxu0 0.0
        %3143 = vmatpush1.xpose.msra.mxu0 0.0
        %3144 = vmatprep.subr.mxu0 0.0
        %3145 = vmatpush1.xpose.msra.mxu0 0.0
        %3146 = vmatprep.subr.mxu0 0.0
        %3147 = vmatpush1.xpose.msra.mxu0 0.0
        %3148 = vmatprep.subr.mxu0 0.0
        %3149 = vmatpush1.xpose.msra.mxu0 0.0
        %3150 = vmatprep.subr.mxu0 0.0
        %3151 = vmatpush1.xpose.msra.mxu0 0.0
        %3152 = vmatprep.subr.mxu0 0.0
        %3153 = vmatpush1.xpose.msra.mxu0 0.0
        %3154 = vmatprep.subr.mxu0 0.0
        %3155 = vmatpush1.xpose.msra.mxu0 0.0
        %3156 = vmatprep.subr.mxu0 0.0
        %3157 = vmatpush1.xpose.msra.mxu0 0.0
        %3158 = vmatprep.subr.mxu0 0.0
        %3159 = vmatpush1.xpose.msra.mxu0 0.0
        %3160 = vmatprep.subr.mxu0 0.0
        %3161 = vmatpush1.xpose.msra.mxu0 0.0
        %3162 = vmatprep.subr.mxu0 0.0
        %3163 = vmatpush1.xpose.msra.mxu0 0.0
        %3164 = vmatprep.subr.mxu0 0.0
        %3165 = vmatpush1.xpose.msra.mxu0 0.0
        %3166 = vmatprep.subr.mxu0 0.0
        %3167 = vmatpush1.xpose.msra.mxu0 0.0
        %3168 = vmatprep.mubr.f32.mxu0 0.0
        %3169 = vmatmul.mubr.f32.gmra.mrb[0].mxu0 %v3096
        %v3170 = vpop.f32.mrb[0].mxu0
        %v3171 = vadd.f32 0.0, %v3170
        %v3172 = vpop.f32.mrb[0].mxu0
        %3173 = vmatprep.mubr.f32.mxu0 0.0
        %3174 = vmatmul.mubr.f32.gmra.mrb[0].mxu0 %v3098
        %v3175 = vpop.f32.mrb[0].mxu0
        %v3176 = vadd.f32 0.0, %v3175
        %v3177 = vpop.f32.mrb[0].mxu0
        %3178 = vdwg.mxu0
        %v3179 = vmul.f32 %v3171, 0.35355338
        %v3180 = vmul.f32 %v3176, 0.35355338
        %v3181 = vsel %vm819, %v3179, -inf
        %3182 = vmax.xlane.f32.xlu0 %v3181
        %v3183 = vpop.xlane.xlu0 %3182
        %v3184 = vsel %vm823, %v3180, -inf
        %3185 = vmax.xlane.f32.xlu0 %v3184
        %v3186 = vpop.xlane.xlu0 %3185
        %v3187 = vsub.f32 %v3179, %v3183
        %v3188 = vsub.f32 %v3180, %v3186
        %v3189 = vmul.f32 %v3187, 1.442695
        %v3190 = vpow.pop %v3189
        %v3191 = vmul.f32 %v3188, 1.442695
        %v3192 = vpow.pop %v3191
        %v3193 = vsel %vm819, %v3190, 0.0
        %3194 = vadd.xlane.f32.xlu0 %v3193
        %v3195 = vpop.xlane.xlu0 %3194
        %v3196 = vsel %vm823, %v3192, 0.0
        %3197 = vadd.xlane.f32.xlu0 %v3196
        %v3198 = vpop.xlane.xlu0 %3197
        %v3199 = vrcp.pop %v3195
        %v3200 = vrcp.pop %v3198
        %v3201 = vmul.f32 %v3190, %v3199
        %v3202 = vmul.f32 %v3192, %v3200
        %3203 = vrot.lane.b32.xlu0 %v2211, 40
        %v3204 = vpop.permute.xlu0 %3203
        %3205 = vrot.lane.b32.xlu0 %v2216, 40
        %v3206 = vpop.permute.xlu0 %3205
        %v3209 = vsel %vm819, %v3201, 0
        %v3212 = vsel %vm819, %v3202, 0
        %v3214 = vsel %vm522, %v3206, 0
        %3216 = vmatprep.subr.mxu0 0.0
        %3217 = vmatpush1.msra.mxu0 %v3204
        %3218 = vmatprep.subr.mxu0 0.0
        %3219 = vmatpush1.msra.mxu0 %v3214
        %3220 = vmatprep.subr.mxu0 0.0
        %3221 = vmatpush1.msra.mxu0 0.0
        %3222 = vmatprep.subr.mxu0 0.0
        %3223 = vmatpush1.msra.mxu0 0.0
        %3224 = vmatprep.subr.mxu0 0.0
        %3225 = vmatpush1.msra.mxu0 0.0
        %3226 = vmatprep.subr.mxu0 0.0
        %3227 = vmatpush1.msra.mxu0 0.0
        %3228 = vmatprep.subr.mxu0 0.0
        %3229 = vmatpush1.msra.mxu0 0.0
        %3230 = vmatprep.subr.mxu0 0.0
        %3231 = vmatpush1.msra.mxu0 0.0
        %3232 = vmatprep.subr.mxu0 0.0
        %3233 = vmatpush1.msra.mxu0 0.0
        %3234 = vmatprep.subr.mxu0 0.0
        %3235 = vmatpush1.msra.mxu0 0.0
        %3236 = vmatprep.subr.mxu0 0.0
        %3237 = vmatpush1.msra.mxu0 0.0
        %3238 = vmatprep.subr.mxu0 0.0
        %3239 = vmatpush1.msra.mxu0 0.0
        %3240 = vmatprep.subr.mxu0 0.0
        %3241 = vmatpush1.msra.mxu0 0.0
        %3242 = vmatprep.subr.mxu0 0.0
        %3243 = vmatpush1.msra.mxu0 0.0
        %3244 = vmatprep.subr.mxu0 0.0
        %3245 = vmatpush1.msra.mxu0 0.0
        %3246 = vmatprep.subr.mxu0 0.0
        %3247 = vmatpush1.msra.mxu0 0.0
        %3248 = vmatprep.subr.mxu0 0.0
        %3249 = vmatpush1.msra.mxu0 0.0
        %3250 = vmatprep.subr.mxu0 0.0
        %3251 = vmatpush1.msra.mxu0 0.0
        %3252 = vmatprep.subr.mxu0 0.0
        %3253 = vmatpush1.msra.mxu0 0.0
        %3254 = vmatprep.subr.mxu0 0.0
        %3255 = vmatpush1.msra.mxu0 0.0
        %3256 = vmatprep.subr.mxu0 0.0
        %3257 = vmatpush1.msra.mxu0 0.0
        %3258 = vmatprep.subr.mxu0 0.0
        %3259 = vmatpush1.msra.mxu0 0.0
        %3260 = vmatprep.subr.mxu0 0.0
        %3261 = vmatpush1.msra.mxu0 0.0
        %3262 = vmatprep.subr.mxu0 0.0
        %3263 = vmatpush1.msra.mxu0 0.0
        %3264 = vmatprep.subr.mxu0 0.0
        %3265 = vmatpush1.msra.mxu0 0.0
        %3266 = vmatprep.subr.mxu0 0.0
        %3267 = vmatpush1.msra.mxu0 0.0
        %3268 = vmatprep.subr.mxu0 0.0
        %3269 = vmatpush1.msra.mxu0 0.0
        %3270 = vmatprep.subr.mxu0 0.0
        %3271 = vmatpush1.msra.mxu0 0.0
        %3272 = vmatprep.subr.mxu0 0.0
        %3273 = vmatpush1.msra.mxu0 0.0
        %3274 = vmatprep.subr.mxu0 0.0
        %3275 = vmatpush1.msra.mxu0 0.0
        %3276 = vmatprep.subr.mxu0 0.0
        %3277 = vmatpush1.msra.mxu0 0.0
        %3278 = vmatprep.subr.mxu0 0.0
        %3279 = vmatpush1.msra.mxu0 0.0
        %3280 = vmatprep.mubr.f32.mxu0 0.0
        %3281 = vmatmul.mubr.f32.gmra.mrb[0].mxu0 %v3209
        %v3282 = vpop.f32.mrb[0].mxu0
        %v3283 = vadd.f32 0.0, %v3282
        %v3284 = vpop.f32.mrb[0].mxu0
        %3285 = vmatprep.mubr.f32.mxu0 0.0
        %3286 = vmatmul.mubr.f32.gmra.mrb[0].mxu0 %v3212
        %v3287 = vpop.f32.mrb[0].mxu0
        %v3288 = vadd.f32 0.0, %v3287
        %v3289 = vpop.f32.mrb[0].mxu0
        %3290 = vdwg.mxu0
        %v3292 = vsel %vm733, %v3283, 0
        %v3295 = vsel %vm733, %v3288, 0
        %3297 = vmatprep.subr.mxu0 0.0
        %3298 = vmatpush1.msra.mxu0 %v2223
        %3299 = vmatprep.subr.mxu0 0.0
        %3300 = vmatpush1.msra.mxu0 0.0
        %3301 = vmatprep.subr.mxu0 0.0
        %3302 = vmatpush1.msra.mxu0 0.0
        %3303 = vmatprep.subr.mxu0 0.0
        %3304 = vmatpush1.msra.mxu0 0.0
        %3305 = vmatprep.subr.mxu0 0.0
        %3306 = vmatpush1.msra.mxu0 0.0
        %3307 = vmatprep.subr.mxu0 0.0
        %3308 = vmatpush1.msra.mxu0 0.0
        %3309 = vmatprep.subr.mxu0 0.0
        %3310 = vmatpush1.msra.mxu0 0.0
        %3311 = vmatprep.subr.mxu0 0.0
        %3312 = vmatpush1.msra.mxu0 0.0
        %3313 = vmatprep.subr.mxu0 0.0
        %3314 = vmatpush1.msra.mxu0 0.0
        %3315 = vmatprep.subr.mxu0 0.0
        %3316 = vmatpush1.msra.mxu0 0.0
        %3317 = vmatprep.subr.mxu0 0.0
        %3318 = vmatpush1.msra.mxu0 0.0
        %3319 = vmatprep.subr.mxu0 0.0
        %3320 = vmatpush1.msra.mxu0 0.0
        %3321 = vmatprep.subr.mxu0 0.0
        %3322 = vmatpush1.msra.mxu0 0.0
        %3323 = vmatprep.subr.mxu0 0.0
        %3324 = vmatpush1.msra.mxu0 0.0
        %3325 = vmatprep.subr.mxu0 0.0
        %3326 = vmatpush1.msra.mxu0 0.0
        %3327 = vmatprep.subr.mxu0 0.0
        %3328 = vmatpush1.msra.mxu0 0.0
        %3329 = vmatprep.subr.mxu0 0.0
        %3330 = vmatpush1.msra.mxu0 0.0
        %3331 = vmatprep.subr.mxu0 0.0
        %3332 = vmatpush1.msra.mxu0 0.0
        %3333 = vmatprep.subr.mxu0 0.0
        %3334 = vmatpush1.msra.mxu0 0.0
        %3335 = vmatprep.subr.mxu0 0.0
        %3336 = vmatpush1.msra.mxu0 0.0
        %3337 = vmatprep.subr.mxu0 0.0
        %3338 = vmatpush1.msra.mxu0 0.0
        %3339 = vmatprep.subr.mxu0 0.0
        %3340 = vmatpush1.msra.mxu0 0.0
        %3341 = vmatprep.subr.mxu0 0.0
        %3342 = vmatpush1.msra.mxu0 0.0
        %3343 = vmatprep.subr.mxu0 0.0
        %3344 = vmatpush1.msra.mxu0 0.0
        %3345 = vmatprep.subr.mxu0 0.0
        %3346 = vmatpush1.msra.mxu0 0.0
        %3347 = vmatprep.subr.mxu0 0.0
        %3348 = vmatpush1.msra.mxu0 0.0
        %3349 = vmatprep.subr.mxu0 0.0
        %3350 = vmatpush1.msra.mxu0 0.0
        %3351 = vmatprep.subr.mxu0 0.0
        %3352 = vmatpush1.msra.mxu0 0.0
        %3353 = vmatprep.subr.mxu0 0.0
        %3354 = vmatpush1.msra.mxu0 0.0
        %3355 = vmatprep.subr.mxu0 0.0
        %3356 = vmatpush1.msra.mxu0 0.0
        %3357 = vmatprep.subr.mxu0 0.0
        %3358 = vmatpush1.msra.mxu0 0.0
        %3359 = vmatprep.subr.mxu0 0.0
        %3360 = vmatpush1.msra.mxu0 0.0
        %3361 = vmatprep.mubr.f32.mxu0 0.0
        %3362 = vmatmul.mubr.f32.gmra.mrb[0].mxu0 %v3292
        %v3363 = vpop.f32.mrb[0].mxu0
        %v3364 = vadd.f32 0.0, %v3363
        %v3365 = vpop.f32.mrb[0].mxu0
        %3366 = vmatprep.mubr.f32.mxu0 0.0
        %3367 = vmatmul.mubr.f32.gmra.mrb[0].mxu0 %v3295
        %v3368 = vpop.f32.mrb[0].mxu0
        %v3369 = vadd.f32 0.0, %v3368
        %v3370 = vpop.f32.mrb[0].mxu0
        %3371 = vdwg.mxu0
        %v3372 = vadd.f32 %v3086, %v3364
        %v3373 = vadd.f32 %v3087, %v3369
        %v3374 = vadd.f32 %v2097, %v3372
        %v3375 = vadd.f32 %v2098, %v3373
        %v3376 = vsel %vm601, %v3374, 0.0
        %3377 = vadd.xlane.f32.xlu0 %v3376
        %v3378 = vpop.xlane.xlu0 %3377
        %v3379 = vsel %vm605, %v3375, 0.0
        %3380 = vadd.xlane.f32.xlu0 %v3379
        %v3381 = vpop.xlane.xlu0 %3380
        %v3382 = vmul.f32 %v3378, %v609
        %v3383 = vmul.f32 %v3381, %v609
        %v3384 = vsub.f32 %v3374, %v3382
        %v3385 = vsub.f32 %v3375, %v3383
        %v3386 = vmul.f32 %v3384, %v3384
        %v3387 = vmul.f32 %v3385, %v3385
        %v3388 = vsel %vm601, %v3386, 0.0
        %3389 = vadd.xlane.f32.xlu0 %v3388
        %v3390 = vpop.xlane.xlu0 %3389
        %v3391 = vsel %vm605, %v3387, 0.0
        %3392 = vadd.xlane.f32.xlu0 %v3391
        %v3393 = vpop.xlane.xlu0 %3392
        %v3394 = vmul.f32 %v3390, %v609
        %v3395 = vmul.f32 %v3393, %v609
        %v3396 = vadd.f32 %v3394, 1e-05
        %v3397 = vadd.f32 %v3395, 1e-05
        %v3398 = vrsqrt.pop %v3396
        %v3399 = vrsqrt.pop %v3397
        %v3400 = vmul.f32 %v3384, %v3398
        %v3401 = vmul.f32 %v3385, %v3399
        %s3402 = scalar_lea.vmem %s7, 32
        %v3403 = vld [vmem:[%s3402] sm:$0xff]
        %v3404 = vld [vmem:[%s3402 + $0x8] sm:$0xff]
        %v3405 = vld [vmem:[%s3402 + $0x10] sm:$0xff]
        %v3406 = vld [vmem:[%s3402 + $0x18] sm:$0xff]
        %s3407 = scalar_lea.vmem %s8, 1
        %v3408 = vld [vmem:[%s3407] sm:$0x1]
        %v3410 = vlaneseq
        %v3411 = vshrl.u32 %v3410, 7
        %v3412 = vsub.s32 0, %v3411
        %v3413 = vrot.slane %v3408, %v3412
        %v3416 = vsel %vm601, %v3400, 0
        %v3419 = vsel %vm601, %v3401, 0
        %3421 = vmatprep.subr.mxu0 0.0
        %3422 = vmatpush1.msra.mxu0 %v3403
        %3423 = vmatprep.subr.mxu0 0.0
        %3424 = vmatpush1.msra.mxu0 %v3404
        %3425 = vmatprep.subr.mxu0 0.0
        %3426 = vmatpush1.msra.mxu0 %v3405
        %3427 = vmatprep.subr.mxu0 0.0
        %3428 = vmatpush1.msra.mxu0 %v3406
        %3429 = vmatprep.subr.mxu0 0.0
        %3430 = vmatpush1.msra.mxu0 0.0
        %3431 = vmatprep.subr.mxu0 0.0
        %3432 = vmatpush1.msra.mxu0 0.0
        %3433 = vmatprep.subr.mxu0 0.0
        %3434 = vmatpush1.msra.mxu0 0.0
        %3435 = vmatprep.subr.mxu0 0.0
        %3436 = vmatpush1.msra.mxu0 0.0
        %3437 = vmatprep.subr.mxu0 0.0
        %3438 = vmatpush1.msra.mxu0 0.0
        %3439 = vmatprep.subr.mxu0 0.0
        %3440 = vmatpush1.msra.mxu0 0.0
        %3441 = vmatprep.subr.mxu0 0.0
        %3442 = vmatpush1.msra.mxu0 0.0
        %3443 = vmatprep.subr.mxu0 0.0
        %3444 = vmatpush1.msra.mxu0 0.0
        %3445 = vmatprep.subr.mxu0 0.0
        %3446 = vmatpush1.msra.mxu0 0.0
        %3447 = vmatprep.subr.mxu0 0.0
        %3448 = vmatpush1.msra.mxu0 0.0
        %3449 = vmatprep.subr.mxu0 0.0
        %3450 = vmatpush1.msra.mxu0 0.0
        %3451 = vmatprep.subr.mxu0 0.0
        %3452 = vmatpush1.msra.mxu0 0.0
        %3453 = vmatprep.subr.mxu0 0.0
        %3454 = vmatpush1.msra.mxu0 0.0
        %3455 = vmatprep.subr.mxu0 0.0
        %3456 = vmatpush1.msra.mxu0 0.0
        %3457 = vmatprep.subr.mxu0 0.0
        %3458 = vmatpush1.msra.mxu0 0.0
        %3459 = vmatprep.subr.mxu0 0.0
        %3460 = vmatpush1.msra.mxu0 0.0
        %3461 = vmatprep.subr.mxu0 0.0
        %3462 = vmatpush1.msra.mxu0 0.0
        %3463 = vmatprep.subr.mxu0 0.0
        %3464 = vmatpush1.msra.mxu0 0.0
        %3465 = vmatprep.subr.mxu0 0.0
        %3466 = vmatpush1.msra.mxu0 0.0
        %3467 = vmatprep.subr.mxu0 0.0
        %3468 = vmatpush1.msra.mxu0 0.0
        %3469 = vmatprep.subr.mxu0 0.0
        %3470 = vmatpush1.msra.mxu0 0.0
        %3471 = vmatprep.subr.mxu0 0.0
        %3472 = vmatpush1.msra.mxu0 0.0
        %3473 = vmatprep.subr.mxu0 0.0
        %3474 = vmatpush1.msra.mxu0 0.0
        %3475 = vmatprep.subr.mxu0 0.0
        %3476 = vmatpush1.msra.mxu0 0.0
        %3477 = vmatprep.subr.mxu0 0.0
        %3478 = vmatpush1.msra.mxu0 0.0
        %3479 = vmatprep.subr.mxu0 0.0
        %3480 = vmatpush1.msra.mxu0 0.0
        %3481 = vmatprep.subr.mxu0 0.0
        %3482 = vmatpush1.msra.mxu0 0.0
        %3483 = vmatprep.subr.mxu0 0.0
        %3484 = vmatpush1.msra.mxu0 0.0
        %3485 = vmatprep.mubr.f32.mxu0 0.0
        %3486 = vmatmul.mubr.f32.gmra.mrb[0].mxu0 %v3416
        %v3487 = vpop.f32.mrb[0].mxu0
        %v3488 = vadd.f32 %v3413, %v3487
        %v3489 = vpop.f32.mrb[0].mxu0
        %3490 = vmatprep.mubr.f32.mxu0 0.0
        %3491 = vmatmul.mubr.f32.gmra.mrb[0].mxu0 %v3419
        %v3492 = vpop.f32.mrb[0].mxu0
        %v3493 = vadd.f32 %v3413, %v3492
        %v3494 = vpop.f32.mrb[0].mxu0
        %3495 = vdwg.mxu0
        %v3496 = vmax.f32 %v3488, 0.0
        %v3497 = vmax.f32 %v3493, 0.0
        %s3498 = scalar_lea.vmem %s9, 64
        %v3499 = vld [vmem:[%s3498] sm:$0xff]
        %v3500 = vld [vmem:[%s3498 + $0x8] sm:$0xff]
        %v3501 = vld [vmem:[%s3498 + $0x10] sm:$0xff]
        %v3502 = vld [vmem:[%s3498 + $0x18] sm:$0xff]
        %v3503 = vld [vmem:[%s3498 + $0x20] sm:$0xff]
        %v3504 = vld [vmem:[%s3498 + $0x28] sm:$0xff]
        %v3505 = vld [vmem:[%s3498 + $0x30] sm:$0xff]
        %v3506 = vld [vmem:[%s3498 + $0x38] sm:$0xff]
        %s3507 = scalar_lea.vmem %s10, 1
        %v3508 = vld [vmem:[%s3507] sm:$0x1]
        %v3510 = vlaneseq
        %v3511 = vshrl.u32 %v3510, 7
        %v3512 = vsub.s32 0, %v3511
        %v3513 = vrot.slane %v3508, %v3512
        %v3516 = vsel %vm2015, %v3496, 0
        %v3519 = vsel %vm2015, %v3497, 0
        %3521 = vmatprep.subr.mxu0 0.0
        %3522 = vmatpush1.msra.mxu0 %v3499
        %3523 = vmatprep.subr.mxu0 0.0
        %3524 = vmatpush1.msra.mxu0 %v3500
        %3525 = vmatprep.subr.mxu0 0.0
        %3526 = vmatpush1.msra.mxu0 %v3501
        %3527 = vmatprep.subr.mxu0 0.0
        %3528 = vmatpush1.msra.mxu0 %v3502
        %3529 = vmatprep.subr.mxu0 0.0
        %3530 = vmatpush1.msra.mxu0 %v3503
        %3531 = vmatprep.subr.mxu0 0.0
        %3532 = vmatpush1.msra.mxu0 %v3504
        %3533 = vmatprep.subr.mxu0 0.0
        %3534 = vmatpush1.msra.mxu0 %v3505
        %3535 = vmatprep.subr.mxu0 0.0
        %3536 = vmatpush1.msra.mxu0 %v3506
        %3537 = vmatprep.subr.mxu0 0.0
        %3538 = vmatpush1.msra.mxu0 0.0
        %3539 = vmatprep.subr.mxu0 0.0
        %3540 = vmatpush1.msra.mxu0 0.0
        %3541 = vmatprep.subr.mxu0 0.0
        %3542 = vmatpush1.msra.mxu0 0.0
        %3543 = vmatprep.subr.mxu0 0.0
        %3544 = vmatpush1.msra.mxu0 0.0
        %3545 = vmatprep.subr.mxu0 0.0
        %3546 = vmatpush1.msra.mxu0 0.0
        %3547 = vmatprep.subr.mxu0 0.0
        %3548 = vmatpush1.msra.mxu0 0.0
        %3549 = vmatprep.subr.mxu0 0.0
        %3550 = vmatpush1.msra.mxu0 0.0
        %3551 = vmatprep.subr.mxu0 0.0
        %3552 = vmatpush1.msra.mxu0 0.0
        %3553 = vmatprep.subr.mxu0 0.0
        %3554 = vmatpush1.msra.mxu0 0.0
        %3555 = vmatprep.subr.mxu0 0.0
        %3556 = vmatpush1.msra.mxu0 0.0
        %3557 = vmatprep.subr.mxu0 0.0
        %3558 = vmatpush1.msra.mxu0 0.0
        %3559 = vmatprep.subr.mxu0 0.0
        %3560 = vmatpush1.msra.mxu0 0.0
        %3561 = vmatprep.subr.mxu0 0.0
        %3562 = vmatpush1.msra.mxu0 0.0
        %3563 = vmatprep.subr.mxu0 0.0
        %3564 = vmatpush1.msra.mxu0 0.0
        %3565 = vmatprep.subr.mxu0 0.0
        %3566 = vmatpush1.msra.mxu0 0.0
        %3567 = vmatprep.subr.mxu0 0.0
        %3568 = vmatpush1.msra.mxu0 0.0
        %3569 = vmatprep.subr.mxu0 0.0
        %3570 = vmatpush1.msra.mxu0 0.0
        %3571 = vmatprep.subr.mxu0 0.0
        %3572 = vmatpush1.msra.mxu0 0.0
        %3573 = vmatprep.subr.mxu0 0.0
        %3574 = vmatpush1.msra.mxu0 0.0
        %3575 = vmatprep.subr.mxu0 0.0
        %3576 = vmatpush1.msra.mxu0 0.0
        %3577 = vmatprep.subr.mxu0 0.0
        %3578 = vmatpush1.msra.mxu0 0.0
        %3579 = vmatprep.subr.mxu0 0.0
        %3580 = vmatpush1.msra.mxu0 0.0
        %3581 = vmatprep.subr.mxu0 0.0
        %3582 = vmatpush1.msra.mxu0 0.0
        %3583 = vmatprep.subr.mxu0 0.0
        %3584 = vmatpush1.msra.mxu0 0.0
        %3585 = vmatprep.mubr.f32.mxu0 0.0
        %3586 = vmatmul.mubr.f32.gmra.mrb[0].mxu0 %v3516
        %v3587 = vpop.f32.mrb[0].mxu0
        %v3588 = vadd.f32 %v3513, %v3587
        %v3589 = vpop.f32.mrb[0].mxu0
        %3590 = vmatprep.mubr.f32.mxu0 0.0
        %3591 = vmatmul.mubr.f32.gmra.mrb[0].mxu0 %v3519
        %v3592 = vpop.f32.mrb[0].mxu0
        %v3593 = vpop.f32.mrb[0].mxu0
        %3594 = vdwg.mxu0
        %v3595 = vadd.f32 %v3374, %v3588
        %v3596 = vld [vmem:[%s11] sm:$0xff]
        %v3597 = vld [vmem:[%s11 + $0x8] sm:$0xff]
        %v3598 = vld [vmem:[%s11 + $0x10] sm:$0xff]
        %v3599 = vld [vmem:[%s11 + $0x18] sm:$0xff]
        %v3600 = vld [vmem:[%s12] sm:$0x1]
        %v3602 = vsel %vm601, %v3595, 0
        %3604 = vmatprep.subr.mxu0 0.0
        %3605 = vmatpush1.msra.mxu0 %v3596
        %3606 = vmatprep.subr.mxu0 0.0
        %3607 = vmatpush1.msra.mxu0 %v3597
        %3608 = vmatprep.subr.mxu0 0.0
        %3609 = vmatpush1.msra.mxu0 %v3598
        %3610 = vmatprep.subr.mxu0 0.0
        %3611 = vmatpush1.msra.mxu0 %v3599
        %3612 = vmatprep.subr.mxu0 0.0
        %3613 = vmatpush1.msra.mxu0 0.0
        %3614 = vmatprep.subr.mxu0 0.0
        %3615 = vmatpush1.msra.mxu0 0.0
        %3616 = vmatprep.subr.mxu0 0.0
        %3617 = vmatpush1.msra.mxu0 0.0
        %3618 = vmatprep.subr.mxu0 0.0
        %3619 = vmatpush1.msra.mxu0 0.0
        %3620 = vmatprep.subr.mxu0 0.0
        %3621 = vmatpush1.msra.mxu0 0.0
        %3622 = vmatprep.subr.mxu0 0.0
        %3623 = vmatpush1.msra.mxu0 0.0
        %3624 = vmatprep.subr.mxu0 0.0
        %3625 = vmatpush1.msra.mxu0 0.0
        %3626 = vmatprep.subr.mxu0 0.0
        %3627 = vmatpush1.msra.mxu0 0.0
        %3628 = vmatprep.subr.mxu0 0.0
        %3629 = vmatpush1.msra.mxu0 0.0
        %3630 = vmatprep.subr.mxu0 0.0
        %3631 = vmatpush1.msra.mxu0 0.0
        %3632 = vmatprep.subr.mxu0 0.0
        %3633 = vmatpush1.msra.mxu0 0.0
        %3634 = vmatprep.subr.mxu0 0.0
        %3635 = vmatpush1.msra.mxu0 0.0
        %3636 = vmatprep.subr.mxu0 0.0
        %3637 = vmatpush1.msra.mxu0 0.0
        %3638 = vmatprep.subr.mxu0 0.0
        %3639 = vmatpush1.msra.mxu0 0.0
        %3640 = vmatprep.subr.mxu0 0.0
        %3641 = vmatpush1.msra.mxu0 0.0
        %3642 = vmatprep.subr.mxu0 0.0
        %3643 = vmatpush1.msra.mxu0 0.0
        %3644 = vmatprep.subr.mxu0 0.0
        %3645 = vmatpush1.msra.mxu0 0.0
        %3646 = vmatprep.subr.mxu0 0.0
        %3647 = vmatpush1.msra.mxu0 0.0
        %3648 = vmatprep.subr.mxu0 0.0
        %3649 = vmatpush1.msra.mxu0 0.0
        %3650 = vmatprep.subr.mxu0 0.0
        %3651 = vmatpush1.msra.mxu0 0.0
        %3652 = vmatprep.subr.mxu0 0.0
        %3653 = vmatpush1.msra.mxu0 0.0
        %3654 = vmatprep.subr.mxu0 0.0
        %3655 = vmatpush1.msra.mxu0 0.0
        %3656 = vmatprep.subr.mxu0 0.0
        %3657 = vmatpush1.msra.mxu0 0.0
        %3658 = vmatprep.subr.mxu0 0.0
        %3659 = vmatpush1.msra.mxu0 0.0
        %3660 = vmatprep.subr.mxu0 0.0
        %3661 = vmatpush1.msra.mxu0 0.0
        %3662 = vmatprep.subr.mxu0 0.0
        %3663 = vmatpush1.msra.mxu0 0.0
        %3664 = vmatprep.subr.mxu0 0.0
        %3665 = vmatpush1.msra.mxu0 0.0
        %3666 = vmatprep.subr.mxu0 0.0
        %3667 = vmatpush1.msra.mxu0 0.0
        %3668 = vmatprep.mubr.f32.mxu0 0.0
        %3669 = vmatmul.mubr.f32.gmra.mrb[0].mxu0 %v3602
        %v3670 = vpop.f32.mrb[0].mxu0
        %v3671 = vadd.f32 %v3600, %v3670
        %v3672 = vpop.f32.mrb[0].mxu0
        %3673 = vdwg.mxu0
        %v3674 = vmax.f32 %v3671, 0.0
        %v3675 = vld [vmem:[%s13] sm:$0xff]
        %v3676 = vld [vmem:[%s13 + $0x8] sm:$0xff]
        %v3677 = vld [vmem:[%s13 + $0x10] sm:$0xff]
        %v3678 = vld [vmem:[%s13 + $0x18] sm:$0xff]
        %v3679 = vld [vmem:[%s14] sm:$0x1]
        %v3681 = vsel %vm601, %v3674, 0
        %3683 = vmatprep.subr.mxu0 0.0
        %3684 = vmatpush1.msra.mxu0 %v3675
        %3685 = vmatprep.subr.mxu0 0.0
        %3686 = vmatpush1.msra.mxu0 %v3676
        %3687 = vmatprep.subr.mxu0 0.0
        %3688 = vmatpush1.msra.mxu0 %v3677
        %3689 = vmatprep.subr.mxu0 0.0
        %3690 = vmatpush1.msra.mxu0 %v3678
        %3691 = vmatprep.subr.mxu0 0.0
        %3692 = vmatpush1.msra.mxu0 0.0
        %3693 = vmatprep.subr.mxu0 0.0
        %3694 = vmatpush1.msra.mxu0 0.0
        %3695 = vmatprep.subr.mxu0 0.0
        %3696 = vmatpush1.msra.mxu0 0.0
        %3697 = vmatprep.subr.mxu0 0.0
        %3698 = vmatpush1.msra.mxu0 0.0
        %3699 = vmatprep.subr.mxu0 0.0
        %3700 = vmatpush1.msra.mxu0 0.0
        %3701 = vmatprep.subr.mxu0 0.0
        %3702 = vmatpush1.msra.mxu0 0.0
        %3703 = vmatprep.subr.mxu0 0.0
        %3704 = vmatpush1.msra.mxu0 0.0
        %3705 = vmatprep.subr.mxu0 0.0
        %3706 = vmatpush1.msra.mxu0 0.0
        %3707 = vmatprep.subr.mxu0 0.0
        %3708 = vmatpush1.msra.mxu0 0.0
        %3709 = vmatprep.subr.mxu0 0.0
        %3710 = vmatpush1.msra.mxu0 0.0
        %3711 = vmatprep.subr.mxu0 0.0
        %3712 = vmatpush1.msra.mxu0 0.0
        %3713 = vmatprep.subr.mxu0 0.0
        %3714 = vmatpush1.msra.mxu0 0.0
        %3715 = vmatprep.subr.mxu0 0.0
        %3716 = vmatpush1.msra.mxu0 0.0
        %3717 = vmatprep.subr.mxu0 0.0
        %3718 = vmatpush1.msra.mxu0 0.0
        %3719 = vmatprep.subr.mxu0 0.0
        %3720 = vmatpush1.msra.mxu0 0.0
        %3721 = vmatprep.subr.mxu0 0.0
        %3722 = vmatpush1.msra.mxu0 0.0
        %3723 = vmatprep.subr.mxu0 0.0
        %3724 = vmatpush1.msra.mxu0 0.0
        %3725 = vmatprep.subr.mxu0 0.0
        %3726 = vmatpush1.msra.mxu0 0.0
        %3727 = vmatprep.subr.mxu0 0.0
        %3728 = vmatpush1.msra.mxu0 0.0
        %3729 = vmatprep.subr.mxu0 0.0
        %3730 = vmatpush1.msra.mxu0 0.0
        %3731 = vmatprep.subr.mxu0 0.0
        %3732 = vmatpush1.msra.mxu0 0.0
        %3733 = vmatprep.subr.mxu0 0.0
        %3734 = vmatpush1.msra.mxu0 0.0
        %3735 = vmatprep.subr.mxu0 0.0
        %3736 = vmatpush1.msra.mxu0 0.0
        %3737 = vmatprep.subr.mxu0 0.0
        %3738 = vmatpush1.msra.mxu0 0.0
        %3739 = vmatprep.subr.mxu0 0.0
        %3740 = vmatpush1.msra.mxu0 0.0
        %3741 = vmatprep.subr.mxu0 0.0
        %3742 = vmatpush1.msra.mxu0 0.0
        %3743 = vmatprep.subr.mxu0 0.0
        %3744 = vmatpush1.msra.mxu0 0.0
        %3745 = vmatprep.subr.mxu0 0.0
        %3746 = vmatpush1.msra.mxu0 0.0
        %3747 = vmatprep.mubr.f32.mxu0 0.0
        %3748 = vmatmul.mubr.f32.gmra.mrb[0].mxu0 %v3681
        %v3749 = vpop.f32.mrb[0].mxu0
        %v3750 = vadd.f32 %v3679, %v3749
        %v3751 = vpop.f32.mrb[0].mxu0
        %3752 = vdwg.mxu0
        %vm3753 = vcmask 24576
        %3754 = vst.msk [vmem:[%s486] sm:$0x1] %vm3753, %v3750
        %s3755 = sand.u32 %s357, 1
        %s3756 = scalar_lea.sflag [#allocation3], %s3755
        %s3757 = sand.u32 %s357, 1
        %s3758 = scalar_lea.vmem [#allocation2], %s3757
        // Predicated region
        $region81: #{cls_transformer_forward.1} parent=79 // pred_check
          %p3759 = pneg %p367
        $region82: #{cls_transformer_forward.1} parent=79 // pred_check_branch
          %3761 = sbr.rel (%p3759) target = $region84
        $region83: #{cls_transformer_forward.1} parent=79 // pred_region
          %s3763 = ssub.s32 16, 16
          %3764 = vsyncadd %s3756, %s3763
          %s3765 = smul.addr %s29, 16
          %s3766 = scalar_lea.hbm %s15, %s3765
          %s3768 = sshll.u32 %s3758, 4
          %s3769 = int_to_ptr.vmem [resolvable:$true] %s3768
          %3771 = dma.vmem_to_hbm [thread:$0]  %s3769, 16, %s3766, %s3756
        $region84: #{cls_transformer_forward.1} parent=79 // pred_fallthru
          _
      $region80: #{cls_transformer_forward.1} parent=5 // pred_fallthru
        _
      %p3772 = scmp.le.s32.totalorder 2, %s24
      // Predicated region
      $region85: #{cls_transformer_forward.1} parent=5 // pred_check
        %p3773 = pneg %p3772
      $region86: #{cls_transformer_forward.1} parent=5 // pred_check_branch
        %3775 = sbr.rel (%p3773) target = $region88
      $region87: #{cls_transformer_forward.1} parent=5 // pred_region
        %s3776 = ssub.s32 %s24, 2
        // Predicated region
        $region89: #{cls_transformer_forward.1} parent=87 // pred_check
          %p3777 = pneg %p373
        $region90: #{cls_transformer_forward.1} parent=87 // pred_check_branch
          %3779 = sbr.rel (%p3777) target = $region92
        $region91: #{cls_transformer_forward.1} parent=87 // pred_region
          %s3780 = sand.u32 %s358, 1
          %s3781 = scalar_lea.sflag [#allocation3], %s3780
          %s3782 = sand.u32 %s358, 1
          %s3783 = scalar_lea.vmem [#allocation2], %s3782
          %3784 = dma.done %s3781, 16
        $region92: #{cls_transformer_forward.1} parent=87 // pred_fallthru
          _
      $region88: #{cls_transformer_forward.1} parent=5 // pred_fallthru
        _
    $region6: #{cls_transformer_forward.1} parent=1 // loop_footer
      %s28 = sadd.s32 1, %s24
    $region7: #{cls_transformer_forward.1} parent=1 // loop_footer_branch
      %23 = sbr.rel target = $region3
    $region8: #{cls_transformer_forward.1} parent=1 // loop_exit
      _
    %3785 = vsyncpa [#allocation3], 1
    %s3786 = scalar_lea.sflag [#allocation3], 1
    %3787 = vsyncpa %s3786, 1

</llo_original>
